<compile_context>
chip_gen: v7x
topology: tpu7x:2x2x1
jax: 0.10.0
libtpu: 0.0.40
codegen_flags: <defaults>
</compile_context>

<pallas_src>
import jax
import jax.numpy as jnp
from jax.experimental import pallas as pl
from jax.experimental.pallas import tpu as pltpu


def _round_up(x, m):
    return (x + m - 1) // m * m


def fusion_block_kernel(feats_ref, w_ref, shift_ref, meta_ref, out_ref):
    # feats_ref : (TB, C*HW) native dtype  -- contiguous NCHW flatten (no transpose pass)
    # w_ref     : (C*HW, R)                -- Linear weight with BN scale, 1/HW pool divisor
    #                                          and HW replication folded in (resident)
    # shift_ref : (1, R)  f32              -- Linear bias * bn_scale + bn_shift
    # meta_ref  : (TB, M) f32              -- raw metadata (concat path)
    # out_ref   : (TB, R + M) f32
    y = jnp.dot(feats_ref[...], w_ref[...], preferred_element_type=jnp.float32)  # pool+Linear on MXU
    y = jnp.maximum(y + shift_ref[...], 0.0)        # bias + BN(eval) + ReLU in one pass
    r = y.shape[-1]
    out_ref[:, :r] = y                               # lane-aligned store (R multiple of 128)
    out_ref[:, r:] = meta_ref[...]                   # fused concat (small masked store)
    # TODO(synk): Dropout(p=0.5) is identity in eval mode; training-mode dropout not implemented.


def _pick_batch_tile(b_pad, feat_row_bytes, w_bytes, out_row_bytes, meta_row_bytes,
                     cap_rows=256, vmem_budget=40 << 20):
    """Largest batch tile (multiple of 8, divides b_pad, <= cap_rows) whose double-buffered
    working set stays under vmem_budget.  cap_rows=256 fits every generation (v7x's 64 MiB
    per-TC VMEM is the binding case); raise vmem_budget/cap on v6e if desired."""
    best = 8
    for t in range(8, min(cap_rows, b_pad) + 1, 8):
        if b_pad % t:
            continue
        need = 2 * t * (feat_row_bytes + out_row_bytes + meta_row_bytes) + 2 * w_bytes
        if need <= vmem_budget:
            best = t
    return best


def fusion_block_forward(feats, metadata, params, *, block_b_cap=256):
    """feats: (B, C, H, W) NCHW (any float dtype); metadata: (B, M). Returns (B, R + M) f32."""
    B, C, H, W = feats.shape
    K = C * H * W
    w_rep = params["w_rep"]            # (C*HW, R) f32, pool/bias/BN folded + HW-replicated
    shift = params["shift_folded"]     # (1, R) f32
    R = w_rep.shape[1]
    M = metadata.shape[1]

    # Contiguous NCHW flatten: free (same HBM layout), lane-dense last dim.
    feats_flat = feats.reshape(B, K)
    if feats_flat.dtype != jnp.float32:
        # Keep 16-bit feats 16-bit on the wire; products run in that dtype, accumulation in f32.
        # (Slight deviation from Passer().float(); validate tolerances when using bf16.)
        w_rep = w_rep.astype(feats_flat.dtype)
    metadata = metadata.astype(jnp.float32)

    # Pad batch only up to the next multiple of 8 (<= 7 rows), not to a multiple of the tile.
    B_pad = _round_up(B, 8)
    if B_pad != B:
        feats_flat = jnp.pad(feats_flat, ((0, B_pad - B), (0, 0)))
        metadata = jnp.pad(metadata, ((0, B_pad - B), (0, 0)))

    feat_row_bytes = K * feats_flat.dtype.itemsize
    w_bytes = K * R * w_rep.dtype.itemsize
    out_row_bytes = (R + M) * 4
    meta_row_bytes = M * 4
    TB = _pick_batch_tile(B_pad, feat_row_bytes, w_bytes, out_row_bytes, meta_row_bytes,
                          cap_rows=block_b_cap)
    n_steps = B_pad // TB

    vmem_need = 2 * TB * (feat_row_bytes + out_row_bytes + meta_row_bytes) + 2 * w_bytes + R * 4
    vmem_limit = int(min(max(vmem_need + (6 << 20), 16 << 20), 48 << 20))

    # v7x has 2 TensorCores per chip: split the batch grid axis across them explicitly when
    # both cores have work; elsewhere (or with a single step) plain "parallel" is used.
    try:
        kind = jax.devices()[0].device_kind.lower()
    except Exception:  # pragma: no cover
        kind = ""
    if n_steps >= 2 and "v7" in kind:
        dim_sem = (getattr(pltpu, "CORE_PARALLEL", "parallel"),)
    else:
        dim_sem = ("parallel",)

    cost = pl.CostEstimate(
        flops=2 * B_pad * K * R,
        transcendentals=0,
        bytes_accessed=B_pad * (feat_row_bytes + out_row_bytes + meta_row_bytes) + w_bytes,
    )

    out = pl.pallas_call(
        fusion_block_kernel,
        out_shape=jax.ShapeDtypeStruct((B_pad, R + M), jnp.float32),
        grid_spec=pltpu.PrefetchScalarGridSpec(
            num_scalar_prefetch=0,
            grid=(n_steps,),
            in_specs=[
                pl.BlockSpec((TB, K), lambda i: (i, 0)),   # dominant bytes: pipelined over batch
                pl.BlockSpec((K, R), lambda i: (0, 0)),    # folded weight, resident across steps
                pl.BlockSpec((1, R), lambda i: (0, 0)),    # folded shift, resident
                pl.BlockSpec((TB, M), lambda i: (i, 0)),   # metadata tile
            ],
            out_specs=pl.BlockSpec((TB, R + M), lambda i: (i, 0)),
        ),
        compiler_params=pltpu.CompilerParams(
            dimension_semantics=dim_sem,
            vmem_limit_bytes=vmem_limit,
        ),
        cost_estimate=cost,
    )(feats_flat, w_rep, shift, metadata)

    return out[:B]


def init_params(key, n_feats, n_reducer, hw, *, eps=1e-5):
    """ReducerBlock (Linear -> BatchNorm1d(eval) -> ReLU) params with the avg-pool divisor,
    Linear bias and BN scale/shift folded offline into one replicated weight + shift."""
    ks = jax.random.split(key, 6)
    # nn.Linear(n_feats, n_reducer): torch stores weight as (R, C).  We build (C, R) directly;
    # NOTE: when importing a real PyTorch checkpoint, transpose torch's weight first.
    w = jax.random.normal(ks[0], (n_feats, n_reducer), jnp.float32) * 0.02
    b = jax.random.normal(ks[1], (1, n_reducer), jnp.float32) * 0.01
    # Non-trivial eval-mode BatchNorm1d stats so the folding is actually exercised.
    gamma = 1.0 + 0.1 * jax.random.normal(ks[2], (1, n_reducer), jnp.float32)
    beta = 0.1 * jax.random.normal(ks[3], (1, n_reducer), jnp.float32)
    running_mean = 0.1 * jax.random.normal(ks[4], (1, n_reducer), jnp.float32)
    running_var = jax.random.uniform(ks[5], (1, n_reducer), jnp.float32, 0.5, 1.5)

    bn_scale = gamma / jnp.sqrt(running_var + eps)
    bn_shift = beta - running_mean * bn_scale
    # relu(BN((mean_hw x) @ W + b)) == relu(x_flat @ W'' + shift') with
    #   W''[c*HW + hw, r] = W[c, r] * bn_scale[r] / HW   (row order matches NCHW flatten)
    #   shift'            = b * bn_scale + bn_shift
    w_folded = (w * bn_scale) / float(hw)           # (C, R)
    w_rep = jnp.repeat(w_folded, hw, axis=0)        # (C*HW, R)
    shift_folded = b * bn_scale + bn_shift
    raw = dict(w=w, b=b, gamma=gamma, beta=beta,
               running_mean=running_mean, running_var=running_var, eps=eps)
    return {"w_rep": w_rep, "shift_folded": shift_folded, "raw": raw}


if __name__ == "__main__":
    B = 2
    n_feats = 256        # channel dim of the CNN feature maps
    n_metadata = 16
    n_reducer = 128
    H = W = 7            # AvgPool2d(kernel_size=7) collapses the 7x7 map

    key = jax.random.PRNGKey(0)
    k_feats, k_meta, k_params = jax.random.split(key, 3)

    feats = jax.random.normal(k_feats, (B, n_feats, H, W), jnp.float32)
    metadata = jax.random.normal(k_meta, (B, n_metadata), jnp.float32)
    params = init_params(k_params, n_feats, n_reducer, H * W)

    out = fusion_block_forward(feats, metadata, params)
    jax.block_until_ready(out)
    assert out.shape == (B, n_reducer + n_metadata), out.shape

    # Reference check: mirror the PyTorch eval-mode graph with the *unfolded* parameters,
    # so the offline folding itself is validated.
    raw = params["raw"]
    pooled = jnp.mean(feats.astype(jnp.float32), axis=(2, 3))                   # AvgPool2d(7) + view
    lin = pooled @ raw["w"] + raw["b"]                                          # Linear
    bn = (lin - raw["running_mean"]) / jnp.sqrt(raw["running_var"] + raw["eps"]) \
        * raw["gamma"] + raw["beta"]                                            # BatchNorm1d (eval)
    ref = jnp.concatenate([jnp.maximum(bn, 0.0), metadata.astype(jnp.float32)], axis=1)
    max_err = float(jnp.max(jnp.abs(out - ref)))
    # Tolerance covers MXU f32 matmul pass behavior over the long (C*HW) contraction.
    assert jnp.allclose(out, ref, atol=2e-3, rtol=2e-3), f"max abs err {max_err}"

    print("KERNEL_OK")
</pallas_src>

<mosaic_0001>
module attributes {stable_mosaic.version = 11 : i64} {
  func.func @fusion_block_kernel(%arg0: i32, %arg1: memref<8x12544xf32, #tpu.memory_space<vmem>>, %arg2: memref<12544x128xf32, #tpu.memory_space<vmem>>, %arg3: memref<1x128xf32, #tpu.memory_space<vmem>>, %arg4: memref<8x16xf32, #tpu.memory_space<vmem>>, %arg5: memref<8x144xf32, #tpu.memory_space<vmem>>) attributes {dimension_semantics = [#tpu.dimension_semantics<parallel>], iteration_bounds = array<i64: 1>, scalar_prefetch = 0 : i64, scratch_operands = 0 : i64, tpu.core_type = #tpu.core_type<tc>, window_params = [{transform_indices = @transform_0, window_bounds = array<i64: 8, 12544>}, {pipeline_mode = #tpu.pipeline_mode<synchronous>, transform_indices = @transform_1, window_bounds = array<i64: 12544, 128>}, {pipeline_mode = #tpu.pipeline_mode<synchronous>, transform_indices = @transform_2, window_bounds = array<i64: 1, 128>}, {transform_indices = @transform_3, window_bounds = array<i64: 8, 16>}, {transform_indices = @transform_4, window_bounds = array<i64: 8, 144>}]} {
    %c0 = arith.constant 0 : index
    %c0_0 = arith.constant 0 : index
    %0 = vector.load %arg1[%c0, %c0_0] : memref<8x12544xf32, #tpu.memory_space<vmem>>, vector<8x12544xf32>
    %c0_1 = arith.constant 0 : index
    %c0_2 = arith.constant 0 : index
    %1 = vector.load %arg2[%c0_1, %c0_2] : memref<12544x128xf32, #tpu.memory_space<vmem>>, vector<12544x128xf32>
    %cst = arith.constant dense<0.000000e+00> : vector<8x128xf32>
    %2 = tpu.matmul %0, %1, %cst {dimension_numbers = #tpu.dot_dimension_numbers<[1], [0], [0], [1], [0, 0, 1, 1], [], []>} : vector<8x12544xf32>, vector<12544x128xf32>, vector<8x128xf32> -> vector<8x128xf32>
    %c0_3 = arith.constant 0 : index
    %c0_4 = arith.constant 0 : index
    %3 = vector.load %arg3[%c0_3, %c0_4] : memref<1x128xf32, #tpu.memory_space<vmem>>, vector<1x128xf32>
    %4 = vector.broadcast %3 : vector<1x128xf32> to vector<8x128xf32>
    %5 = arith.addf %2, %4 : vector<8x128xf32>
    %cst_5 = arith.constant 0.000000e+00 : f32
    %6 = vector.broadcast %cst_5 : f32 to vector<8x128xf32>
    %7 = arith.maximumf %5, %6 : vector<8x128xf32>
    %c0_6 = arith.constant 0 : index
    %c0_7 = arith.constant 0 : index
    %8 = vector.load %arg5[%c0_6, %c0_7] : memref<8x144xf32, #tpu.memory_space<vmem>>, vector<8x128xf32>
    tpu.vector_store %arg5[%c0_6, %c0_7], %7 {strides = array<i32>} : memref<8x144xf32, #tpu.memory_space<vmem>>, vector<8x128xf32>,
    %c0_8 = arith.constant 0 : index
    %c0_9 = arith.constant 0 : index
    %9 = vector.load %arg4[%c0_8, %c0_9] : memref<8x16xf32, #tpu.memory_space<vmem>>, vector<8x16xf32>
    %c0_10 = arith.constant 0 : index
    %c128 = arith.constant 128 : index
    %10 = vector.load %arg5[%c0_10, %c128] : memref<8x144xf32, #tpu.memory_space<vmem>>, vector<8x16xf32>
    tpu.vector_store %arg5[%c0_10, %c128], %9 {strides = array<i32>} : memref<8x144xf32, #tpu.memory_space<vmem>>, vector<8x16xf32>,
    return
  }
  func.func @transform_0(%arg0: i32) -> (i32, i32) {
    %c0_i32 = arith.constant 0 : i32
    %c0_i32_0 = arith.constant 0 : i32
    return %arg0, %c0_i32 : i32, i32
  }
  func.func @transform_1(%arg0: i32) -> (i32, i32) {
    %c0_i32 = arith.constant 0 : i32
    %c0_i32_0 = arith.constant 0 : i32
    %c0_i32_1 = arith.constant 0 : i32
    return %c0_i32, %c0_i32_0 : i32, i32
  }
  func.func @transform_2(%arg0: i32) -> (i32, i32) {
    %c0_i32 = arith.constant 0 : i32
    %c0_i32_0 = arith.constant 0 : i32
    %c0_i32_1 = arith.constant 0 : i32
    return %c0_i32, %c0_i32_0 : i32, i32
  }
  func.func @transform_3(%arg0: i32) -> (i32, i32) {
    %c0_i32 = arith.constant 0 : i32
    %c0_i32_0 = arith.constant 0 : i32
    return %arg0, %c0_i32 : i32, i32
  }
  func.func @transform_4(%arg0: i32) -> (i32, i32) {
    %c0_i32 = arith.constant 0 : i32
    %c0_i32_0 = arith.constant 0 : i32
    return %arg0, %c0_i32 : i32, i32
  }
}

</mosaic_0001>

<llo_original>
// kernel: tpu_custom_call.1
$region0: #{tpu_custom_call.1}
  #allocation0 [shape = 'u32[]', space=smem, size = 0x4, offset = 0x4, fixed_abs, tag = 'smem constant byte address 0x4 - core index']
  #allocation1 [shape = 'u32[144,128]{1,0:T(1,128)}', space=vmem, size = 0x12000, scoped, tag = 'internal scratch']
  %s0 = inlined_call_operand.hbm [shape: f32[8,12544], index: 0, kind: input, shape index: {}]
  %s1 = inlined_call_operand.hbm [shape: f32[12544,128], index: 1, kind: input, shape index: {}]
  %s2 = inlined_call_operand.hbm [shape: f32[1,128], index: 2, kind: input, shape index: {}]
  %s3 = inlined_call_operand.hbm [shape: f32[8,16], index: 3, kind: input, shape index: {}]
  %s4 = inlined_call_operand.hbm [shape: f32[8,144], index: 4, kind: output, shape index: {}]
  %s5 = sld [smem:[#allocation0]]
  $region42: #{tpu_custom_call.1} parent=0
    _
  %s7 = ssub.s32 1, %s5
  %s8 = scalar_select 0, %s7, %s5
  $region1: #{tpu_custom_call.1} parent=0
    #allocation2 [shape = 'u8[401408]{0}', space=vmem, size = 0x62000, scoped, tag = 'input window, operand 0, single buffered']
    #allocation3 [shape = 's32[1]{0}', space=sflag, size = 0x4, scoped, tag = 'scoped memory for tpu_custom_call.1']
    #allocation4 [shape = 's32[1]{0}', space=sflag, size = 0x4, scoped, tag = 'scoped memory for tpu_custom_call.1']
    #allocation5 [shape = 'u8[6422528]{0}', space=vmem, size = 0x620000, scoped, tag = 'input window, operand 1, single buffered']
    #allocation6 [shape = 's32[1]{0}', space=sflag, size = 0x4, scoped, tag = 'scoped memory for tpu_custom_call.1']
    #allocation7 [shape = 'u8[512]{0}', space=vmem, size = 0x400, scoped, tag = 'input window, operand 2, single buffered']
    #allocation8 [shape = 'u8[4096]{0}', space=vmem, size = 0x1000, scoped, tag = 'input window, operand 3, single buffered']
    #allocation9 [shape = 's32[1]{0}', space=sflag, size = 0x4, scoped, tag = 'scoped memory for tpu_custom_call.1']
    #allocation10 [shape = 'u8[8192]{0}', space=vmem, size = 0x2000, scoped, tag = 'output window, operand 0, single buffered']
    %9 = vsyncpa [#allocation3], 0
    %10 = vsyncpa [#allocation6], 0
    %11 = vsyncpa [#allocation9], 0
    %12 = vsyncpa [#allocation4], 0
    // Predicated region
    $region2: #{tpu_custom_call.1} parent=1 // pred_check
      _
    $region3: #{tpu_custom_call.1} parent=1 // pred_check_branch
      %14 = sbr.rel (0) target = $region5
    $region4: #{tpu_custom_call.1} parent=1 // pred_region
      %s16 = ssub.s32 12544, 12544
      %17 = vsyncadd [#allocation3], %s16
      %s19 = sshll.u32 [#allocation2], 4
      %s20 = int_to_ptr.vmem [resolvable:$true] %s19
      %22 = dma.hbm_to_vmem [thread:$0]  %s0, 12544, %s20, [#allocation3]
    $region5: #{tpu_custom_call.1} parent=1 // pred_fallthru
      _
    // Predicated region
    $region6: #{tpu_custom_call.1} parent=1 // pred_check
      _
    $region7: #{tpu_custom_call.1} parent=1 // pred_check_branch
      %24 = sbr.rel (0) target = $region9
    $region8: #{tpu_custom_call.1} parent=1 // pred_region
      %s26 = ssub.s32 200704, 200704
      %27 = vsyncadd [#allocation6], %s26
      %s28 = sshll.u32 [#allocation5], 4
      %s29 = int_to_ptr.vmem [resolvable:$true] %s28
      %34 = dma.hbm_to_vmem [thread:$0]  %s1, 200704, %s29, [#allocation6], 128, 128, 8
    $region9: #{tpu_custom_call.1} parent=1 // pred_fallthru
      _
    // Predicated region
    $region10: #{tpu_custom_call.1} parent=1 // pred_check
      _
    $region11: #{tpu_custom_call.1} parent=1 // pred_check_branch
      %36 = sbr.rel (0) target = $region13
    $region12: #{tpu_custom_call.1} parent=1 // pred_region
      %s38 = ssub.s32 16, 16
      %39 = vsyncadd [#allocation6], %s38
      %s41 = sshll.u32 [#allocation7], 4
      %s42 = int_to_ptr.vmem [resolvable:$true] %s41
      %44 = dma.hbm_to_vmem [thread:$0]  %s2, 16, %s42, [#allocation6]
    $region13: #{tpu_custom_call.1} parent=1 // pred_fallthru
      _
    // Predicated region
    $region14: #{tpu_custom_call.1} parent=1 // pred_check
      _
    $region15: #{tpu_custom_call.1} parent=1 // pred_check_branch
      %46 = sbr.rel (0) target = $region17
    $region16: #{tpu_custom_call.1} parent=1 // pred_region
      %s48 = ssub.s32 128, 128
      %49 = vsyncadd [#allocation9], %s48
      %s51 = sshll.u32 [#allocation8], 4
      %s52 = int_to_ptr.vmem [resolvable:$true] %s51
      %54 = dma.hbm_to_vmem [thread:$0]  %s3, 128, %s52, [#allocation9]
    $region17: #{tpu_custom_call.1} parent=1 // pred_fallthru
      _
    // Predicated region
    $region18: #{tpu_custom_call.1} parent=1 // pred_check
      _
    $region19: #{tpu_custom_call.1} parent=1 // pred_check_branch
      %56 = sbr.rel (0) target = $region21
    $region20: #{tpu_custom_call.1} parent=1 // pred_region
      %57 = dma.done [#allocation3], 12544
    $region21: #{tpu_custom_call.1} parent=1 // pred_fallthru
      _
    // Predicated region
    $region22: #{tpu_custom_call.1} parent=1 // pred_check
      _
    $region23: #{tpu_custom_call.1} parent=1 // pred_check_branch
      %59 = sbr.rel (0) target = $region25
    $region24: #{tpu_custom_call.1} parent=1 // pred_region
      %60 = dma.done [#allocation6], 200704
    $region25: #{tpu_custom_call.1} parent=1 // pred_fallthru
      _
    // Predicated region
    $region26: #{tpu_custom_call.1} parent=1 // pred_check
      _
    $region27: #{tpu_custom_call.1} parent=1 // pred_check_branch
      %62 = sbr.rel (0) target = $region29
    $region28: #{tpu_custom_call.1} parent=1 // pred_region
      %63 = dma.done [#allocation6], 16
    $region29: #{tpu_custom_call.1} parent=1 // pred_fallthru
      _
    // Predicated region
    $region30: #{tpu_custom_call.1} parent=1 // pred_check
      _
    $region31: #{tpu_custom_call.1} parent=1 // pred_check_branch
      %65 = sbr.rel (0) target = $region33
    $region32: #{tpu_custom_call.1} parent=1 // pred_region
      %66 = dma.done [#allocation9], 128
    $region33: #{tpu_custom_call.1} parent=1 // pred_fallthru
      _
    %v67 = vld [vmem:[#allocation2] sm:$0xff]
    %v68 = vld [vmem:[#allocation2 + $0x8] sm:$0xff]
    %v69 = vld [vmem:[#allocation2 + $0x10] sm:$0xff]
    %v70 = vld [vmem:[#allocation2 + $0x18] sm:$0xff]
    %v71 = vld [vmem:[#allocation2 + $0x20] sm:$0xff]
    %v72 = vld [vmem:[#allocation2 + $0x28] sm:$0xff]
    %v73 = vld [vmem:[#allocation2 + $0x30] sm:$0xff]
    %v74 = vld [vmem:[#allocation2 + $0x38] sm:$0xff]
    %v75 = vld [vmem:[#allocation2 + $0x40] sm:$0xff]
    %v76 = vld [vmem:[#allocation2 + $0x48] sm:$0xff]
    %v77 = vld [vmem:[#allocation2 + $0x50] sm:$0xff]
    %v78 = vld [vmem:[#allocation2 + $0x58] sm:$0xff]
    %v79 = vld [vmem:[#allocation2 + $0x60] sm:$0xff]
    %v80 = vld [vmem:[#allocation2 + $0x68] sm:$0xff]
    %v81 = vld [vmem:[#allocation2 + $0x70] sm:$0xff]
    %v82 = vld [vmem:[#allocation2 + $0x78] sm:$0xff]
    %v83 = vld [vmem:[#allocation2 + $0x80] sm:$0xff]
    %v84 = vld [vmem:[#allocation2 + $0x88] sm:$0xff]
    %v85 = vld [vmem:[#allocation2 + $0x90] sm:$0xff]
    %v86 = vld [vmem:[#allocation2 + $0x98] sm:$0xff]
    %v87 = vld [vmem:[#allocation2 + $0xa0] sm:$0xff]
    %v88 = vld [vmem:[#allocation2 + $0xa8] sm:$0xff]
    %v89 = vld [vmem:[#allocation2 + $0xb0] sm:$0xff]
    %v90 = vld [vmem:[#allocation2 + $0xb8] sm:$0xff]
    %v91 = vld [vmem:[#allocation2 + $0xc0] sm:$0xff]
    %v92 = vld [vmem:[#allocation2 + $0xc8] sm:$0xff]
    %v93 = vld [vmem:[#allocation2 + $0xd0] sm:$0xff]
    %v94 = vld [vmem:[#allocation2 + $0xd8] sm:$0xff]
    %v95 = vld [vmem:[#allocation2 + $0xe0] sm:$0xff]
    %v96 = vld [vmem:[#allocation2 + $0xe8] sm:$0xff]
    %v97 = vld [vmem:[#allocation2 + $0xf0] sm:$0xff]
    %v98 = vld [vmem:[#allocation2 + $0xf8] sm:$0xff]
    %v99 = vld [vmem:[#allocation2 + $0x100] sm:$0xff]
    %v100 = vld [vmem:[#allocation2 + $0x108] sm:$0xff]
    %v101 = vld [vmem:[#allocation2 + $0x110] sm:$0xff]
    %v102 = vld [vmem:[#allocation2 + $0x118] sm:$0xff]
    %v103 = vld [vmem:[#allocation2 + $0x120] sm:$0xff]
    %v104 = vld [vmem:[#allocation2 + $0x128] sm:$0xff]
    %v105 = vld [vmem:[#allocation2 + $0x130] sm:$0xff]
    %v106 = vld [vmem:[#allocation2 + $0x138] sm:$0xff]
    %v107 = vld [vmem:[#allocation2 + $0x140] sm:$0xff]
    %v108 = vld [vmem:[#allocation2 + $0x148] sm:$0xff]
    %v109 = vld [vmem:[#allocation2 + $0x150] sm:$0xff]
    %v110 = vld [vmem:[#allocation2 + $0x158] sm:$0xff]
    %v111 = vld [vmem:[#allocation2 + $0x160] sm:$0xff]
    %v112 = vld [vmem:[#allocation2 + $0x168] sm:$0xff]
    %v113 = vld [vmem:[#allocation2 + $0x170] sm:$0xff]
    %v114 = vld [vmem:[#allocation2 + $0x178] sm:$0xff]
    %v115 = vld [vmem:[#allocation2 + $0x180] sm:$0xff]
    %v116 = vld [vmem:[#allocation2 + $0x188] sm:$0xff]
    %v117 = vld [vmem:[#allocation2 + $0x190] sm:$0xff]
    %v118 = vld [vmem:[#allocation2 + $0x198] sm:$0xff]
    %v119 = vld [vmem:[#allocation2 + $0x1a0] sm:$0xff]
    %v120 = vld [vmem:[#allocation2 + $0x1a8] sm:$0xff]
    %v121 = vld [vmem:[#allocation2 + $0x1b0] sm:$0xff]
    %v122 = vld [vmem:[#allocation2 + $0x1b8] sm:$0xff]
    %v123 = vld [vmem:[#allocation2 + $0x1c0] sm:$0xff]
    %v124 = vld [vmem:[#allocation2 + $0x1c8] sm:$0xff]
    %v125 = vld [vmem:[#allocation2 + $0x1d0] sm:$0xff]
    %v126 = vld [vmem:[#allocation2 + $0x1d8] sm:$0xff]
    %v127 = vld [vmem:[#allocation2 + $0x1e0] sm:$0xff]
    %v128 = vld [vmem:[#allocation2 + $0x1e8] sm:$0xff]
    %v129 = vld [vmem:[#allocation2 + $0x1f0] sm:$0xff]
    %v130 = vld [vmem:[#allocation2 + $0x1f8] sm:$0xff]
    %v131 = vld [vmem:[#allocation2 + $0x200] sm:$0xff]
    %v132 = vld [vmem:[#allocation2 + $0x208] sm:$0xff]
    %v133 = vld [vmem:[#allocation2 + $0x210] sm:$0xff]
    %v134 = vld [vmem:[#allocation2 + $0x218] sm:$0xff]
    %v135 = vld [vmem:[#allocation2 + $0x220] sm:$0xff]
    %v136 = vld [vmem:[#allocation2 + $0x228] sm:$0xff]
    %v137 = vld [vmem:[#allocation2 + $0x230] sm:$0xff]
    %v138 = vld [vmem:[#allocation2 + $0x238] sm:$0xff]
    %v139 = vld [vmem:[#allocation2 + $0x240] sm:$0xff]
    %v140 = vld [vmem:[#allocation2 + $0x248] sm:$0xff]
    %v141 = vld [vmem:[#allocation2 + $0x250] sm:$0xff]
    %v142 = vld [vmem:[#allocation2 + $0x258] sm:$0xff]
    %v143 = vld [vmem:[#allocation2 + $0x260] sm:$0xff]
    %v144 = vld [vmem:[#allocation2 + $0x268] sm:$0xff]
    %v145 = vld [vmem:[#allocation2 + $0x270] sm:$0xff]
    %v146 = vld [vmem:[#allocation2 + $0x278] sm:$0xff]
    %v147 = vld [vmem:[#allocation2 + $0x280] sm:$0xff]
    %v148 = vld [vmem:[#allocation2 + $0x288] sm:$0xff]
    %v149 = vld [vmem:[#allocation2 + $0x290] sm:$0xff]
    %v150 = vld [vmem:[#allocation2 + $0x298] sm:$0xff]
    %v151 = vld [vmem:[#allocation2 + $0x2a0] sm:$0xff]
    %v152 = vld [vmem:[#allocation2 + $0x2a8] sm:$0xff]
    %v153 = vld [vmem:[#allocation2 + $0x2b0] sm:$0xff]
    %v154 = vld [vmem:[#allocation2 + $0x2b8] sm:$0xff]
    %v155 = vld [vmem:[#allocation2 + $0x2c0] sm:$0xff]
    %v156 = vld [vmem:[#allocation2 + $0x2c8] sm:$0xff]
    %v157 = vld [vmem:[#allocation2 + $0x2d0] sm:$0xff]
    %v158 = vld [vmem:[#allocation2 + $0x2d8] sm:$0xff]
    %v159 = vld [vmem:[#allocation2 + $0x2e0] sm:$0xff]
    %v160 = vld [vmem:[#allocation2 + $0x2e8] sm:$0xff]
    %v161 = vld [vmem:[#allocation2 + $0x2f0] sm:$0xff]
    %v162 = vld [vmem:[#allocation2 + $0x2f8] sm:$0xff]
    %v163 = vld [vmem:[#allocation2 + $0x300] sm:$0xff]
    %v164 = vld [vmem:[#allocation2 + $0x308] sm:$0xff]
    %v165 = vld [vmem:[#allocation5] sm:$0xff]
    %v166 = vld [vmem:[#allocation5 + $0x8] sm:$0xff]
    %v167 = vld [vmem:[#allocation5 + $0x10] sm:$0xff]
    %v168 = vld [vmem:[#allocation5 + $0x18] sm:$0xff]
    %v169 = vld [vmem:[#allocation5 + $0x20] sm:$0xff]
    %v170 = vld [vmem:[#allocation5 + $0x28] sm:$0xff]
    %v171 = vld [vmem:[#allocation5 + $0x30] sm:$0xff]
    %v172 = vld [vmem:[#allocation5 + $0x38] sm:$0xff]
    %v173 = vld [vmem:[#allocation5 + $0x40] sm:$0xff]
    %v174 = vld [vmem:[#allocation5 + $0x48] sm:$0xff]
    %v175 = vld [vmem:[#allocation5 + $0x50] sm:$0xff]
    %v176 = vld [vmem:[#allocation5 + $0x58] sm:$0xff]
    %v177 = vld [vmem:[#allocation5 + $0x60] sm:$0xff]
    %v178 = vld [vmem:[#allocation5 + $0x68] sm:$0xff]
    %v179 = vld [vmem:[#allocation5 + $0x70] sm:$0xff]
    %v180 = vld [vmem:[#allocation5 + $0x78] sm:$0xff]
    %v181 = vld [vmem:[#allocation5 + $0x80] sm:$0xff]
    %v182 = vld [vmem:[#allocation5 + $0x88] sm:$0xff]
    %v183 = vld [vmem:[#allocation5 + $0x90] sm:$0xff]
    %v184 = vld [vmem:[#allocation5 + $0x98] sm:$0xff]
    %v185 = vld [vmem:[#allocation5 + $0xa0] sm:$0xff]
    %v186 = vld [vmem:[#allocation5 + $0xa8] sm:$0xff]
    %v187 = vld [vmem:[#allocation5 + $0xb0] sm:$0xff]
    %v188 = vld [vmem:[#allocation5 + $0xb8] sm:$0xff]
    %v189 = vld [vmem:[#allocation5 + $0xc0] sm:$0xff]
    %v190 = vld [vmem:[#allocation5 + $0xc8] sm:$0xff]
    %v191 = vld [vmem:[#allocation5 + $0xd0] sm:$0xff]
    %v192 = vld [vmem:[#allocation5 + $0xd8] sm:$0xff]
    %v193 = vld [vmem:[#allocation5 + $0xe0] sm:$0xff]
    %v194 = vld [vmem:[#allocation5 + $0xe8] sm:$0xff]
    %v195 = vld [vmem:[#allocation5 + $0xf0] sm:$0xff]
    %v196 = vld [vmem:[#allocation5 + $0xf8] sm:$0xff]
    %v197 = vld [vmem:[#allocation5 + $0x100] sm:$0xff]
    %v198 = vld [vmem:[#allocation5 + $0x108] sm:$0xff]
    %v199 = vld [vmem:[#allocation5 + $0x110] sm:$0xff]
    %v200 = vld [vmem:[#allocation5 + $0x118] sm:$0xff]
    %v201 = vld [vmem:[#allocation5 + $0x120] sm:$0xff]
    %v202 = vld [vmem:[#allocation5 + $0x128] sm:$0xff]
    %v203 = vld [vmem:[#allocation5 + $0x130] sm:$0xff]
    %v204 = vld [vmem:[#allocation5 + $0x138] sm:$0xff]
    %v205 = vld [vmem:[#allocation5 + $0x140] sm:$0xff]
    %v206 = vld [vmem:[#allocation5 + $0x148] sm:$0xff]
    %v207 = vld [vmem:[#allocation5 + $0x150] sm:$0xff]
    %v208 = vld [vmem:[#allocation5 + $0x158] sm:$0xff]
    %v209 = vld [vmem:[#allocation5 + $0x160] sm:$0xff]
    %v210 = vld [vmem:[#allocation5 + $0x168] sm:$0xff]
    %v211 = vld [vmem:[#allocation5 + $0x170] sm:$0xff]
    %v212 = vld [vmem:[#allocation5 + $0x178] sm:$0xff]
    %v213 = vld [vmem:[#allocation5 + $0x180] sm:$0xff]
    %v214 = vld [vmem:[#allocation5 + $0x188] sm:$0xff]
    %v215 = vld [vmem:[#allocation5 + $0x190] sm:$0xff]
    %v216 = vld [vmem:[#allocation5 + $0x198] sm:$0xff]
    %v217 = vld [vmem:[#allocation5 + $0x1a0] sm:$0xff]
    %v218 = vld [vmem:[#allocation5 + $0x1a8] sm:$0xff]
    %v219 = vld [vmem:[#allocation5 + $0x1b0] sm:$0xff]
    %v220 = vld [vmem:[#allocation5 + $0x1b8] sm:$0xff]
    %v221 = vld [vmem:[#allocation5 + $0x1c0] sm:$0xff]
    %v222 = vld [vmem:[#allocation5 + $0x1c8] sm:$0xff]
    %v223 = vld [vmem:[#allocation5 + $0x1d0] sm:$0xff]
    %v224 = vld [vmem:[#allocation5 + $0x1d8] sm:$0xff]
    %v225 = vld [vmem:[#allocation5 + $0x1e0] sm:$0xff]
    %v226 = vld [vmem:[#allocation5 + $0x1e8] sm:$0xff]
    %v227 = vld [vmem:[#allocation5 + $0x1f0] sm:$0xff]
    %v228 = vld [vmem:[#allocation5 + $0x1f8] sm:$0xff]
    %v229 = vld [vmem:[#allocation5 + $0x200] sm:$0xff]
    %v230 = vld [vmem:[#allocation5 + $0x208] sm:$0xff]
    %v231 = vld [vmem:[#allocation5 + $0x210] sm:$0xff]
    %v232 = vld [vmem:[#allocation5 + $0x218] sm:$0xff]
    %v233 = vld [vmem:[#allocation5 + $0x220] sm:$0xff]
    %v234 = vld [vmem:[#allocation5 + $0x228] sm:$0xff]
    %v235 = vld [vmem:[#allocation5 + $0x230] sm:$0xff]
    %v236 = vld [vmem:[#allocation5 + $0x238] sm:$0xff]
    %v237 = vld [vmem:[#allocation5 + $0x240] sm:$0xff]
    %v238 = vld [vmem:[#allocation5 + $0x248] sm:$0xff]
    %v239 = vld [vmem:[#allocation5 + $0x250] sm:$0xff]
    %v240 = vld [vmem:[#allocation5 + $0x258] sm:$0xff]
    %v241 = vld [vmem:[#allocation5 + $0x260] sm:$0xff]
    %v242 = vld [vmem:[#allocation5 + $0x268] sm:$0xff]
    %v243 = vld [vmem:[#allocation5 + $0x270] sm:$0xff]
    %v244 = vld [vmem:[#allocation5 + $0x278] sm:$0xff]
    %v245 = vld [vmem:[#allocation5 + $0x280] sm:$0xff]
    %v246 = vld [vmem:[#allocation5 + $0x288] sm:$0xff]
    %v247 = vld [vmem:[#allocation5 + $0x290] sm:$0xff]
    %v248 = vld [vmem:[#allocation5 + $0x298] sm:$0xff]
    %v249 = vld [vmem:[#allocation5 + $0x2a0] sm:$0xff]
    %v250 = vld [vmem:[#allocation5 + $0x2a8] sm:$0xff]
    %v251 = vld [vmem:[#allocation5 + $0x2b0] sm:$0xff]
    %v252 = vld [vmem:[#allocation5 + $0x2b8] sm:$0xff]
    %v253 = vld [vmem:[#allocation5 + $0x2c0] sm:$0xff]
    %v254 = vld [vmem:[#allocation5 + $0x2c8] sm:$0xff]
    %v255 = vld [vmem:[#allocation5 + $0x2d0] sm:$0xff]
    %v256 = vld [vmem:[#allocation5 + $0x2d8] sm:$0xff]
    %v257 = vld [vmem:[#allocation5 + $0x2e0] sm:$0xff]
    %v258 = vld [vmem:[#allocation5 + $0x2e8] sm:$0xff]
    %v259 = vld [vmem:[#allocation5 + $0x2f0] sm:$0xff]
    %v260 = vld [vmem:[#allocation5 + $0x2f8] sm:$0xff]
    %v261 = vld [vmem:[#allocation5 + $0x300] sm:$0xff]
    %v262 = vld [vmem:[#allocation5 + $0x308] sm:$0xff]
    %v263 = vld [vmem:[#allocation5 + $0x310] sm:$0xff]
    %v264 = vld [vmem:[#allocation5 + $0x318] sm:$0xff]
    %v265 = vld [vmem:[#allocation5 + $0x320] sm:$0xff]
    %v266 = vld [vmem:[#allocation5 + $0x328] sm:$0xff]
    %v267 = vld [vmem:[#allocation5 + $0x330] sm:$0xff]
    %v268 = vld [vmem:[#allocation5 + $0x338] sm:$0xff]
    %v269 = vld [vmem:[#allocation5 + $0x340] sm:$0xff]
    %v270 = vld [vmem:[#allocation5 + $0x348] sm:$0xff]
    %v271 = vld [vmem:[#allocation5 + $0x350] sm:$0xff]
    %v272 = vld [vmem:[#allocation5 + $0x358] sm:$0xff]
    %v273 = vld [vmem:[#allocation5 + $0x360] sm:$0xff]
    %v274 = vld [vmem:[#allocation5 + $0x368] sm:$0xff]
    %v275 = vld [vmem:[#allocation5 + $0x370] sm:$0xff]
    %v276 = vld [vmem:[#allocation5 + $0x378] sm:$0xff]
    %v277 = vld [vmem:[#allocation5 + $0x380] sm:$0xff]
    %v278 = vld [vmem:[#allocation5 + $0x388] sm:$0xff]
    %v279 = vld [vmem:[#allocation5 + $0x390] sm:$0xff]
    %v280 = vld [vmem:[#allocation5 + $0x398] sm:$0xff]
    %v281 = vld [vmem:[#allocation5 + $0x3a0] sm:$0xff]
    %v282 = vld [vmem:[#allocation5 + $0x3a8] sm:$0xff]
    %v283 = vld [vmem:[#allocation5 + $0x3b0] sm:$0xff]
    %v284 = vld [vmem:[#allocation5 + $0x3b8] sm:$0xff]
    %v285 = vld [vmem:[#allocation5 + $0x3c0] sm:$0xff]
    %v286 = vld [vmem:[#allocation5 + $0x3c8] sm:$0xff]
    %v287 = vld [vmem:[#allocation5 + $0x3d0] sm:$0xff]
    %v288 = vld [vmem:[#allocation5 + $0x3d8] sm:$0xff]
    %v289 = vld [vmem:[#allocation5 + $0x3e0] sm:$0xff]
    %v290 = vld [vmem:[#allocation5 + $0x3e8] sm:$0xff]
    %v291 = vld [vmem:[#allocation5 + $0x3f0] sm:$0xff]
    %v292 = vld [vmem:[#allocation5 + $0x3f8] sm:$0xff]
    %v293 = vld [vmem:[#allocation5 + $0x400] sm:$0xff]
    %v294 = vld [vmem:[#allocation5 + $0x408] sm:$0xff]
    %v295 = vld [vmem:[#allocation5 + $0x410] sm:$0xff]
    %v296 = vld [vmem:[#allocation5 + $0x418] sm:$0xff]
    %v297 = vld [vmem:[#allocation5 + $0x420] sm:$0xff]
    %v298 = vld [vmem:[#allocation5 + $0x428] sm:$0xff]
    %v299 = vld [vmem:[#allocation5 + $0x430] sm:$0xff]
    %v300 = vld [vmem:[#allocation5 + $0x438] sm:$0xff]
    %v301 = vld [vmem:[#allocation5 + $0x440] sm:$0xff]
    %v302 = vld [vmem:[#allocation5 + $0x448] sm:$0xff]
    %v303 = vld [vmem:[#allocation5 + $0x450] sm:$0xff]
    %v304 = vld [vmem:[#allocation5 + $0x458] sm:$0xff]
    %v305 = vld [vmem:[#allocation5 + $0x460] sm:$0xff]
    %v306 = vld [vmem:[#allocation5 + $0x468] sm:$0xff]
    %v307 = vld [vmem:[#allocation5 + $0x470] sm:$0xff]
    %v308 = vld [vmem:[#allocation5 + $0x478] sm:$0xff]
    %v309 = vld [vmem:[#allocation5 + $0x480] sm:$0xff]
    %v310 = vld [vmem:[#allocation5 + $0x488] sm:$0xff]
    %v311 = vld [vmem:[#allocation5 + $0x490] sm:$0xff]
    %v312 = vld [vmem:[#allocation5 + $0x498] sm:$0xff]
    %v313 = vld [vmem:[#allocation5 + $0x4a0] sm:$0xff]
    %v314 = vld [vmem:[#allocation5 + $0x4a8] sm:$0xff]
    %v315 = vld [vmem:[#allocation5 + $0x4b0] sm:$0xff]
    %v316 = vld [vmem:[#allocation5 + $0x4b8] sm:$0xff]
    %v317 = vld [vmem:[#allocation5 + $0x4c0] sm:$0xff]
    %v318 = vld [vmem:[#allocation5 + $0x4c8] sm:$0xff]
    %v319 = vld [vmem:[#allocation5 + $0x4d0] sm:$0xff]
    %v320 = vld [vmem:[#allocation5 + $0x4d8] sm:$0xff]
    %v321 = vld [vmem:[#allocation5 + $0x4e0] sm:$0xff]
    %v322 = vld [vmem:[#allocation5 + $0x4e8] sm:$0xff]
    %v323 = vld [vmem:[#allocation5 + $0x4f0] sm:$0xff]
    %v324 = vld [vmem:[#allocation5 + $0x4f8] sm:$0xff]
    %v325 = vld [vmem:[#allocation5 + $0x500] sm:$0xff]
    %v326 = vld [vmem:[#allocation5 + $0x508] sm:$0xff]
    %v327 = vld [vmem:[#allocation5 + $0x510] sm:$0xff]
    %v328 = vld [vmem:[#allocation5 + $0x518] sm:$0xff]
    %v329 = vld [vmem:[#allocation5 + $0x520] sm:$0xff]
    %v330 = vld [vmem:[#allocation5 + $0x528] sm:$0xff]
    %v331 = vld [vmem:[#allocation5 + $0x530] sm:$0xff]
    %v332 = vld [vmem:[#allocation5 + $0x538] sm:$0xff]
    %v333 = vld [vmem:[#allocation5 + $0x540] sm:$0xff]
    %v334 = vld [vmem:[#allocation5 + $0x548] sm:$0xff]
    %v335 = vld [vmem:[#allocation5 + $0x550] sm:$0xff]
    %v336 = vld [vmem:[#allocation5 + $0x558] sm:$0xff]
    %v337 = vld [vmem:[#allocation5 + $0x560] sm:$0xff]
    %v338 = vld [vmem:[#allocation5 + $0x568] sm:$0xff]
    %v339 = vld [vmem:[#allocation5 + $0x570] sm:$0xff]
    %v340 = vld [vmem:[#allocation5 + $0x578] sm:$0xff]
    %v341 = vld [vmem:[#allocation5 + $0x580] sm:$0xff]
    %v342 = vld [vmem:[#allocation5 + $0x588] sm:$0xff]
    %v343 = vld [vmem:[#allocation5 + $0x590] sm:$0xff]
    %v344 = vld [vmem:[#allocation5 + $0x598] sm:$0xff]
    %v345 = vld [vmem:[#allocation5 + $0x5a0] sm:$0xff]
    %v346 = vld [vmem:[#allocation5 + $0x5a8] sm:$0xff]
    %v347 = vld [vmem:[#allocation5 + $0x5b0] sm:$0xff]
    %v348 = vld [vmem:[#allocation5 + $0x5b8] sm:$0xff]
    %v349 = vld [vmem:[#allocation5 + $0x5c0] sm:$0xff]
    %v350 = vld [vmem:[#allocation5 + $0x5c8] sm:$0xff]
    %v351 = vld [vmem:[#allocation5 + $0x5d0] sm:$0xff]
    %v352 = vld [vmem:[#allocation5 + $0x5d8] sm:$0xff]
    %v353 = vld [vmem:[#allocation5 + $0x5e0] sm:$0xff]
    %v354 = vld [vmem:[#allocation5 + $0x5e8] sm:$0xff]
    %v355 = vld [vmem:[#allocation5 + $0x5f0] sm:$0xff]
    %v356 = vld [vmem:[#allocation5 + $0x5f8] sm:$0xff]
    %v357 = vld [vmem:[#allocation5 + $0x600] sm:$0xff]
    %v358 = vld [vmem:[#allocation5 + $0x608] sm:$0xff]
    %v359 = vld [vmem:[#allocation5 + $0x610] sm:$0xff]
    %v360 = vld [vmem:[#allocation5 + $0x618] sm:$0xff]
    %v361 = vld [vmem:[#allocation5 + $0x620] sm:$0xff]
    %v362 = vld [vmem:[#allocation5 + $0x628] sm:$0xff]
    %v363 = vld [vmem:[#allocation5 + $0x630] sm:$0xff]
    %v364 = vld [vmem:[#allocation5 + $0x638] sm:$0xff]
    %v365 = vld [vmem:[#allocation5 + $0x640] sm:$0xff]
    %v366 = vld [vmem:[#allocation5 + $0x648] sm:$0xff]
    %v367 = vld [vmem:[#allocation5 + $0x650] sm:$0xff]
    %v368 = vld [vmem:[#allocation5 + $0x658] sm:$0xff]
    %v369 = vld [vmem:[#allocation5 + $0x660] sm:$0xff]
    %v370 = vld [vmem:[#allocation5 + $0x668] sm:$0xff]
    %v371 = vld [vmem:[#allocation5 + $0x670] sm:$0xff]
    %v372 = vld [vmem:[#allocation5 + $0x678] sm:$0xff]
    %v373 = vld [vmem:[#allocation5 + $0x680] sm:$0xff]
    %v374 = vld [vmem:[#allocation5 + $0x688] sm:$0xff]
    %v375 = vld [vmem:[#allocation5 + $0x690] sm:$0xff]
    %v376 = vld [vmem:[#allocation5 + $0x698] sm:$0xff]
    %v377 = vld [vmem:[#allocation5 + $0x6a0] sm:$0xff]
    %v378 = vld [vmem:[#allocation5 + $0x6a8] sm:$0xff]
    %v379 = vld [vmem:[#allocation5 + $0x6b0] sm:$0xff]
    %v380 = vld [vmem:[#allocation5 + $0x6b8] sm:$0xff]
    %v381 = vld [vmem:[#allocation5 + $0x6c0] sm:$0xff]
    %v382 = vld [vmem:[#allocation5 + $0x6c8] sm:$0xff]
    %v383 = vld [vmem:[#allocation5 + $0x6d0] sm:$0xff]
    %v384 = vld [vmem:[#allocation5 + $0x6d8] sm:$0xff]
    %v385 = vld [vmem:[#allocation5 + $0x6e0] sm:$0xff]
    %v386 = vld [vmem:[#allocation5 + $0x6e8] sm:$0xff]
    %v387 = vld [vmem:[#allocation5 + $0x6f0] sm:$0xff]
    %v388 = vld [vmem:[#allocation5 + $0x6f8] sm:$0xff]
    %v389 = vld [vmem:[#allocation5 + $0x700] sm:$0xff]
    %v390 = vld [vmem:[#allocation5 + $0x708] sm:$0xff]
    %v391 = vld [vmem:[#allocation5 + $0x710] sm:$0xff]
    %v392 = vld [vmem:[#allocation5 + $0x718] sm:$0xff]
    %v393 = vld [vmem:[#allocation5 + $0x720] sm:$0xff]
    %v394 = vld [vmem:[#allocation5 + $0x728] sm:$0xff]
    %v395 = vld [vmem:[#allocation5 + $0x730] sm:$0xff]
    %v396 = vld [vmem:[#allocation5 + $0x738] sm:$0xff]
    %v397 = vld [vmem:[#allocation5 + $0x740] sm:$0xff]
    %v398 = vld [vmem:[#allocation5 + $0x748] sm:$0xff]
    %v399 = vld [vmem:[#allocation5 + $0x750] sm:$0xff]
    %v400 = vld [vmem:[#allocation5 + $0x758] sm:$0xff]
    %v401 = vld [vmem:[#allocation5 + $0x760] sm:$0xff]
    %v402 = vld [vmem:[#allocation5 + $0x768] sm:$0xff]
    %v403 = vld [vmem:[#allocation5 + $0x770] sm:$0xff]
    %v404 = vld [vmem:[#allocation5 + $0x778] sm:$0xff]
    %v405 = vld [vmem:[#allocation5 + $0x780] sm:$0xff]
    %v406 = vld [vmem:[#allocation5 + $0x788] sm:$0xff]
    %v407 = vld [vmem:[#allocation5 + $0x790] sm:$0xff]
    %v408 = vld [vmem:[#allocation5 + $0x798] sm:$0xff]
    %v409 = vld [vmem:[#allocation5 + $0x7a0] sm:$0xff]
    %v410 = vld [vmem:[#allocation5 + $0x7a8] sm:$0xff]
    %v411 = vld [vmem:[#allocation5 + $0x7b0] sm:$0xff]
    %v412 = vld [vmem:[#allocation5 + $0x7b8] sm:$0xff]
    %v413 = vld [vmem:[#allocation5 + $0x7c0] sm:$0xff]
    %v414 = vld [vmem:[#allocation5 + $0x7c8] sm:$0xff]
    %v415 = vld [vmem:[#allocation5 + $0x7d0] sm:$0xff]
    %v416 = vld [vmem:[#allocation5 + $0x7d8] sm:$0xff]
    %v417 = vld [vmem:[#allocation5 + $0x7e0] sm:$0xff]
    %v418 = vld [vmem:[#allocation5 + $0x7e8] sm:$0xff]
    %v419 = vld [vmem:[#allocation5 + $0x7f0] sm:$0xff]
    %v420 = vld [vmem:[#allocation5 + $0x7f8] sm:$0xff]
    %v421 = vld [vmem:[#allocation5 + $0x800] sm:$0xff]
    %v422 = vld [vmem:[#allocation5 + $0x808] sm:$0xff]
    %v423 = vld [vmem:[#allocation5 + $0x810] sm:$0xff]
    %v424 = vld [vmem:[#allocation5 + $0x818] sm:$0xff]
    %v425 = vld [vmem:[#allocation5 + $0x820] sm:$0xff]
    %v426 = vld [vmem:[#allocation5 + $0x828] sm:$0xff]
    %v427 = vld [vmem:[#allocation5 + $0x830] sm:$0xff]
    %v428 = vld [vmem:[#allocation5 + $0x838] sm:$0xff]
    %v429 = vld [vmem:[#allocation5 + $0x840] sm:$0xff]
    %v430 = vld [vmem:[#allocation5 + $0x848] sm:$0xff]
    %v431 = vld [vmem:[#allocation5 + $0x850] sm:$0xff]
    %v432 = vld [vmem:[#allocation5 + $0x858] sm:$0xff]
    %v433 = vld [vmem:[#allocation5 + $0x860] sm:$0xff]
    %v434 = vld [vmem:[#allocation5 + $0x868] sm:$0xff]
    %v435 = vld [vmem:[#allocation5 + $0x870] sm:$0xff]
    %v436 = vld [vmem:[#allocation5 + $0x878] sm:$0xff]
    %v437 = vld [vmem:[#allocation5 + $0x880] sm:$0xff]
    %v438 = vld [vmem:[#allocation5 + $0x888] sm:$0xff]
    %v439 = vld [vmem:[#allocation5 + $0x890] sm:$0xff]
    %v440 = vld [vmem:[#allocation5 + $0x898] sm:$0xff]
    %v441 = vld [vmem:[#allocation5 + $0x8a0] sm:$0xff]
    %v442 = vld [vmem:[#allocation5 + $0x8a8] sm:$0xff]
    %v443 = vld [vmem:[#allocation5 + $0x8b0] sm:$0xff]
    %v444 = vld [vmem:[#allocation5 + $0x8b8] sm:$0xff]
    %v445 = vld [vmem:[#allocation5 + $0x8c0] sm:$0xff]
    %v446 = vld [vmem:[#allocation5 + $0x8c8] sm:$0xff]
    %v447 = vld [vmem:[#allocation5 + $0x8d0] sm:$0xff]
    %v448 = vld [vmem:[#allocation5 + $0x8d8] sm:$0xff]
    %v449 = vld [vmem:[#allocation5 + $0x8e0] sm:$0xff]
    %v450 = vld [vmem:[#allocation5 + $0x8e8] sm:$0xff]
    %v451 = vld [vmem:[#allocation5 + $0x8f0] sm:$0xff]
    %v452 = vld [vmem:[#allocation5 + $0x8f8] sm:$0xff]
    %v453 = vld [vmem:[#allocation5 + $0x900] sm:$0xff]
    %v454 = vld [vmem:[#allocation5 + $0x908] sm:$0xff]
    %v455 = vld [vmem:[#allocation5 + $0x910] sm:$0xff]
    %v456 = vld [vmem:[#allocation5 + $0x918] sm:$0xff]
    %v457 = vld [vmem:[#allocation5 + $0x920] sm:$0xff]
    %v458 = vld [vmem:[#allocation5 + $0x928] sm:$0xff]
    %v459 = vld [vmem:[#allocation5 + $0x930] sm:$0xff]
    %v460 = vld [vmem:[#allocation5 + $0x938] sm:$0xff]
    %v461 = vld [vmem:[#allocation5 + $0x940] sm:$0xff]
    %v462 = vld [vmem:[#allocation5 + $0x948] sm:$0xff]
    %v463 = vld [vmem:[#allocation5 + $0x950] sm:$0xff]
    %v464 = vld [vmem:[#allocation5 + $0x958] sm:$0xff]
    %v465 = vld [vmem:[#allocation5 + $0x960] sm:$0xff]
    %v466 = vld [vmem:[#allocation5 + $0x968] sm:$0xff]
    %v467 = vld [vmem:[#allocation5 + $0x970] sm:$0xff]
    %v468 = vld [vmem:[#allocation5 + $0x978] sm:$0xff]
    %v469 = vld [vmem:[#allocation5 + $0x980] sm:$0xff]
    %v470 = vld [vmem:[#allocation5 + $0x988] sm:$0xff]
    %v471 = vld [vmem:[#allocation5 + $0x990] sm:$0xff]
    %v472 = vld [vmem:[#allocation5 + $0x998] sm:$0xff]
    %v473 = vld [vmem:[#allocation5 + $0x9a0] sm:$0xff]
    %v474 = vld [vmem:[#allocation5 + $0x9a8] sm:$0xff]
    %v475 = vld [vmem:[#allocation5 + $0x9b0] sm:$0xff]
    %v476 = vld [vmem:[#allocation5 + $0x9b8] sm:$0xff]
    %v477 = vld [vmem:[#allocation5 + $0x9c0] sm:$0xff]
    %v478 = vld [vmem:[#allocation5 + $0x9c8] sm:$0xff]
    %v479 = vld [vmem:[#allocation5 + $0x9d0] sm:$0xff]
    %v480 = vld [vmem:[#allocation5 + $0x9d8] sm:$0xff]
    %v481 = vld [vmem:[#allocation5 + $0x9e0] sm:$0xff]
    %v482 = vld [vmem:[#allocation5 + $0x9e8] sm:$0xff]
    %v483 = vld [vmem:[#allocation5 + $0x9f0] sm:$0xff]
    %v484 = vld [vmem:[#allocation5 + $0x9f8] sm:$0xff]
    %v485 = vld [vmem:[#allocation5 + $0xa00] sm:$0xff]
    %v486 = vld [vmem:[#allocation5 + $0xa08] sm:$0xff]
    %v487 = vld [vmem:[#allocation5 + $0xa10] sm:$0xff]
    %v488 = vld [vmem:[#allocation5 + $0xa18] sm:$0xff]
    %v489 = vld [vmem:[#allocation5 + $0xa20] sm:$0xff]
    %v490 = vld [vmem:[#allocation5 + $0xa28] sm:$0xff]
    %v491 = vld [vmem:[#allocation5 + $0xa30] sm:$0xff]
    %v492 = vld [vmem:[#allocation5 + $0xa38] sm:$0xff]
    %v493 = vld [vmem:[#allocation5 + $0xa40] sm:$0xff]
    %v494 = vld [vmem:[#allocation5 + $0xa48] sm:$0xff]
    %v495 = vld [vmem:[#allocation5 + $0xa50] sm:$0xff]
    %v496 = vld [vmem:[#allocation5 + $0xa58] sm:$0xff]
    %v497 = vld [vmem:[#allocation5 + $0xa60] sm:$0xff]
    %v498 = vld [vmem:[#allocation5 + $0xa68] sm:$0xff]
    %v499 = vld [vmem:[#allocation5 + $0xa70] sm:$0xff]
    %v500 = vld [vmem:[#allocation5 + $0xa78] sm:$0xff]
    %v501 = vld [vmem:[#allocation5 + $0xa80] sm:$0xff]
    %v502 = vld [vmem:[#allocation5 + $0xa88] sm:$0xff]
    %v503 = vld [vmem:[#allocation5 + $0xa90] sm:$0xff]
    %v504 = vld [vmem:[#allocation5 + $0xa98] sm:$0xff]
    %v505 = vld [vmem:[#allocation5 + $0xaa0] sm:$0xff]
    %v506 = vld [vmem:[#allocation5 + $0xaa8] sm:$0xff]
    %v507 = vld [vmem:[#allocation5 + $0xab0] sm:$0xff]
    %v508 = vld [vmem:[#allocation5 + $0xab8] sm:$0xff]
    %v509 = vld [vmem:[#allocation5 + $0xac0] sm:$0xff]
    %v510 = vld [vmem:[#allocation5 + $0xac8] sm:$0xff]
    %v511 = vld [vmem:[#allocation5 + $0xad0] sm:$0xff]
    %v512 = vld [vmem:[#allocation5 + $0xad8] sm:$0xff]
    %v513 = vld [vmem:[#allocation5 + $0xae0] sm:$0xff]
    %v514 = vld [vmem:[#allocation5 + $0xae8] sm:$0xff]
    %v515 = vld [vmem:[#allocation5 + $0xaf0] sm:$0xff]
    %v516 = vld [vmem:[#allocation5 + $0xaf8] sm:$0xff]
    %v517 = vld [vmem:[#allocation5 + $0xb00] sm:$0xff]
    %v518 = vld [vmem:[#allocation5 + $0xb08] sm:$0xff]
    %v519 = vld [vmem:[#allocation5 + $0xb10] sm:$0xff]
    %v520 = vld [vmem:[#allocation5 + $0xb18] sm:$0xff]
    %v521 = vld [vmem:[#allocation5 + $0xb20] sm:$0xff]
    %v522 = vld [vmem:[#allocation5 + $0xb28] sm:$0xff]
    %v523 = vld [vmem:[#allocation5 + $0xb30] sm:$0xff]
    %v524 = vld [vmem:[#allocation5 + $0xb38] sm:$0xff]
    %v525 = vld [vmem:[#allocation5 + $0xb40] sm:$0xff]
    %v526 = vld [vmem:[#allocation5 + $0xb48] sm:$0xff]
    %v527 = vld [vmem:[#allocation5 + $0xb50] sm:$0xff]
    %v528 = vld [vmem:[#allocation5 + $0xb58] sm:$0xff]
    %v529 = vld [vmem:[#allocation5 + $0xb60] sm:$0xff]
    %v530 = vld [vmem:[#allocation5 + $0xb68] sm:$0xff]
    %v531 = vld [vmem:[#allocation5 + $0xb70] sm:$0xff]
    %v532 = vld [vmem:[#allocation5 + $0xb78] sm:$0xff]
    %v533 = vld [vmem:[#allocation5 + $0xb80] sm:$0xff]
    %v534 = vld [vmem:[#allocation5 + $0xb88] sm:$0xff]
    %v535 = vld [vmem:[#allocation5 + $0xb90] sm:$0xff]
    %v536 = vld [vmem:[#allocation5 + $0xb98] sm:$0xff]
    %v537 = vld [vmem:[#allocation5 + $0xba0] sm:$0xff]
    %v538 = vld [vmem:[#allocation5 + $0xba8] sm:$0xff]
    %v539 = vld [vmem:[#allocation5 + $0xbb0] sm:$0xff]
    %v540 = vld [vmem:[#allocation5 + $0xbb8] sm:$0xff]
    %v541 = vld [vmem:[#allocation5 + $0xbc0] sm:$0xff]
    %v542 = vld [vmem:[#allocation5 + $0xbc8] sm:$0xff]
    %v543 = vld [vmem:[#allocation5 + $0xbd0] sm:$0xff]
    %v544 = vld [vmem:[#allocation5 + $0xbd8] sm:$0xff]
    %v545 = vld [vmem:[#allocation5 + $0xbe0] sm:$0xff]
    %v546 = vld [vmem:[#allocation5 + $0xbe8] sm:$0xff]
    %v547 = vld [vmem:[#allocation5 + $0xbf0] sm:$0xff]
    %v548 = vld [vmem:[#allocation5 + $0xbf8] sm:$0xff]
    %v549 = vld [vmem:[#allocation5 + $0xc00] sm:$0xff]
    %v550 = vld [vmem:[#allocation5 + $0xc08] sm:$0xff]
    %v551 = vld [vmem:[#allocation5 + $0xc10] sm:$0xff]
    %v552 = vld [vmem:[#allocation5 + $0xc18] sm:$0xff]
    %v553 = vld [vmem:[#allocation5 + $0xc20] sm:$0xff]
    %v554 = vld [vmem:[#allocation5 + $0xc28] sm:$0xff]
    %v555 = vld [vmem:[#allocation5 + $0xc30] sm:$0xff]
    %v556 = vld [vmem:[#allocation5 + $0xc38] sm:$0xff]
    %v557 = vld [vmem:[#allocation5 + $0xc40] sm:$0xff]
    %v558 = vld [vmem:[#allocation5 + $0xc48] sm:$0xff]
    %v559 = vld [vmem:[#allocation5 + $0xc50] sm:$0xff]
    %v560 = vld [vmem:[#allocation5 + $0xc58] sm:$0xff]
    %v561 = vld [vmem:[#allocation5 + $0xc60] sm:$0xff]
    %v562 = vld [vmem:[#allocation5 + $0xc68] sm:$0xff]
    %v563 = vld [vmem:[#allocation5 + $0xc70] sm:$0xff]
    %v564 = vld [vmem:[#allocation5 + $0xc78] sm:$0xff]
    %v565 = vld [vmem:[#allocation5 + $0xc80] sm:$0xff]
    %v566 = vld [vmem:[#allocation5 + $0xc88] sm:$0xff]
    %v567 = vld [vmem:[#allocation5 + $0xc90] sm:$0xff]
    %v568 = vld [vmem:[#allocation5 + $0xc98] sm:$0xff]
    %v569 = vld [vmem:[#allocation5 + $0xca0] sm:$0xff]
    %v570 = vld [vmem:[#allocation5 + $0xca8] sm:$0xff]
    %v571 = vld [vmem:[#allocation5 + $0xcb0] sm:$0xff]
    %v572 = vld [vmem:[#allocation5 + $0xcb8] sm:$0xff]
    %v573 = vld [vmem:[#allocation5 + $0xcc0] sm:$0xff]
    %v574 = vld [vmem:[#allocation5 + $0xcc8] sm:$0xff]
    %v575 = vld [vmem:[#allocation5 + $0xcd0] sm:$0xff]
    %v576 = vld [vmem:[#allocation5 + $0xcd8] sm:$0xff]
    %v577 = vld [vmem:[#allocation5 + $0xce0] sm:$0xff]
    %v578 = vld [vmem:[#allocation5 + $0xce8] sm:$0xff]
    %v579 = vld [vmem:[#allocation5 + $0xcf0] sm:$0xff]
    %v580 = vld [vmem:[#allocation5 + $0xcf8] sm:$0xff]
    %v581 = vld [vmem:[#allocation5 + $0xd00] sm:$0xff]
    %v582 = vld [vmem:[#allocation5 + $0xd08] sm:$0xff]
    %v583 = vld [vmem:[#allocation5 + $0xd10] sm:$0xff]
    %v584 = vld [vmem:[#allocation5 + $0xd18] sm:$0xff]
    %v585 = vld [vmem:[#allocation5 + $0xd20] sm:$0xff]
    %v586 = vld [vmem:[#allocation5 + $0xd28] sm:$0xff]
    %v587 = vld [vmem:[#allocation5 + $0xd30] sm:$0xff]
    %v588 = vld [vmem:[#allocation5 + $0xd38] sm:$0xff]
    %v589 = vld [vmem:[#allocation5 + $0xd40] sm:$0xff]
    %v590 = vld [vmem:[#allocation5 + $0xd48] sm:$0xff]
    %v591 = vld [vmem:[#allocation5 + $0xd50] sm:$0xff]
    %v592 = vld [vmem:[#allocation5 + $0xd58] sm:$0xff]
    %v593 = vld [vmem:[#allocation5 + $0xd60] sm:$0xff]
    %v594 = vld [vmem:[#allocation5 + $0xd68] sm:$0xff]
    %v595 = vld [vmem:[#allocation5 + $0xd70] sm:$0xff]
    %v596 = vld [vmem:[#allocation5 + $0xd78] sm:$0xff]
    %v597 = vld [vmem:[#allocation5 + $0xd80] sm:$0xff]
    %v598 = vld [vmem:[#allocation5 + $0xd88] sm:$0xff]
    %v599 = vld [vmem:[#allocation5 + $0xd90] sm:$0xff]
    %v600 = vld [vmem:[#allocation5 + $0xd98] sm:$0xff]
    %v601 = vld [vmem:[#allocation5 + $0xda0] sm:$0xff]
    %v602 = vld [vmem:[#allocation5 + $0xda8] sm:$0xff]
    %v603 = vld [vmem:[#allocation5 + $0xdb0] sm:$0xff]
    %v604 = vld [vmem:[#allocation5 + $0xdb8] sm:$0xff]
    %v605 = vld [vmem:[#allocation5 + $0xdc0] sm:$0xff]
    %v606 = vld [vmem:[#allocation5 + $0xdc8] sm:$0xff]
    %v607 = vld [vmem:[#allocation5 + $0xdd0] sm:$0xff]
    %v608 = vld [vmem:[#allocation5 + $0xdd8] sm:$0xff]
    %v609 = vld [vmem:[#allocation5 + $0xde0] sm:$0xff]
    %v610 = vld [vmem:[#allocation5 + $0xde8] sm:$0xff]
    %v611 = vld [vmem:[#allocation5 + $0xdf0] sm:$0xff]
    %v612 = vld [vmem:[#allocation5 + $0xdf8] sm:$0xff]
    %v613 = vld [vmem:[#allocation5 + $0xe00] sm:$0xff]
    %v614 = vld [vmem:[#allocation5 + $0xe08] sm:$0xff]
    %v615 = vld [vmem:[#allocation5 + $0xe10] sm:$0xff]
    %v616 = vld [vmem:[#allocation5 + $0xe18] sm:$0xff]
    %v617 = vld [vmem:[#allocation5 + $0xe20] sm:$0xff]
    %v618 = vld [vmem:[#allocation5 + $0xe28] sm:$0xff]
    %v619 = vld [vmem:[#allocation5 + $0xe30] sm:$0xff]
    %v620 = vld [vmem:[#allocation5 + $0xe38] sm:$0xff]
    %v621 = vld [vmem:[#allocation5 + $0xe40] sm:$0xff]
    %v622 = vld [vmem:[#allocation5 + $0xe48] sm:$0xff]
    %v623 = vld [vmem:[#allocation5 + $0xe50] sm:$0xff]
    %v624 = vld [vmem:[#allocation5 + $0xe58] sm:$0xff]
    %v625 = vld [vmem:[#allocation5 + $0xe60] sm:$0xff]
    %v626 = vld [vmem:[#allocation5 + $0xe68] sm:$0xff]
    %v627 = vld [vmem:[#allocation5 + $0xe70] sm:$0xff]
    %v628 = vld [vmem:[#allocation5 + $0xe78] sm:$0xff]
    %v629 = vld [vmem:[#allocation5 + $0xe80] sm:$0xff]
    %v630 = vld [vmem:[#allocation5 + $0xe88] sm:$0xff]
    %v631 = vld [vmem:[#allocation5 + $0xe90] sm:$0xff]
    %v632 = vld [vmem:[#allocation5 + $0xe98] sm:$0xff]
    %v633 = vld [vmem:[#allocation5 + $0xea0] sm:$0xff]
    %v634 = vld [vmem:[#allocation5 + $0xea8] sm:$0xff]
    %v635 = vld [vmem:[#allocation5 + $0xeb0] sm:$0xff]
    %v636 = vld [vmem:[#allocation5 + $0xeb8] sm:$0xff]
    %v637 = vld [vmem:[#allocation5 + $0xec0] sm:$0xff]
    %v638 = vld [vmem:[#allocation5 + $0xec8] sm:$0xff]
    %v639 = vld [vmem:[#allocation5 + $0xed0] sm:$0xff]
    %v640 = vld [vmem:[#allocation5 + $0xed8] sm:$0xff]
    %v641 = vld [vmem:[#allocation5 + $0xee0] sm:$0xff]
    %v642 = vld [vmem:[#allocation5 + $0xee8] sm:$0xff]
    %v643 = vld [vmem:[#allocation5 + $0xef0] sm:$0xff]
    %v644 = vld [vmem:[#allocation5 + $0xef8] sm:$0xff]
    %v645 = vld [vmem:[#allocation5 + $0xf00] sm:$0xff]
    %v646 = vld [vmem:[#allocation5 + $0xf08] sm:$0xff]
    %v647 = vld [vmem:[#allocation5 + $0xf10] sm:$0xff]
    %v648 = vld [vmem:[#allocation5 + $0xf18] sm:$0xff]
    %v649 = vld [vmem:[#allocation5 + $0xf20] sm:$0xff]
    %v650 = vld [vmem:[#allocation5 + $0xf28] sm:$0xff]
    %v651 = vld [vmem:[#allocation5 + $0xf30] sm:$0xff]
    %v652 = vld [vmem:[#allocation5 + $0xf38] sm:$0xff]
    %v653 = vld [vmem:[#allocation5 + $0xf40] sm:$0xff]
    %v654 = vld [vmem:[#allocation5 + $0xf48] sm:$0xff]
    %v655 = vld [vmem:[#allocation5 + $0xf50] sm:$0xff]
    %v656 = vld [vmem:[#allocation5 + $0xf58] sm:$0xff]
    %v657 = vld [vmem:[#allocation5 + $0xf60] sm:$0xff]
    %v658 = vld [vmem:[#allocation5 + $0xf68] sm:$0xff]
    %v659 = vld [vmem:[#allocation5 + $0xf70] sm:$0xff]
    %v660 = vld [vmem:[#allocation5 + $0xf78] sm:$0xff]
    %v661 = vld [vmem:[#allocation5 + $0xf80] sm:$0xff]
    %v662 = vld [vmem:[#allocation5 + $0xf88] sm:$0xff]
    %v663 = vld [vmem:[#allocation5 + $0xf90] sm:$0xff]
    %v664 = vld [vmem:[#allocation5 + $0xf98] sm:$0xff]
    %v665 = vld [vmem:[#allocation5 + $0xfa0] sm:$0xff]
    %v666 = vld [vmem:[#allocation5 + $0xfa8] sm:$0xff]
    %v667 = vld [vmem:[#allocation5 + $0xfb0] sm:$0xff]
    %v668 = vld [vmem:[#allocation5 + $0xfb8] sm:$0xff]
    %v669 = vld [vmem:[#allocation5 + $0xfc0] sm:$0xff]
    %v670 = vld [vmem:[#allocation5 + $0xfc8] sm:$0xff]
    %v671 = vld [vmem:[#allocation5 + $0xfd0] sm:$0xff]
    %v672 = vld [vmem:[#allocation5 + $0xfd8] sm:$0xff]
    %v673 = vld [vmem:[#allocation5 + $0xfe0] sm:$0xff]
    %v674 = vld [vmem:[#allocation5 + $0xfe8] sm:$0xff]
    %v675 = vld [vmem:[#allocation5 + $0xff0] sm:$0xff]
    %v676 = vld [vmem:[#allocation5 + $0xff8] sm:$0xff]
    %v677 = vld [vmem:[#allocation5 + $0x1000] sm:$0xff]
    %v678 = vld [vmem:[#allocation5 + $0x1008] sm:$0xff]
    %v679 = vld [vmem:[#allocation5 + $0x1010] sm:$0xff]
    %v680 = vld [vmem:[#allocation5 + $0x1018] sm:$0xff]
    %v681 = vld [vmem:[#allocation5 + $0x1020] sm:$0xff]
    %v682 = vld [vmem:[#allocation5 + $0x1028] sm:$0xff]
    %v683 = vld [vmem:[#allocation5 + $0x1030] sm:$0xff]
    %v684 = vld [vmem:[#allocation5 + $0x1038] sm:$0xff]
    %v685 = vld [vmem:[#allocation5 + $0x1040] sm:$0xff]
    %v686 = vld [vmem:[#allocation5 + $0x1048] sm:$0xff]
    %v687 = vld [vmem:[#allocation5 + $0x1050] sm:$0xff]
    %v688 = vld [vmem:[#allocation5 + $0x1058] sm:$0xff]
    %v689 = vld [vmem:[#allocation5 + $0x1060] sm:$0xff]
    %v690 = vld [vmem:[#allocation5 + $0x1068] sm:$0xff]
    %v691 = vld [vmem:[#allocation5 + $0x1070] sm:$0xff]
    %v692 = vld [vmem:[#allocation5 + $0x1078] sm:$0xff]
    %v693 = vld [vmem:[#allocation5 + $0x1080] sm:$0xff]
    %v694 = vld [vmem:[#allocation5 + $0x1088] sm:$0xff]
    %v695 = vld [vmem:[#allocation5 + $0x1090] sm:$0xff]
    %v696 = vld [vmem:[#allocation5 + $0x1098] sm:$0xff]
    %v697 = vld [vmem:[#allocation5 + $0x10a0] sm:$0xff]
    %v698 = vld [vmem:[#allocation5 + $0x10a8] sm:$0xff]
    %v699 = vld [vmem:[#allocation5 + $0x10b0] sm:$0xff]
    %v700 = vld [vmem:[#allocation5 + $0x10b8] sm:$0xff]
    %v701 = vld [vmem:[#allocation5 + $0x10c0] sm:$0xff]
    %v702 = vld [vmem:[#allocation5 + $0x10c8] sm:$0xff]
    %v703 = vld [vmem:[#allocation5 + $0x10d0] sm:$0xff]
    %v704 = vld [vmem:[#allocation5 + $0x10d8] sm:$0xff]
    %v705 = vld [vmem:[#allocation5 + $0x10e0] sm:$0xff]
    %v706 = vld [vmem:[#allocation5 + $0x10e8] sm:$0xff]
    %v707 = vld [vmem:[#allocation5 + $0x10f0] sm:$0xff]
    %v708 = vld [vmem:[#allocation5 + $0x10f8] sm:$0xff]
    %v709 = vld [vmem:[#allocation5 + $0x1100] sm:$0xff]
    %v710 = vld [vmem:[#allocation5 + $0x1108] sm:$0xff]
    %v711 = vld [vmem:[#allocation5 + $0x1110] sm:$0xff]
    %v712 = vld [vmem:[#allocation5 + $0x1118] sm:$0xff]
    %v713 = vld [vmem:[#allocation5 + $0x1120] sm:$0xff]
    %v714 = vld [vmem:[#allocation5 + $0x1128] sm:$0xff]
    %v715 = vld [vmem:[#allocation5 + $0x1130] sm:$0xff]
    %v716 = vld [vmem:[#allocation5 + $0x1138] sm:$0xff]
    %v717 = vld [vmem:[#allocation5 + $0x1140] sm:$0xff]
    %v718 = vld [vmem:[#allocation5 + $0x1148] sm:$0xff]
    %v719 = vld [vmem:[#allocation5 + $0x1150] sm:$0xff]
    %v720 = vld [vmem:[#allocation5 + $0x1158] sm:$0xff]
    %v721 = vld [vmem:[#allocation5 + $0x1160] sm:$0xff]
    %v722 = vld [vmem:[#allocation5 + $0x1168] sm:$0xff]
    %v723 = vld [vmem:[#allocation5 + $0x1170] sm:$0xff]
    %v724 = vld [vmem:[#allocation5 + $0x1178] sm:$0xff]
    %v725 = vld [vmem:[#allocation5 + $0x1180] sm:$0xff]
    %v726 = vld [vmem:[#allocation5 + $0x1188] sm:$0xff]
    %v727 = vld [vmem:[#allocation5 + $0x1190] sm:$0xff]
    %v728 = vld [vmem:[#allocation5 + $0x1198] sm:$0xff]
    %v729 = vld [vmem:[#allocation5 + $0x11a0] sm:$0xff]
    %v730 = vld [vmem:[#allocation5 + $0x11a8] sm:$0xff]
    %v731 = vld [vmem:[#allocation5 + $0x11b0] sm:$0xff]
    %v732 = vld [vmem:[#allocation5 + $0x11b8] sm:$0xff]
    %v733 = vld [vmem:[#allocation5 + $0x11c0] sm:$0xff]
    %v734 = vld [vmem:[#allocation5 + $0x11c8] sm:$0xff]
    %v735 = vld [vmem:[#allocation5 + $0x11d0] sm:$0xff]
    %v736 = vld [vmem:[#allocation5 + $0x11d8] sm:$0xff]
    %v737 = vld [vmem:[#allocation5 + $0x11e0] sm:$0xff]
    %v738 = vld [vmem:[#allocation5 + $0x11e8] sm:$0xff]
    %v739 = vld [vmem:[#allocation5 + $0x11f0] sm:$0xff]
    %v740 = vld [vmem:[#allocation5 + $0x11f8] sm:$0xff]
    %v741 = vld [vmem:[#allocation5 + $0x1200] sm:$0xff]
    %v742 = vld [vmem:[#allocation5 + $0x1208] sm:$0xff]
    %v743 = vld [vmem:[#allocation5 + $0x1210] sm:$0xff]
    %v744 = vld [vmem:[#allocation5 + $0x1218] sm:$0xff]
    %v745 = vld [vmem:[#allocation5 + $0x1220] sm:$0xff]
    %v746 = vld [vmem:[#allocation5 + $0x1228] sm:$0xff]
    %v747 = vld [vmem:[#allocation5 + $0x1230] sm:$0xff]
    %v748 = vld [vmem:[#allocation5 + $0x1238] sm:$0xff]
    %v749 = vld [vmem:[#allocation5 + $0x1240] sm:$0xff]
    %v750 = vld [vmem:[#allocation5 + $0x1248] sm:$0xff]
    %v751 = vld [vmem:[#allocation5 + $0x1250] sm:$0xff]
    %v752 = vld [vmem:[#allocation5 + $0x1258] sm:$0xff]
    %v753 = vld [vmem:[#allocation5 + $0x1260] sm:$0xff]
    %v754 = vld [vmem:[#allocation5 + $0x1268] sm:$0xff]
    %v755 = vld [vmem:[#allocation5 + $0x1270] sm:$0xff]
    %v756 = vld [vmem:[#allocation5 + $0x1278] sm:$0xff]
    %v757 = vld [vmem:[#allocation5 + $0x1280] sm:$0xff]
    %v758 = vld [vmem:[#allocation5 + $0x1288] sm:$0xff]
    %v759 = vld [vmem:[#allocation5 + $0x1290] sm:$0xff]
    %v760 = vld [vmem:[#allocation5 + $0x1298] sm:$0xff]
    %v761 = vld [vmem:[#allocation5 + $0x12a0] sm:$0xff]
    %v762 = vld [vmem:[#allocation5 + $0x12a8] sm:$0xff]
    %v763 = vld [vmem:[#allocation5 + $0x12b0] sm:$0xff]
    %v764 = vld [vmem:[#allocation5 + $0x12b8] sm:$0xff]
    %v765 = vld [vmem:[#allocation5 + $0x12c0] sm:$0xff]
    %v766 = vld [vmem:[#allocation5 + $0x12c8] sm:$0xff]
    %v767 = vld [vmem:[#allocation5 + $0x12d0] sm:$0xff]
    %v768 = vld [vmem:[#allocation5 + $0x12d8] sm:$0xff]
    %v769 = vld [vmem:[#allocation5 + $0x12e0] sm:$0xff]
    %v770 = vld [vmem:[#allocation5 + $0x12e8] sm:$0xff]
    %v771 = vld [vmem:[#allocation5 + $0x12f0] sm:$0xff]
    %v772 = vld [vmem:[#allocation5 + $0x12f8] sm:$0xff]
    %v773 = vld [vmem:[#allocation5 + $0x1300] sm:$0xff]
    %v774 = vld [vmem:[#allocation5 + $0x1308] sm:$0xff]
    %v775 = vld [vmem:[#allocation5 + $0x1310] sm:$0xff]
    %v776 = vld [vmem:[#allocation5 + $0x1318] sm:$0xff]
    %v777 = vld [vmem:[#allocation5 + $0x1320] sm:$0xff]
    %v778 = vld [vmem:[#allocation5 + $0x1328] sm:$0xff]
    %v779 = vld [vmem:[#allocation5 + $0x1330] sm:$0xff]
    %v780 = vld [vmem:[#allocation5 + $0x1338] sm:$0xff]
    %v781 = vld [vmem:[#allocation5 + $0x1340] sm:$0xff]
    %v782 = vld [vmem:[#allocation5 + $0x1348] sm:$0xff]
    %v783 = vld [vmem:[#allocation5 + $0x1350] sm:$0xff]
    %v784 = vld [vmem:[#allocation5 + $0x1358] sm:$0xff]
    %v785 = vld [vmem:[#allocation5 + $0x1360] sm:$0xff]
    %v786 = vld [vmem:[#allocation5 + $0x1368] sm:$0xff]
    %v787 = vld [vmem:[#allocation5 + $0x1370] sm:$0xff]
    %v788 = vld [vmem:[#allocation5 + $0x1378] sm:$0xff]
    %v789 = vld [vmem:[#allocation5 + $0x1380] sm:$0xff]
    %v790 = vld [vmem:[#allocation5 + $0x1388] sm:$0xff]
    %v791 = vld [vmem:[#allocation5 + $0x1390] sm:$0xff]
    %v792 = vld [vmem:[#allocation5 + $0x1398] sm:$0xff]
    %v793 = vld [vmem:[#allocation5 + $0x13a0] sm:$0xff]
    %v794 = vld [vmem:[#allocation5 + $0x13a8] sm:$0xff]
    %v795 = vld [vmem:[#allocation5 + $0x13b0] sm:$0xff]
    %v796 = vld [vmem:[#allocation5 + $0x13b8] sm:$0xff]
    %v797 = vld [vmem:[#allocation5 + $0x13c0] sm:$0xff]
    %v798 = vld [vmem:[#allocation5 + $0x13c8] sm:$0xff]
    %v799 = vld [vmem:[#allocation5 + $0x13d0] sm:$0xff]
    %v800 = vld [vmem:[#allocation5 + $0x13d8] sm:$0xff]
    %v801 = vld [vmem:[#allocation5 + $0x13e0] sm:$0xff]
    %v802 = vld [vmem:[#allocation5 + $0x13e8] sm:$0xff]
    %v803 = vld [vmem:[#allocation5 + $0x13f0] sm:$0xff]
    %v804 = vld [vmem:[#allocation5 + $0x13f8] sm:$0xff]
    %v805 = vld [vmem:[#allocation5 + $0x1400] sm:$0xff]
    %v806 = vld [vmem:[#allocation5 + $0x1408] sm:$0xff]
    %v807 = vld [vmem:[#allocation5 + $0x1410] sm:$0xff]
    %v808 = vld [vmem:[#allocation5 + $0x1418] sm:$0xff]
    %v809 = vld [vmem:[#allocation5 + $0x1420] sm:$0xff]
    %v810 = vld [vmem:[#allocation5 + $0x1428] sm:$0xff]
    %v811 = vld [vmem:[#allocation5 + $0x1430] sm:$0xff]
    %v812 = vld [vmem:[#allocation5 + $0x1438] sm:$0xff]
    %v813 = vld [vmem:[#allocation5 + $0x1440] sm:$0xff]
    %v814 = vld [vmem:[#allocation5 + $0x1448] sm:$0xff]
    %v815 = vld [vmem:[#allocation5 + $0x1450] sm:$0xff]
    %v816 = vld [vmem:[#allocation5 + $0x1458] sm:$0xff]
    %v817 = vld [vmem:[#allocation5 + $0x1460] sm:$0xff]
    %v818 = vld [vmem:[#allocation5 + $0x1468] sm:$0xff]
    %v819 = vld [vmem:[#allocation5 + $0x1470] sm:$0xff]
    %v820 = vld [vmem:[#allocation5 + $0x1478] sm:$0xff]
    %v821 = vld [vmem:[#allocation5 + $0x1480] sm:$0xff]
    %v822 = vld [vmem:[#allocation5 + $0x1488] sm:$0xff]
    %v823 = vld [vmem:[#allocation5 + $0x1490] sm:$0xff]
    %v824 = vld [vmem:[#allocation5 + $0x1498] sm:$0xff]
    %v825 = vld [vmem:[#allocation5 + $0x14a0] sm:$0xff]
    %v826 = vld [vmem:[#allocation5 + $0x14a8] sm:$0xff]
    %v827 = vld [vmem:[#allocation5 + $0x14b0] sm:$0xff]
    %v828 = vld [vmem:[#allocation5 + $0x14b8] sm:$0xff]
    %v829 = vld [vmem:[#allocation5 + $0x14c0] sm:$0xff]
    %v830 = vld [vmem:[#allocation5 + $0x14c8] sm:$0xff]
    %v831 = vld [vmem:[#allocation5 + $0x14d0] sm:$0xff]
    %v832 = vld [vmem:[#allocation5 + $0x14d8] sm:$0xff]
    %v833 = vld [vmem:[#allocation5 + $0x14e0] sm:$0xff]
    %v834 = vld [vmem:[#allocation5 + $0x14e8] sm:$0xff]
    %v835 = vld [vmem:[#allocation5 + $0x14f0] sm:$0xff]
    %v836 = vld [vmem:[#allocation5 + $0x14f8] sm:$0xff]
    %v837 = vld [vmem:[#allocation5 + $0x1500] sm:$0xff]
    %v838 = vld [vmem:[#allocation5 + $0x1508] sm:$0xff]
    %v839 = vld [vmem:[#allocation5 + $0x1510] sm:$0xff]
    %v840 = vld [vmem:[#allocation5 + $0x1518] sm:$0xff]
    %v841 = vld [vmem:[#allocation5 + $0x1520] sm:$0xff]
    %v842 = vld [vmem:[#allocation5 + $0x1528] sm:$0xff]
    %v843 = vld [vmem:[#allocation5 + $0x1530] sm:$0xff]
    %v844 = vld [vmem:[#allocation5 + $0x1538] sm:$0xff]
    %v845 = vld [vmem:[#allocation5 + $0x1540] sm:$0xff]
    %v846 = vld [vmem:[#allocation5 + $0x1548] sm:$0xff]
    %v847 = vld [vmem:[#allocation5 + $0x1550] sm:$0xff]
    %v848 = vld [vmem:[#allocation5 + $0x1558] sm:$0xff]
    %v849 = vld [vmem:[#allocation5 + $0x1560] sm:$0xff]
    %v850 = vld [vmem:[#allocation5 + $0x1568] sm:$0xff]
    %v851 = vld [vmem:[#allocation5 + $0x1570] sm:$0xff]
    %v852 = vld [vmem:[#allocation5 + $0x1578] sm:$0xff]
    %v853 = vld [vmem:[#allocation5 + $0x1580] sm:$0xff]
    %v854 = vld [vmem:[#allocation5 + $0x1588] sm:$0xff]
    %v855 = vld [vmem:[#allocation5 + $0x1590] sm:$0xff]
    %v856 = vld [vmem:[#allocation5 + $0x1598] sm:$0xff]
    %v857 = vld [vmem:[#allocation5 + $0x15a0] sm:$0xff]
    %v858 = vld [vmem:[#allocation5 + $0x15a8] sm:$0xff]
    %v859 = vld [vmem:[#allocation5 + $0x15b0] sm:$0xff]
    %v860 = vld [vmem:[#allocation5 + $0x15b8] sm:$0xff]
    %v861 = vld [vmem:[#allocation5 + $0x15c0] sm:$0xff]
    %v862 = vld [vmem:[#allocation5 + $0x15c8] sm:$0xff]
    %v863 = vld [vmem:[#allocation5 + $0x15d0] sm:$0xff]
    %v864 = vld [vmem:[#allocation5 + $0x15d8] sm:$0xff]
    %v865 = vld [vmem:[#allocation5 + $0x15e0] sm:$0xff]
    %v866 = vld [vmem:[#allocation5 + $0x15e8] sm:$0xff]
    %v867 = vld [vmem:[#allocation5 + $0x15f0] sm:$0xff]
    %v868 = vld [vmem:[#allocation5 + $0x15f8] sm:$0xff]
    %v869 = vld [vmem:[#allocation5 + $0x1600] sm:$0xff]
    %v870 = vld [vmem:[#allocation5 + $0x1608] sm:$0xff]
    %v871 = vld [vmem:[#allocation5 + $0x1610] sm:$0xff]
    %v872 = vld [vmem:[#allocation5 + $0x1618] sm:$0xff]
    %v873 = vld [vmem:[#allocation5 + $0x1620] sm:$0xff]
    %v874 = vld [vmem:[#allocation5 + $0x1628] sm:$0xff]
    %v875 = vld [vmem:[#allocation5 + $0x1630] sm:$0xff]
    %v876 = vld [vmem:[#allocation5 + $0x1638] sm:$0xff]
    %v877 = vld [vmem:[#allocation5 + $0x1640] sm:$0xff]
    %v878 = vld [vmem:[#allocation5 + $0x1648] sm:$0xff]
    %v879 = vld [vmem:[#allocation5 + $0x1650] sm:$0xff]
    %v880 = vld [vmem:[#allocation5 + $0x1658] sm:$0xff]
    %v881 = vld [vmem:[#allocation5 + $0x1660] sm:$0xff]
    %v882 = vld [vmem:[#allocation5 + $0x1668] sm:$0xff]
    %v883 = vld [vmem:[#allocation5 + $0x1670] sm:$0xff]
    %v884 = vld [vmem:[#allocation5 + $0x1678] sm:$0xff]
    %v885 = vld [vmem:[#allocation5 + $0x1680] sm:$0xff]
    %v886 = vld [vmem:[#allocation5 + $0x1688] sm:$0xff]
    %v887 = vld [vmem:[#allocation5 + $0x1690] sm:$0xff]
    %v888 = vld [vmem:[#allocation5 + $0x1698] sm:$0xff]
    %v889 = vld [vmem:[#allocation5 + $0x16a0] sm:$0xff]
    %v890 = vld [vmem:[#allocation5 + $0x16a8] sm:$0xff]
    %v891 = vld [vmem:[#allocation5 + $0x16b0] sm:$0xff]
    %v892 = vld [vmem:[#allocation5 + $0x16b8] sm:$0xff]
    %v893 = vld [vmem:[#allocation5 + $0x16c0] sm:$0xff]
    %v894 = vld [vmem:[#allocation5 + $0x16c8] sm:$0xff]
    %v895 = vld [vmem:[#allocation5 + $0x16d0] sm:$0xff]
    %v896 = vld [vmem:[#allocation5 + $0x16d8] sm:$0xff]
    %v897 = vld [vmem:[#allocation5 + $0x16e0] sm:$0xff]
    %v898 = vld [vmem:[#allocation5 + $0x16e8] sm:$0xff]
    %v899 = vld [vmem:[#allocation5 + $0x16f0] sm:$0xff]
    %v900 = vld [vmem:[#allocation5 + $0x16f8] sm:$0xff]
    %v901 = vld [vmem:[#allocation5 + $0x1700] sm:$0xff]
    %v902 = vld [vmem:[#allocation5 + $0x1708] sm:$0xff]
    %v903 = vld [vmem:[#allocation5 + $0x1710] sm:$0xff]
    %v904 = vld [vmem:[#allocation5 + $0x1718] sm:$0xff]
    %v905 = vld [vmem:[#allocation5 + $0x1720] sm:$0xff]
    %v906 = vld [vmem:[#allocation5 + $0x1728] sm:$0xff]
    %v907 = vld [vmem:[#allocation5 + $0x1730] sm:$0xff]
    %v908 = vld [vmem:[#allocation5 + $0x1738] sm:$0xff]
    %v909 = vld [vmem:[#allocation5 + $0x1740] sm:$0xff]
    %v910 = vld [vmem:[#allocation5 + $0x1748] sm:$0xff]
    %v911 = vld [vmem:[#allocation5 + $0x1750] sm:$0xff]
    %v912 = vld [vmem:[#allocation5 + $0x1758] sm:$0xff]
    %v913 = vld [vmem:[#allocation5 + $0x1760] sm:$0xff]
    %v914 = vld [vmem:[#allocation5 + $0x1768] sm:$0xff]
    %v915 = vld [vmem:[#allocation5 + $0x1770] sm:$0xff]
    %v916 = vld [vmem:[#allocation5 + $0x1778] sm:$0xff]
    %v917 = vld [vmem:[#allocation5 + $0x1780] sm:$0xff]
    %v918 = vld [vmem:[#allocation5 + $0x1788] sm:$0xff]
    %v919 = vld [vmem:[#allocation5 + $0x1790] sm:$0xff]
    %v920 = vld [vmem:[#allocation5 + $0x1798] sm:$0xff]
    %v921 = vld [vmem:[#allocation5 + $0x17a0] sm:$0xff]
    %v922 = vld [vmem:[#allocation5 + $0x17a8] sm:$0xff]
    %v923 = vld [vmem:[#allocation5 + $0x17b0] sm:$0xff]
    %v924 = vld [vmem:[#allocation5 + $0x17b8] sm:$0xff]
    %v925 = vld [vmem:[#allocation5 + $0x17c0] sm:$0xff]
    %v926 = vld [vmem:[#allocation5 + $0x17c8] sm:$0xff]
    %v927 = vld [vmem:[#allocation5 + $0x17d0] sm:$0xff]
    %v928 = vld [vmem:[#allocation5 + $0x17d8] sm:$0xff]
    %v929 = vld [vmem:[#allocation5 + $0x17e0] sm:$0xff]
    %v930 = vld [vmem:[#allocation5 + $0x17e8] sm:$0xff]
    %v931 = vld [vmem:[#allocation5 + $0x17f0] sm:$0xff]
    %v932 = vld [vmem:[#allocation5 + $0x17f8] sm:$0xff]
    %v933 = vld [vmem:[#allocation5 + $0x1800] sm:$0xff]
    %v934 = vld [vmem:[#allocation5 + $0x1808] sm:$0xff]
    %v935 = vld [vmem:[#allocation5 + $0x1810] sm:$0xff]
    %v936 = vld [vmem:[#allocation5 + $0x1818] sm:$0xff]
    %v937 = vld [vmem:[#allocation5 + $0x1820] sm:$0xff]
    %v938 = vld [vmem:[#allocation5 + $0x1828] sm:$0xff]
    %v939 = vld [vmem:[#allocation5 + $0x1830] sm:$0xff]
    %v940 = vld [vmem:[#allocation5 + $0x1838] sm:$0xff]
    %v941 = vld [vmem:[#allocation5 + $0x1840] sm:$0xff]
    %v942 = vld [vmem:[#allocation5 + $0x1848] sm:$0xff]
    %v943 = vld [vmem:[#allocation5 + $0x1850] sm:$0xff]
    %v944 = vld [vmem:[#allocation5 + $0x1858] sm:$0xff]
    %v945 = vld [vmem:[#allocation5 + $0x1860] sm:$0xff]
    %v946 = vld [vmem:[#allocation5 + $0x1868] sm:$0xff]
    %v947 = vld [vmem:[#allocation5 + $0x1870] sm:$0xff]
    %v948 = vld [vmem:[#allocation5 + $0x1878] sm:$0xff]
    %v949 = vld [vmem:[#allocation5 + $0x1880] sm:$0xff]
    %v950 = vld [vmem:[#allocation5 + $0x1888] sm:$0xff]
    %v951 = vld [vmem:[#allocation5 + $0x1890] sm:$0xff]
    %v952 = vld [vmem:[#allocation5 + $0x1898] sm:$0xff]
    %v953 = vld [vmem:[#allocation5 + $0x18a0] sm:$0xff]
    %v954 = vld [vmem:[#allocation5 + $0x18a8] sm:$0xff]
    %v955 = vld [vmem:[#allocation5 + $0x18b0] sm:$0xff]
    %v956 = vld [vmem:[#allocation5 + $0x18b8] sm:$0xff]
    %v957 = vld [vmem:[#allocation5 + $0x18c0] sm:$0xff]
    %v958 = vld [vmem:[#allocation5 + $0x18c8] sm:$0xff]
    %v959 = vld [vmem:[#allocation5 + $0x18d0] sm:$0xff]
    %v960 = vld [vmem:[#allocation5 + $0x18d8] sm:$0xff]
    %v961 = vld [vmem:[#allocation5 + $0x18e0] sm:$0xff]
    %v962 = vld [vmem:[#allocation5 + $0x18e8] sm:$0xff]
    %v963 = vld [vmem:[#allocation5 + $0x18f0] sm:$0xff]
    %v964 = vld [vmem:[#allocation5 + $0x18f8] sm:$0xff]
    %v965 = vld [vmem:[#allocation5 + $0x1900] sm:$0xff]
    %v966 = vld [vmem:[#allocation5 + $0x1908] sm:$0xff]
    %v967 = vld [vmem:[#allocation5 + $0x1910] sm:$0xff]
    %v968 = vld [vmem:[#allocation5 + $0x1918] sm:$0xff]
    %v969 = vld [vmem:[#allocation5 + $0x1920] sm:$0xff]
    %v970 = vld [vmem:[#allocation5 + $0x1928] sm:$0xff]
    %v971 = vld [vmem:[#allocation5 + $0x1930] sm:$0xff]
    %v972 = vld [vmem:[#allocation5 + $0x1938] sm:$0xff]
    %v973 = vld [vmem:[#allocation5 + $0x1940] sm:$0xff]
    %v974 = vld [vmem:[#allocation5 + $0x1948] sm:$0xff]
    %v975 = vld [vmem:[#allocation5 + $0x1950] sm:$0xff]
    %v976 = vld [vmem:[#allocation5 + $0x1958] sm:$0xff]
    %v977 = vld [vmem:[#allocation5 + $0x1960] sm:$0xff]
    %v978 = vld [vmem:[#allocation5 + $0x1968] sm:$0xff]
    %v979 = vld [vmem:[#allocation5 + $0x1970] sm:$0xff]
    %v980 = vld [vmem:[#allocation5 + $0x1978] sm:$0xff]
    %v981 = vld [vmem:[#allocation5 + $0x1980] sm:$0xff]
    %v982 = vld [vmem:[#allocation5 + $0x1988] sm:$0xff]
    %v983 = vld [vmem:[#allocation5 + $0x1990] sm:$0xff]
    %v984 = vld [vmem:[#allocation5 + $0x1998] sm:$0xff]
    %v985 = vld [vmem:[#allocation5 + $0x19a0] sm:$0xff]
    %v986 = vld [vmem:[#allocation5 + $0x19a8] sm:$0xff]
    %v987 = vld [vmem:[#allocation5 + $0x19b0] sm:$0xff]
    %v988 = vld [vmem:[#allocation5 + $0x19b8] sm:$0xff]
    %v989 = vld [vmem:[#allocation5 + $0x19c0] sm:$0xff]
    %v990 = vld [vmem:[#allocation5 + $0x19c8] sm:$0xff]
    %v991 = vld [vmem:[#allocation5 + $0x19d0] sm:$0xff]
    %v992 = vld [vmem:[#allocation5 + $0x19d8] sm:$0xff]
    %v993 = vld [vmem:[#allocation5 + $0x19e0] sm:$0xff]
    %v994 = vld [vmem:[#allocation5 + $0x19e8] sm:$0xff]
    %v995 = vld [vmem:[#allocation5 + $0x19f0] sm:$0xff]
    %v996 = vld [vmem:[#allocation5 + $0x19f8] sm:$0xff]
    %v997 = vld [vmem:[#allocation5 + $0x1a00] sm:$0xff]
    %v998 = vld [vmem:[#allocation5 + $0x1a08] sm:$0xff]
    %v999 = vld [vmem:[#allocation5 + $0x1a10] sm:$0xff]
    %v1000 = vld [vmem:[#allocation5 + $0x1a18] sm:$0xff]
    %v1001 = vld [vmem:[#allocation5 + $0x1a20] sm:$0xff]
    %v1002 = vld [vmem:[#allocation5 + $0x1a28] sm:$0xff]
    %v1003 = vld [vmem:[#allocation5 + $0x1a30] sm:$0xff]
    %v1004 = vld [vmem:[#allocation5 + $0x1a38] sm:$0xff]
    %v1005 = vld [vmem:[#allocation5 + $0x1a40] sm:$0xff]
    %v1006 = vld [vmem:[#allocation5 + $0x1a48] sm:$0xff]
    %v1007 = vld [vmem:[#allocation5 + $0x1a50] sm:$0xff]
    %v1008 = vld [vmem:[#allocation5 + $0x1a58] sm:$0xff]
    %v1009 = vld [vmem:[#allocation5 + $0x1a60] sm:$0xff]
    %v1010 = vld [vmem:[#allocation5 + $0x1a68] sm:$0xff]
    %v1011 = vld [vmem:[#allocation5 + $0x1a70] sm:$0xff]
    %v1012 = vld [vmem:[#allocation5 + $0x1a78] sm:$0xff]
    %v1013 = vld [vmem:[#allocation5 + $0x1a80] sm:$0xff]
    %v1014 = vld [vmem:[#allocation5 + $0x1a88] sm:$0xff]
    %v1015 = vld [vmem:[#allocation5 + $0x1a90] sm:$0xff]
    %v1016 = vld [vmem:[#allocation5 + $0x1a98] sm:$0xff]
    %v1017 = vld [vmem:[#allocation5 + $0x1aa0] sm:$0xff]
    %v1018 = vld [vmem:[#allocation5 + $0x1aa8] sm:$0xff]
    %v1019 = vld [vmem:[#allocation5 + $0x1ab0] sm:$0xff]
    %v1020 = vld [vmem:[#allocation5 + $0x1ab8] sm:$0xff]
    %v1021 = vld [vmem:[#allocation5 + $0x1ac0] sm:$0xff]
    %v1022 = vld [vmem:[#allocation5 + $0x1ac8] sm:$0xff]
    %v1023 = vld [vmem:[#allocation5 + $0x1ad0] sm:$0xff]
    %v1024 = vld [vmem:[#allocation5 + $0x1ad8] sm:$0xff]
    %v1025 = vld [vmem:[#allocation5 + $0x1ae0] sm:$0xff]
    %v1026 = vld [vmem:[#allocation5 + $0x1ae8] sm:$0xff]
    %v1027 = vld [vmem:[#allocation5 + $0x1af0] sm:$0xff]
    %v1028 = vld [vmem:[#allocation5 + $0x1af8] sm:$0xff]
    %v1029 = vld [vmem:[#allocation5 + $0x1b00] sm:$0xff]
    %v1030 = vld [vmem:[#allocation5 + $0x1b08] sm:$0xff]
    %v1031 = vld [vmem:[#allocation5 + $0x1b10] sm:$0xff]
    %v1032 = vld [vmem:[#allocation5 + $0x1b18] sm:$0xff]
    %v1033 = vld [vmem:[#allocation5 + $0x1b20] sm:$0xff]
    %v1034 = vld [vmem:[#allocation5 + $0x1b28] sm:$0xff]
    %v1035 = vld [vmem:[#allocation5 + $0x1b30] sm:$0xff]
    %v1036 = vld [vmem:[#allocation5 + $0x1b38] sm:$0xff]
    %v1037 = vld [vmem:[#allocation5 + $0x1b40] sm:$0xff]
    %v1038 = vld [vmem:[#allocation5 + $0x1b48] sm:$0xff]
    %v1039 = vld [vmem:[#allocation5 + $0x1b50] sm:$0xff]
    %v1040 = vld [vmem:[#allocation5 + $0x1b58] sm:$0xff]
    %v1041 = vld [vmem:[#allocation5 + $0x1b60] sm:$0xff]
    %v1042 = vld [vmem:[#allocation5 + $0x1b68] sm:$0xff]
    %v1043 = vld [vmem:[#allocation5 + $0x1b70] sm:$0xff]
    %v1044 = vld [vmem:[#allocation5 + $0x1b78] sm:$0xff]
    %v1045 = vld [vmem:[#allocation5 + $0x1b80] sm:$0xff]
    %v1046 = vld [vmem:[#allocation5 + $0x1b88] sm:$0xff]
    %v1047 = vld [vmem:[#allocation5 + $0x1b90] sm:$0xff]
    %v1048 = vld [vmem:[#allocation5 + $0x1b98] sm:$0xff]
    %v1049 = vld [vmem:[#allocation5 + $0x1ba0] sm:$0xff]
    %v1050 = vld [vmem:[#allocation5 + $0x1ba8] sm:$0xff]
    %v1051 = vld [vmem:[#allocation5 + $0x1bb0] sm:$0xff]
    %v1052 = vld [vmem:[#allocation5 + $0x1bb8] sm:$0xff]
    %v1053 = vld [vmem:[#allocation5 + $0x1bc0] sm:$0xff]
    %v1054 = vld [vmem:[#allocation5 + $0x1bc8] sm:$0xff]
    %v1055 = vld [vmem:[#allocation5 + $0x1bd0] sm:$0xff]
    %v1056 = vld [vmem:[#allocation5 + $0x1bd8] sm:$0xff]
    %v1057 = vld [vmem:[#allocation5 + $0x1be0] sm:$0xff]
    %v1058 = vld [vmem:[#allocation5 + $0x1be8] sm:$0xff]
    %v1059 = vld [vmem:[#allocation5 + $0x1bf0] sm:$0xff]
    %v1060 = vld [vmem:[#allocation5 + $0x1bf8] sm:$0xff]
    %v1061 = vld [vmem:[#allocation5 + $0x1c00] sm:$0xff]
    %v1062 = vld [vmem:[#allocation5 + $0x1c08] sm:$0xff]
    %v1063 = vld [vmem:[#allocation5 + $0x1c10] sm:$0xff]
    %v1064 = vld [vmem:[#allocation5 + $0x1c18] sm:$0xff]
    %v1065 = vld [vmem:[#allocation5 + $0x1c20] sm:$0xff]
    %v1066 = vld [vmem:[#allocation5 + $0x1c28] sm:$0xff]
    %v1067 = vld [vmem:[#allocation5 + $0x1c30] sm:$0xff]
    %v1068 = vld [vmem:[#allocation5 + $0x1c38] sm:$0xff]
    %v1069 = vld [vmem:[#allocation5 + $0x1c40] sm:$0xff]
    %v1070 = vld [vmem:[#allocation5 + $0x1c48] sm:$0xff]
    %v1071 = vld [vmem:[#allocation5 + $0x1c50] sm:$0xff]
    %v1072 = vld [vmem:[#allocation5 + $0x1c58] sm:$0xff]
    %v1073 = vld [vmem:[#allocation5 + $0x1c60] sm:$0xff]
    %v1074 = vld [vmem:[#allocation5 + $0x1c68] sm:$0xff]
    %v1075 = vld [vmem:[#allocation5 + $0x1c70] sm:$0xff]
    %v1076 = vld [vmem:[#allocation5 + $0x1c78] sm:$0xff]
    %v1077 = vld [vmem:[#allocation5 + $0x1c80] sm:$0xff]
    %v1078 = vld [vmem:[#allocation5 + $0x1c88] sm:$0xff]
    %v1079 = vld [vmem:[#allocation5 + $0x1c90] sm:$0xff]
    %v1080 = vld [vmem:[#allocation5 + $0x1c98] sm:$0xff]
    %v1081 = vld [vmem:[#allocation5 + $0x1ca0] sm:$0xff]
    %v1082 = vld [vmem:[#allocation5 + $0x1ca8] sm:$0xff]
    %v1083 = vld [vmem:[#allocation5 + $0x1cb0] sm:$0xff]
    %v1084 = vld [vmem:[#allocation5 + $0x1cb8] sm:$0xff]
    %v1085 = vld [vmem:[#allocation5 + $0x1cc0] sm:$0xff]
    %v1086 = vld [vmem:[#allocation5 + $0x1cc8] sm:$0xff]
    %v1087 = vld [vmem:[#allocation5 + $0x1cd0] sm:$0xff]
    %v1088 = vld [vmem:[#allocation5 + $0x1cd8] sm:$0xff]
    %v1089 = vld [vmem:[#allocation5 + $0x1ce0] sm:$0xff]
    %v1090 = vld [vmem:[#allocation5 + $0x1ce8] sm:$0xff]
    %v1091 = vld [vmem:[#allocation5 + $0x1cf0] sm:$0xff]
    %v1092 = vld [vmem:[#allocation5 + $0x1cf8] sm:$0xff]
    %v1093 = vld [vmem:[#allocation5 + $0x1d00] sm:$0xff]
    %v1094 = vld [vmem:[#allocation5 + $0x1d08] sm:$0xff]
    %v1095 = vld [vmem:[#allocation5 + $0x1d10] sm:$0xff]
    %v1096 = vld [vmem:[#allocation5 + $0x1d18] sm:$0xff]
    %v1097 = vld [vmem:[#allocation5 + $0x1d20] sm:$0xff]
    %v1098 = vld [vmem:[#allocation5 + $0x1d28] sm:$0xff]
    %v1099 = vld [vmem:[#allocation5 + $0x1d30] sm:$0xff]
    %v1100 = vld [vmem:[#allocation5 + $0x1d38] sm:$0xff]
    %v1101 = vld [vmem:[#allocation5 + $0x1d40] sm:$0xff]
    %v1102 = vld [vmem:[#allocation5 + $0x1d48] sm:$0xff]
    %v1103 = vld [vmem:[#allocation5 + $0x1d50] sm:$0xff]
    %v1104 = vld [vmem:[#allocation5 + $0x1d58] sm:$0xff]
    %v1105 = vld [vmem:[#allocation5 + $0x1d60] sm:$0xff]
    %v1106 = vld [vmem:[#allocation5 + $0x1d68] sm:$0xff]
    %v1107 = vld [vmem:[#allocation5 + $0x1d70] sm:$0xff]
    %v1108 = vld [vmem:[#allocation5 + $0x1d78] sm:$0xff]
    %v1109 = vld [vmem:[#allocation5 + $0x1d80] sm:$0xff]
    %v1110 = vld [vmem:[#allocation5 + $0x1d88] sm:$0xff]
    %v1111 = vld [vmem:[#allocation5 + $0x1d90] sm:$0xff]
    %v1112 = vld [vmem:[#allocation5 + $0x1d98] sm:$0xff]
    %v1113 = vld [vmem:[#allocation5 + $0x1da0] sm:$0xff]
    %v1114 = vld [vmem:[#allocation5 + $0x1da8] sm:$0xff]
    %v1115 = vld [vmem:[#allocation5 + $0x1db0] sm:$0xff]
    %v1116 = vld [vmem:[#allocation5 + $0x1db8] sm:$0xff]
    %v1117 = vld [vmem:[#allocation5 + $0x1dc0] sm:$0xff]
    %v1118 = vld [vmem:[#allocation5 + $0x1dc8] sm:$0xff]
    %v1119 = vld [vmem:[#allocation5 + $0x1dd0] sm:$0xff]
    %v1120 = vld [vmem:[#allocation5 + $0x1dd8] sm:$0xff]
    %v1121 = vld [vmem:[#allocation5 + $0x1de0] sm:$0xff]
    %v1122 = vld [vmem:[#allocation5 + $0x1de8] sm:$0xff]
    %v1123 = vld [vmem:[#allocation5 + $0x1df0] sm:$0xff]
    %v1124 = vld [vmem:[#allocation5 + $0x1df8] sm:$0xff]
    %v1125 = vld [vmem:[#allocation5 + $0x1e00] sm:$0xff]
    %v1126 = vld [vmem:[#allocation5 + $0x1e08] sm:$0xff]
    %v1127 = vld [vmem:[#allocation5 + $0x1e10] sm:$0xff]
    %v1128 = vld [vmem:[#allocation5 + $0x1e18] sm:$0xff]
    %v1129 = vld [vmem:[#allocation5 + $0x1e20] sm:$0xff]
    %v1130 = vld [vmem:[#allocation5 + $0x1e28] sm:$0xff]
    %v1131 = vld [vmem:[#allocation5 + $0x1e30] sm:$0xff]
    %v1132 = vld [vmem:[#allocation5 + $0x1e38] sm:$0xff]
    %v1133 = vld [vmem:[#allocation5 + $0x1e40] sm:$0xff]
    %v1134 = vld [vmem:[#allocation5 + $0x1e48] sm:$0xff]
    %v1135 = vld [vmem:[#allocation5 + $0x1e50] sm:$0xff]
    %v1136 = vld [vmem:[#allocation5 + $0x1e58] sm:$0xff]
    %v1137 = vld [vmem:[#allocation5 + $0x1e60] sm:$0xff]
    %v1138 = vld [vmem:[#allocation5 + $0x1e68] sm:$0xff]
    %v1139 = vld [vmem:[#allocation5 + $0x1e70] sm:$0xff]
    %v1140 = vld [vmem:[#allocation5 + $0x1e78] sm:$0xff]
    %v1141 = vld [vmem:[#allocation5 + $0x1e80] sm:$0xff]
    %v1142 = vld [vmem:[#allocation5 + $0x1e88] sm:$0xff]
    %v1143 = vld [vmem:[#allocation5 + $0x1e90] sm:$0xff]
    %v1144 = vld [vmem:[#allocation5 + $0x1e98] sm:$0xff]
    %v1145 = vld [vmem:[#allocation5 + $0x1ea0] sm:$0xff]
    %v1146 = vld [vmem:[#allocation5 + $0x1ea8] sm:$0xff]
    %v1147 = vld [vmem:[#allocation5 + $0x1eb0] sm:$0xff]
    %v1148 = vld [vmem:[#allocation5 + $0x1eb8] sm:$0xff]
    %v1149 = vld [vmem:[#allocation5 + $0x1ec0] sm:$0xff]
    %v1150 = vld [vmem:[#allocation5 + $0x1ec8] sm:$0xff]
    %v1151 = vld [vmem:[#allocation5 + $0x1ed0] sm:$0xff]
    %v1152 = vld [vmem:[#allocation5 + $0x1ed8] sm:$0xff]
    %v1153 = vld [vmem:[#allocation5 + $0x1ee0] sm:$0xff]
    %v1154 = vld [vmem:[#allocation5 + $0x1ee8] sm:$0xff]
    %v1155 = vld [vmem:[#allocation5 + $0x1ef0] sm:$0xff]
    %v1156 = vld [vmem:[#allocation5 + $0x1ef8] sm:$0xff]
    %v1157 = vld [vmem:[#allocation5 + $0x1f00] sm:$0xff]
    %v1158 = vld [vmem:[#allocation5 + $0x1f08] sm:$0xff]
    %v1159 = vld [vmem:[#allocation5 + $0x1f10] sm:$0xff]
    %v1160 = vld [vmem:[#allocation5 + $0x1f18] sm:$0xff]
    %v1161 = vld [vmem:[#allocation5 + $0x1f20] sm:$0xff]
    %v1162 = vld [vmem:[#allocation5 + $0x1f28] sm:$0xff]
    %v1163 = vld [vmem:[#allocation5 + $0x1f30] sm:$0xff]
    %v1164 = vld [vmem:[#allocation5 + $0x1f38] sm:$0xff]
    %v1165 = vld [vmem:[#allocation5 + $0x1f40] sm:$0xff]
    %v1166 = vld [vmem:[#allocation5 + $0x1f48] sm:$0xff]
    %v1167 = vld [vmem:[#allocation5 + $0x1f50] sm:$0xff]
    %v1168 = vld [vmem:[#allocation5 + $0x1f58] sm:$0xff]
    %v1169 = vld [vmem:[#allocation5 + $0x1f60] sm:$0xff]
    %v1170 = vld [vmem:[#allocation5 + $0x1f68] sm:$0xff]
    %v1171 = vld [vmem:[#allocation5 + $0x1f70] sm:$0xff]
    %v1172 = vld [vmem:[#allocation5 + $0x1f78] sm:$0xff]
    %v1173 = vld [vmem:[#allocation5 + $0x1f80] sm:$0xff]
    %v1174 = vld [vmem:[#allocation5 + $0x1f88] sm:$0xff]
    %v1175 = vld [vmem:[#allocation5 + $0x1f90] sm:$0xff]
    %v1176 = vld [vmem:[#allocation5 + $0x1f98] sm:$0xff]
    %v1177 = vld [vmem:[#allocation5 + $0x1fa0] sm:$0xff]
    %v1178 = vld [vmem:[#allocation5 + $0x1fa8] sm:$0xff]
    %v1179 = vld [vmem:[#allocation5 + $0x1fb0] sm:$0xff]
    %v1180 = vld [vmem:[#allocation5 + $0x1fb8] sm:$0xff]
    %v1181 = vld [vmem:[#allocation5 + $0x1fc0] sm:$0xff]
    %v1182 = vld [vmem:[#allocation5 + $0x1fc8] sm:$0xff]
    %v1183 = vld [vmem:[#allocation5 + $0x1fd0] sm:$0xff]
    %v1184 = vld [vmem:[#allocation5 + $0x1fd8] sm:$0xff]
    %v1185 = vld [vmem:[#allocation5 + $0x1fe0] sm:$0xff]
    %v1186 = vld [vmem:[#allocation5 + $0x1fe8] sm:$0xff]
    %v1187 = vld [vmem:[#allocation5 + $0x1ff0] sm:$0xff]
    %v1188 = vld [vmem:[#allocation5 + $0x1ff8] sm:$0xff]
    %v1189 = vld [vmem:[#allocation5 + $0x2000] sm:$0xff]
    %v1190 = vld [vmem:[#allocation5 + $0x2008] sm:$0xff]
    %v1191 = vld [vmem:[#allocation5 + $0x2010] sm:$0xff]
    %v1192 = vld [vmem:[#allocation5 + $0x2018] sm:$0xff]
    %v1193 = vld [vmem:[#allocation5 + $0x2020] sm:$0xff]
    %v1194 = vld [vmem:[#allocation5 + $0x2028] sm:$0xff]
    %v1195 = vld [vmem:[#allocation5 + $0x2030] sm:$0xff]
    %v1196 = vld [vmem:[#allocation5 + $0x2038] sm:$0xff]
    %v1197 = vld [vmem:[#allocation5 + $0x2040] sm:$0xff]
    %v1198 = vld [vmem:[#allocation5 + $0x2048] sm:$0xff]
    %v1199 = vld [vmem:[#allocation5 + $0x2050] sm:$0xff]
    %v1200 = vld [vmem:[#allocation5 + $0x2058] sm:$0xff]
    %v1201 = vld [vmem:[#allocation5 + $0x2060] sm:$0xff]
    %v1202 = vld [vmem:[#allocation5 + $0x2068] sm:$0xff]
    %v1203 = vld [vmem:[#allocation5 + $0x2070] sm:$0xff]
    %v1204 = vld [vmem:[#allocation5 + $0x2078] sm:$0xff]
    %v1205 = vld [vmem:[#allocation5 + $0x2080] sm:$0xff]
    %v1206 = vld [vmem:[#allocation5 + $0x2088] sm:$0xff]
    %v1207 = vld [vmem:[#allocation5 + $0x2090] sm:$0xff]
    %v1208 = vld [vmem:[#allocation5 + $0x2098] sm:$0xff]
    %v1209 = vld [vmem:[#allocation5 + $0x20a0] sm:$0xff]
    %v1210 = vld [vmem:[#allocation5 + $0x20a8] sm:$0xff]
    %v1211 = vld [vmem:[#allocation5 + $0x20b0] sm:$0xff]
    %v1212 = vld [vmem:[#allocation5 + $0x20b8] sm:$0xff]
    %v1213 = vld [vmem:[#allocation5 + $0x20c0] sm:$0xff]
    %v1214 = vld [vmem:[#allocation5 + $0x20c8] sm:$0xff]
    %v1215 = vld [vmem:[#allocation5 + $0x20d0] sm:$0xff]
    %v1216 = vld [vmem:[#allocation5 + $0x20d8] sm:$0xff]
    %v1217 = vld [vmem:[#allocation5 + $0x20e0] sm:$0xff]
    %v1218 = vld [vmem:[#allocation5 + $0x20e8] sm:$0xff]
    %v1219 = vld [vmem:[#allocation5 + $0x20f0] sm:$0xff]
    %v1220 = vld [vmem:[#allocation5 + $0x20f8] sm:$0xff]
    %v1221 = vld [vmem:[#allocation5 + $0x2100] sm:$0xff]
    %v1222 = vld [vmem:[#allocation5 + $0x2108] sm:$0xff]
    %v1223 = vld [vmem:[#allocation5 + $0x2110] sm:$0xff]
    %v1224 = vld [vmem:[#allocation5 + $0x2118] sm:$0xff]
    %v1225 = vld [vmem:[#allocation5 + $0x2120] sm:$0xff]
    %v1226 = vld [vmem:[#allocation5 + $0x2128] sm:$0xff]
    %v1227 = vld [vmem:[#allocation5 + $0x2130] sm:$0xff]
    %v1228 = vld [vmem:[#allocation5 + $0x2138] sm:$0xff]
    %v1229 = vld [vmem:[#allocation5 + $0x2140] sm:$0xff]
    %v1230 = vld [vmem:[#allocation5 + $0x2148] sm:$0xff]
    %v1231 = vld [vmem:[#allocation5 + $0x2150] sm:$0xff]
    %v1232 = vld [vmem:[#allocation5 + $0x2158] sm:$0xff]
    %v1233 = vld [vmem:[#allocation5 + $0x2160] sm:$0xff]
    %v1234 = vld [vmem:[#allocation5 + $0x2168] sm:$0xff]
    %v1235 = vld [vmem:[#allocation5 + $0x2170] sm:$0xff]
    %v1236 = vld [vmem:[#allocation5 + $0x2178] sm:$0xff]
    %v1237 = vld [vmem:[#allocation5 + $0x2180] sm:$0xff]
    %v1238 = vld [vmem:[#allocation5 + $0x2188] sm:$0xff]
    %v1239 = vld [vmem:[#allocation5 + $0x2190] sm:$0xff]
    %v1240 = vld [vmem:[#allocation5 + $0x2198] sm:$0xff]
    %v1241 = vld [vmem:[#allocation5 + $0x21a0] sm:$0xff]
    %v1242 = vld [vmem:[#allocation5 + $0x21a8] sm:$0xff]
    %v1243 = vld [vmem:[#allocation5 + $0x21b0] sm:$0xff]
    %v1244 = vld [vmem:[#allocation5 + $0x21b8] sm:$0xff]
    %v1245 = vld [vmem:[#allocation5 + $0x21c0] sm:$0xff]
    %v1246 = vld [vmem:[#allocation5 + $0x21c8] sm:$0xff]
    %v1247 = vld [vmem:[#allocation5 + $0x21d0] sm:$0xff]
    %v1248 = vld [vmem:[#allocation5 + $0x21d8] sm:$0xff]
    %v1249 = vld [vmem:[#allocation5 + $0x21e0] sm:$0xff]
    %v1250 = vld [vmem:[#allocation5 + $0x21e8] sm:$0xff]
    %v1251 = vld [vmem:[#allocation5 + $0x21f0] sm:$0xff]
    %v1252 = vld [vmem:[#allocation5 + $0x21f8] sm:$0xff]
    %v1253 = vld [vmem:[#allocation5 + $0x2200] sm:$0xff]
    %v1254 = vld [vmem:[#allocation5 + $0x2208] sm:$0xff]
    %v1255 = vld [vmem:[#allocation5 + $0x2210] sm:$0xff]
    %v1256 = vld [vmem:[#allocation5 + $0x2218] sm:$0xff]
    %v1257 = vld [vmem:[#allocation5 + $0x2220] sm:$0xff]
    %v1258 = vld [vmem:[#allocation5 + $0x2228] sm:$0xff]
    %v1259 = vld [vmem:[#allocation5 + $0x2230] sm:$0xff]
    %v1260 = vld [vmem:[#allocation5 + $0x2238] sm:$0xff]
    %v1261 = vld [vmem:[#allocation5 + $0x2240] sm:$0xff]
    %v1262 = vld [vmem:[#allocation5 + $0x2248] sm:$0xff]
    %v1263 = vld [vmem:[#allocation5 + $0x2250] sm:$0xff]
    %v1264 = vld [vmem:[#allocation5 + $0x2258] sm:$0xff]
    %v1265 = vld [vmem:[#allocation5 + $0x2260] sm:$0xff]
    %v1266 = vld [vmem:[#allocation5 + $0x2268] sm:$0xff]
    %v1267 = vld [vmem:[#allocation5 + $0x2270] sm:$0xff]
    %v1268 = vld [vmem:[#allocation5 + $0x2278] sm:$0xff]
    %v1269 = vld [vmem:[#allocation5 + $0x2280] sm:$0xff]
    %v1270 = vld [vmem:[#allocation5 + $0x2288] sm:$0xff]
    %v1271 = vld [vmem:[#allocation5 + $0x2290] sm:$0xff]
    %v1272 = vld [vmem:[#allocation5 + $0x2298] sm:$0xff]
    %v1273 = vld [vmem:[#allocation5 + $0x22a0] sm:$0xff]
    %v1274 = vld [vmem:[#allocation5 + $0x22a8] sm:$0xff]
    %v1275 = vld [vmem:[#allocation5 + $0x22b0] sm:$0xff]
    %v1276 = vld [vmem:[#allocation5 + $0x22b8] sm:$0xff]
    %v1277 = vld [vmem:[#allocation5 + $0x22c0] sm:$0xff]
    %v1278 = vld [vmem:[#allocation5 + $0x22c8] sm:$0xff]
    %v1279 = vld [vmem:[#allocation5 + $0x22d0] sm:$0xff]
    %v1280 = vld [vmem:[#allocation5 + $0x22d8] sm:$0xff]
    %v1281 = vld [vmem:[#allocation5 + $0x22e0] sm:$0xff]
    %v1282 = vld [vmem:[#allocation5 + $0x22e8] sm:$0xff]
    %v1283 = vld [vmem:[#allocation5 + $0x22f0] sm:$0xff]
    %v1284 = vld [vmem:[#allocation5 + $0x22f8] sm:$0xff]
    %v1285 = vld [vmem:[#allocation5 + $0x2300] sm:$0xff]
    %v1286 = vld [vmem:[#allocation5 + $0x2308] sm:$0xff]
    %v1287 = vld [vmem:[#allocation5 + $0x2310] sm:$0xff]
    %v1288 = vld [vmem:[#allocation5 + $0x2318] sm:$0xff]
    %v1289 = vld [vmem:[#allocation5 + $0x2320] sm:$0xff]
    %v1290 = vld [vmem:[#allocation5 + $0x2328] sm:$0xff]
    %v1291 = vld [vmem:[#allocation5 + $0x2330] sm:$0xff]
    %v1292 = vld [vmem:[#allocation5 + $0x2338] sm:$0xff]
    %v1293 = vld [vmem:[#allocation5 + $0x2340] sm:$0xff]
    %v1294 = vld [vmem:[#allocation5 + $0x2348] sm:$0xff]
    %v1295 = vld [vmem:[#allocation5 + $0x2350] sm:$0xff]
    %v1296 = vld [vmem:[#allocation5 + $0x2358] sm:$0xff]
    %v1297 = vld [vmem:[#allocation5 + $0x2360] sm:$0xff]
    %v1298 = vld [vmem:[#allocation5 + $0x2368] sm:$0xff]
    %v1299 = vld [vmem:[#allocation5 + $0x2370] sm:$0xff]
    %v1300 = vld [vmem:[#allocation5 + $0x2378] sm:$0xff]
    %v1301 = vld [vmem:[#allocation5 + $0x2380] sm:$0xff]
    %v1302 = vld [vmem:[#allocation5 + $0x2388] sm:$0xff]
    %v1303 = vld [vmem:[#allocation5 + $0x2390] sm:$0xff]
    %v1304 = vld [vmem:[#allocation5 + $0x2398] sm:$0xff]
    %v1305 = vld [vmem:[#allocation5 + $0x23a0] sm:$0xff]
    %v1306 = vld [vmem:[#allocation5 + $0x23a8] sm:$0xff]
    %v1307 = vld [vmem:[#allocation5 + $0x23b0] sm:$0xff]
    %v1308 = vld [vmem:[#allocation5 + $0x23b8] sm:$0xff]
    %v1309 = vld [vmem:[#allocation5 + $0x23c0] sm:$0xff]
    %v1310 = vld [vmem:[#allocation5 + $0x23c8] sm:$0xff]
    %v1311 = vld [vmem:[#allocation5 + $0x23d0] sm:$0xff]
    %v1312 = vld [vmem:[#allocation5 + $0x23d8] sm:$0xff]
    %v1313 = vld [vmem:[#allocation5 + $0x23e0] sm:$0xff]
    %v1314 = vld [vmem:[#allocation5 + $0x23e8] sm:$0xff]
    %v1315 = vld [vmem:[#allocation5 + $0x23f0] sm:$0xff]
    %v1316 = vld [vmem:[#allocation5 + $0x23f8] sm:$0xff]
    %v1317 = vld [vmem:[#allocation5 + $0x2400] sm:$0xff]
    %v1318 = vld [vmem:[#allocation5 + $0x2408] sm:$0xff]
    %v1319 = vld [vmem:[#allocation5 + $0x2410] sm:$0xff]
    %v1320 = vld [vmem:[#allocation5 + $0x2418] sm:$0xff]
    %v1321 = vld [vmem:[#allocation5 + $0x2420] sm:$0xff]
    %v1322 = vld [vmem:[#allocation5 + $0x2428] sm:$0xff]
    %v1323 = vld [vmem:[#allocation5 + $0x2430] sm:$0xff]
    %v1324 = vld [vmem:[#allocation5 + $0x2438] sm:$0xff]
    %v1325 = vld [vmem:[#allocation5 + $0x2440] sm:$0xff]
    %v1326 = vld [vmem:[#allocation5 + $0x2448] sm:$0xff]
    %v1327 = vld [vmem:[#allocation5 + $0x2450] sm:$0xff]
    %v1328 = vld [vmem:[#allocation5 + $0x2458] sm:$0xff]
    %v1329 = vld [vmem:[#allocation5 + $0x2460] sm:$0xff]
    %v1330 = vld [vmem:[#allocation5 + $0x2468] sm:$0xff]
    %v1331 = vld [vmem:[#allocation5 + $0x2470] sm:$0xff]
    %v1332 = vld [vmem:[#allocation5 + $0x2478] sm:$0xff]
    %v1333 = vld [vmem:[#allocation5 + $0x2480] sm:$0xff]
    %v1334 = vld [vmem:[#allocation5 + $0x2488] sm:$0xff]
    %v1335 = vld [vmem:[#allocation5 + $0x2490] sm:$0xff]
    %v1336 = vld [vmem:[#allocation5 + $0x2498] sm:$0xff]
    %v1337 = vld [vmem:[#allocation5 + $0x24a0] sm:$0xff]
    %v1338 = vld [vmem:[#allocation5 + $0x24a8] sm:$0xff]
    %v1339 = vld [vmem:[#allocation5 + $0x24b0] sm:$0xff]
    %v1340 = vld [vmem:[#allocation5 + $0x24b8] sm:$0xff]
    %v1341 = vld [vmem:[#allocation5 + $0x24c0] sm:$0xff]
    %v1342 = vld [vmem:[#allocation5 + $0x24c8] sm:$0xff]
    %v1343 = vld [vmem:[#allocation5 + $0x24d0] sm:$0xff]
    %v1344 = vld [vmem:[#allocation5 + $0x24d8] sm:$0xff]
    %v1345 = vld [vmem:[#allocation5 + $0x24e0] sm:$0xff]
    %v1346 = vld [vmem:[#allocation5 + $0x24e8] sm:$0xff]
    %v1347 = vld [vmem:[#allocation5 + $0x24f0] sm:$0xff]
    %v1348 = vld [vmem:[#allocation5 + $0x24f8] sm:$0xff]
    %v1349 = vld [vmem:[#allocation5 + $0x2500] sm:$0xff]
    %v1350 = vld [vmem:[#allocation5 + $0x2508] sm:$0xff]
    %v1351 = vld [vmem:[#allocation5 + $0x2510] sm:$0xff]
    %v1352 = vld [vmem:[#allocation5 + $0x2518] sm:$0xff]
    %v1353 = vld [vmem:[#allocation5 + $0x2520] sm:$0xff]
    %v1354 = vld [vmem:[#allocation5 + $0x2528] sm:$0xff]
    %v1355 = vld [vmem:[#allocation5 + $0x2530] sm:$0xff]
    %v1356 = vld [vmem:[#allocation5 + $0x2538] sm:$0xff]
    %v1357 = vld [vmem:[#allocation5 + $0x2540] sm:$0xff]
    %v1358 = vld [vmem:[#allocation5 + $0x2548] sm:$0xff]
    %v1359 = vld [vmem:[#allocation5 + $0x2550] sm:$0xff]
    %v1360 = vld [vmem:[#allocation5 + $0x2558] sm:$0xff]
    %v1361 = vld [vmem:[#allocation5 + $0x2560] sm:$0xff]
    %v1362 = vld [vmem:[#allocation5 + $0x2568] sm:$0xff]
    %v1363 = vld [vmem:[#allocation5 + $0x2570] sm:$0xff]
    %v1364 = vld [vmem:[#allocation5 + $0x2578] sm:$0xff]
    %v1365 = vld [vmem:[#allocation5 + $0x2580] sm:$0xff]
    %v1366 = vld [vmem:[#allocation5 + $0x2588] sm:$0xff]
    %v1367 = vld [vmem:[#allocation5 + $0x2590] sm:$0xff]
    %v1368 = vld [vmem:[#allocation5 + $0x2598] sm:$0xff]
    %v1369 = vld [vmem:[#allocation5 + $0x25a0] sm:$0xff]
    %v1370 = vld [vmem:[#allocation5 + $0x25a8] sm:$0xff]
    %v1371 = vld [vmem:[#allocation5 + $0x25b0] sm:$0xff]
    %v1372 = vld [vmem:[#allocation5 + $0x25b8] sm:$0xff]
    %v1373 = vld [vmem:[#allocation5 + $0x25c0] sm:$0xff]
    %v1374 = vld [vmem:[#allocation5 + $0x25c8] sm:$0xff]
    %v1375 = vld [vmem:[#allocation5 + $0x25d0] sm:$0xff]
    %v1376 = vld [vmem:[#allocation5 + $0x25d8] sm:$0xff]
    %v1377 = vld [vmem:[#allocation5 + $0x25e0] sm:$0xff]
    %v1378 = vld [vmem:[#allocation5 + $0x25e8] sm:$0xff]
    %v1379 = vld [vmem:[#allocation5 + $0x25f0] sm:$0xff]
    %v1380 = vld [vmem:[#allocation5 + $0x25f8] sm:$0xff]
    %v1381 = vld [vmem:[#allocation5 + $0x2600] sm:$0xff]
    %v1382 = vld [vmem:[#allocation5 + $0x2608] sm:$0xff]
    %v1383 = vld [vmem:[#allocation5 + $0x2610] sm:$0xff]
    %v1384 = vld [vmem:[#allocation5 + $0x2618] sm:$0xff]
    %v1385 = vld [vmem:[#allocation5 + $0x2620] sm:$0xff]
    %v1386 = vld [vmem:[#allocation5 + $0x2628] sm:$0xff]
    %v1387 = vld [vmem:[#allocation5 + $0x2630] sm:$0xff]
    %v1388 = vld [vmem:[#allocation5 + $0x2638] sm:$0xff]
    %v1389 = vld [vmem:[#allocation5 + $0x2640] sm:$0xff]
    %v1390 = vld [vmem:[#allocation5 + $0x2648] sm:$0xff]
    %v1391 = vld [vmem:[#allocation5 + $0x2650] sm:$0xff]
    %v1392 = vld [vmem:[#allocation5 + $0x2658] sm:$0xff]
    %v1393 = vld [vmem:[#allocation5 + $0x2660] sm:$0xff]
    %v1394 = vld [vmem:[#allocation5 + $0x2668] sm:$0xff]
    %v1395 = vld [vmem:[#allocation5 + $0x2670] sm:$0xff]
    %v1396 = vld [vmem:[#allocation5 + $0x2678] sm:$0xff]
    %v1397 = vld [vmem:[#allocation5 + $0x2680] sm:$0xff]
    %v1398 = vld [vmem:[#allocation5 + $0x2688] sm:$0xff]
    %v1399 = vld [vmem:[#allocation5 + $0x2690] sm:$0xff]
    %v1400 = vld [vmem:[#allocation5 + $0x2698] sm:$0xff]
    %v1401 = vld [vmem:[#allocation5 + $0x26a0] sm:$0xff]
    %v1402 = vld [vmem:[#allocation5 + $0x26a8] sm:$0xff]
    %v1403 = vld [vmem:[#allocation5 + $0x26b0] sm:$0xff]
    %v1404 = vld [vmem:[#allocation5 + $0x26b8] sm:$0xff]
    %v1405 = vld [vmem:[#allocation5 + $0x26c0] sm:$0xff]
    %v1406 = vld [vmem:[#allocation5 + $0x26c8] sm:$0xff]
    %v1407 = vld [vmem:[#allocation5 + $0x26d0] sm:$0xff]
    %v1408 = vld [vmem:[#allocation5 + $0x26d8] sm:$0xff]
    %v1409 = vld [vmem:[#allocation5 + $0x26e0] sm:$0xff]
    %v1410 = vld [vmem:[#allocation5 + $0x26e8] sm:$0xff]
    %v1411 = vld [vmem:[#allocation5 + $0x26f0] sm:$0xff]
    %v1412 = vld [vmem:[#allocation5 + $0x26f8] sm:$0xff]
    %v1413 = vld [vmem:[#allocation5 + $0x2700] sm:$0xff]
    %v1414 = vld [vmem:[#allocation5 + $0x2708] sm:$0xff]
    %v1415 = vld [vmem:[#allocation5 + $0x2710] sm:$0xff]
    %v1416 = vld [vmem:[#allocation5 + $0x2718] sm:$0xff]
    %v1417 = vld [vmem:[#allocation5 + $0x2720] sm:$0xff]
    %v1418 = vld [vmem:[#allocation5 + $0x2728] sm:$0xff]
    %v1419 = vld [vmem:[#allocation5 + $0x2730] sm:$0xff]
    %v1420 = vld [vmem:[#allocation5 + $0x2738] sm:$0xff]
    %v1421 = vld [vmem:[#allocation5 + $0x2740] sm:$0xff]
    %v1422 = vld [vmem:[#allocation5 + $0x2748] sm:$0xff]
    %v1423 = vld [vmem:[#allocation5 + $0x2750] sm:$0xff]
    %v1424 = vld [vmem:[#allocation5 + $0x2758] sm:$0xff]
    %v1425 = vld [vmem:[#allocation5 + $0x2760] sm:$0xff]
    %v1426 = vld [vmem:[#allocation5 + $0x2768] sm:$0xff]
    %v1427 = vld [vmem:[#allocation5 + $0x2770] sm:$0xff]
    %v1428 = vld [vmem:[#allocation5 + $0x2778] sm:$0xff]
    %v1429 = vld [vmem:[#allocation5 + $0x2780] sm:$0xff]
    %v1430 = vld [vmem:[#allocation5 + $0x2788] sm:$0xff]
    %v1431 = vld [vmem:[#allocation5 + $0x2790] sm:$0xff]
    %v1432 = vld [vmem:[#allocation5 + $0x2798] sm:$0xff]
    %v1433 = vld [vmem:[#allocation5 + $0x27a0] sm:$0xff]
    %v1434 = vld [vmem:[#allocation5 + $0x27a8] sm:$0xff]
    %v1435 = vld [vmem:[#allocation5 + $0x27b0] sm:$0xff]
    %v1436 = vld [vmem:[#allocation5 + $0x27b8] sm:$0xff]
    %v1437 = vld [vmem:[#allocation5 + $0x27c0] sm:$0xff]
    %v1438 = vld [vmem:[#allocation5 + $0x27c8] sm:$0xff]
    %v1439 = vld [vmem:[#allocation5 + $0x27d0] sm:$0xff]
    %v1440 = vld [vmem:[#allocation5 + $0x27d8] sm:$0xff]
    %v1441 = vld [vmem:[#allocation5 + $0x27e0] sm:$0xff]
    %v1442 = vld [vmem:[#allocation5 + $0x27e8] sm:$0xff]
    %v1443 = vld [vmem:[#allocation5 + $0x27f0] sm:$0xff]
    %v1444 = vld [vmem:[#allocation5 + $0x27f8] sm:$0xff]
    %v1445 = vld [vmem:[#allocation5 + $0x2800] sm:$0xff]
    %v1446 = vld [vmem:[#allocation5 + $0x2808] sm:$0xff]
    %v1447 = vld [vmem:[#allocation5 + $0x2810] sm:$0xff]
    %v1448 = vld [vmem:[#allocation5 + $0x2818] sm:$0xff]
    %v1449 = vld [vmem:[#allocation5 + $0x2820] sm:$0xff]
    %v1450 = vld [vmem:[#allocation5 + $0x2828] sm:$0xff]
    %v1451 = vld [vmem:[#allocation5 + $0x2830] sm:$0xff]
    %v1452 = vld [vmem:[#allocation5 + $0x2838] sm:$0xff]
    %v1453 = vld [vmem:[#allocation5 + $0x2840] sm:$0xff]
    %v1454 = vld [vmem:[#allocation5 + $0x2848] sm:$0xff]
    %v1455 = vld [vmem:[#allocation5 + $0x2850] sm:$0xff]
    %v1456 = vld [vmem:[#allocation5 + $0x2858] sm:$0xff]
    %v1457 = vld [vmem:[#allocation5 + $0x2860] sm:$0xff]
    %v1458 = vld [vmem:[#allocation5 + $0x2868] sm:$0xff]
    %v1459 = vld [vmem:[#allocation5 + $0x2870] sm:$0xff]
    %v1460 = vld [vmem:[#allocation5 + $0x2878] sm:$0xff]
    %v1461 = vld [vmem:[#allocation5 + $0x2880] sm:$0xff]
    %v1462 = vld [vmem:[#allocation5 + $0x2888] sm:$0xff]
    %v1463 = vld [vmem:[#allocation5 + $0x2890] sm:$0xff]
    %v1464 = vld [vmem:[#allocation5 + $0x2898] sm:$0xff]
    %v1465 = vld [vmem:[#allocation5 + $0x28a0] sm:$0xff]
    %v1466 = vld [vmem:[#allocation5 + $0x28a8] sm:$0xff]
    %v1467 = vld [vmem:[#allocation5 + $0x28b0] sm:$0xff]
    %v1468 = vld [vmem:[#allocation5 + $0x28b8] sm:$0xff]
    %v1469 = vld [vmem:[#allocation5 + $0x28c0] sm:$0xff]
    %v1470 = vld [vmem:[#allocation5 + $0x28c8] sm:$0xff]
    %v1471 = vld [vmem:[#allocation5 + $0x28d0] sm:$0xff]
    %v1472 = vld [vmem:[#allocation5 + $0x28d8] sm:$0xff]
    %v1473 = vld [vmem:[#allocation5 + $0x28e0] sm:$0xff]
    %v1474 = vld [vmem:[#allocation5 + $0x28e8] sm:$0xff]
    %v1475 = vld [vmem:[#allocation5 + $0x28f0] sm:$0xff]
    %v1476 = vld [vmem:[#allocation5 + $0x28f8] sm:$0xff]
    %v1477 = vld [vmem:[#allocation5 + $0x2900] sm:$0xff]
    %v1478 = vld [vmem:[#allocation5 + $0x2908] sm:$0xff]
    %v1479 = vld [vmem:[#allocation5 + $0x2910] sm:$0xff]
    %v1480 = vld [vmem:[#allocation5 + $0x2918] sm:$0xff]
    %v1481 = vld [vmem:[#allocation5 + $0x2920] sm:$0xff]
    %v1482 = vld [vmem:[#allocation5 + $0x2928] sm:$0xff]
    %v1483 = vld [vmem:[#allocation5 + $0x2930] sm:$0xff]
    %v1484 = vld [vmem:[#allocation5 + $0x2938] sm:$0xff]
    %v1485 = vld [vmem:[#allocation5 + $0x2940] sm:$0xff]
    %v1486 = vld [vmem:[#allocation5 + $0x2948] sm:$0xff]
    %v1487 = vld [vmem:[#allocation5 + $0x2950] sm:$0xff]
    %v1488 = vld [vmem:[#allocation5 + $0x2958] sm:$0xff]
    %v1489 = vld [vmem:[#allocation5 + $0x2960] sm:$0xff]
    %v1490 = vld [vmem:[#allocation5 + $0x2968] sm:$0xff]
    %v1491 = vld [vmem:[#allocation5 + $0x2970] sm:$0xff]
    %v1492 = vld [vmem:[#allocation5 + $0x2978] sm:$0xff]
    %v1493 = vld [vmem:[#allocation5 + $0x2980] sm:$0xff]
    %v1494 = vld [vmem:[#allocation5 + $0x2988] sm:$0xff]
    %v1495 = vld [vmem:[#allocation5 + $0x2990] sm:$0xff]
    %v1496 = vld [vmem:[#allocation5 + $0x2998] sm:$0xff]
    %v1497 = vld [vmem:[#allocation5 + $0x29a0] sm:$0xff]
    %v1498 = vld [vmem:[#allocation5 + $0x29a8] sm:$0xff]
    %v1499 = vld [vmem:[#allocation5 + $0x29b0] sm:$0xff]
    %v1500 = vld [vmem:[#allocation5 + $0x29b8] sm:$0xff]
    %v1501 = vld [vmem:[#allocation5 + $0x29c0] sm:$0xff]
    %v1502 = vld [vmem:[#allocation5 + $0x29c8] sm:$0xff]
    %v1503 = vld [vmem:[#allocation5 + $0x29d0] sm:$0xff]
    %v1504 = vld [vmem:[#allocation5 + $0x29d8] sm:$0xff]
    %v1505 = vld [vmem:[#allocation5 + $0x29e0] sm:$0xff]
    %v1506 = vld [vmem:[#allocation5 + $0x29e8] sm:$0xff]
    %v1507 = vld [vmem:[#allocation5 + $0x29f0] sm:$0xff]
    %v1508 = vld [vmem:[#allocation5 + $0x29f8] sm:$0xff]
    %v1509 = vld [vmem:[#allocation5 + $0x2a00] sm:$0xff]
    %v1510 = vld [vmem:[#allocation5 + $0x2a08] sm:$0xff]
    %v1511 = vld [vmem:[#allocation5 + $0x2a10] sm:$0xff]
    %v1512 = vld [vmem:[#allocation5 + $0x2a18] sm:$0xff]
    %v1513 = vld [vmem:[#allocation5 + $0x2a20] sm:$0xff]
    %v1514 = vld [vmem:[#allocation5 + $0x2a28] sm:$0xff]
    %v1515 = vld [vmem:[#allocation5 + $0x2a30] sm:$0xff]
    %v1516 = vld [vmem:[#allocation5 + $0x2a38] sm:$0xff]
    %v1517 = vld [vmem:[#allocation5 + $0x2a40] sm:$0xff]
    %v1518 = vld [vmem:[#allocation5 + $0x2a48] sm:$0xff]
    %v1519 = vld [vmem:[#allocation5 + $0x2a50] sm:$0xff]
    %v1520 = vld [vmem:[#allocation5 + $0x2a58] sm:$0xff]
    %v1521 = vld [vmem:[#allocation5 + $0x2a60] sm:$0xff]
    %v1522 = vld [vmem:[#allocation5 + $0x2a68] sm:$0xff]
    %v1523 = vld [vmem:[#allocation5 + $0x2a70] sm:$0xff]
    %v1524 = vld [vmem:[#allocation5 + $0x2a78] sm:$0xff]
    %v1525 = vld [vmem:[#allocation5 + $0x2a80] sm:$0xff]
    %v1526 = vld [vmem:[#allocation5 + $0x2a88] sm:$0xff]
    %v1527 = vld [vmem:[#allocation5 + $0x2a90] sm:$0xff]
    %v1528 = vld [vmem:[#allocation5 + $0x2a98] sm:$0xff]
    %v1529 = vld [vmem:[#allocation5 + $0x2aa0] sm:$0xff]
    %v1530 = vld [vmem:[#allocation5 + $0x2aa8] sm:$0xff]
    %v1531 = vld [vmem:[#allocation5 + $0x2ab0] sm:$0xff]
    %v1532 = vld [vmem:[#allocation5 + $0x2ab8] sm:$0xff]
    %v1533 = vld [vmem:[#allocation5 + $0x2ac0] sm:$0xff]
    %v1534 = vld [vmem:[#allocation5 + $0x2ac8] sm:$0xff]
    %v1535 = vld [vmem:[#allocation5 + $0x2ad0] sm:$0xff]
    %v1536 = vld [vmem:[#allocation5 + $0x2ad8] sm:$0xff]
    %v1537 = vld [vmem:[#allocation5 + $0x2ae0] sm:$0xff]
    %v1538 = vld [vmem:[#allocation5 + $0x2ae8] sm:$0xff]
    %v1539 = vld [vmem:[#allocation5 + $0x2af0] sm:$0xff]
    %v1540 = vld [vmem:[#allocation5 + $0x2af8] sm:$0xff]
    %v1541 = vld [vmem:[#allocation5 + $0x2b00] sm:$0xff]
    %v1542 = vld [vmem:[#allocation5 + $0x2b08] sm:$0xff]
    %v1543 = vld [vmem:[#allocation5 + $0x2b10] sm:$0xff]
    %v1544 = vld [vmem:[#allocation5 + $0x2b18] sm:$0xff]
    %v1545 = vld [vmem:[#allocation5 + $0x2b20] sm:$0xff]
    %v1546 = vld [vmem:[#allocation5 + $0x2b28] sm:$0xff]
    %v1547 = vld [vmem:[#allocation5 + $0x2b30] sm:$0xff]
    %v1548 = vld [vmem:[#allocation5 + $0x2b38] sm:$0xff]
    %v1549 = vld [vmem:[#allocation5 + $0x2b40] sm:$0xff]
    %v1550 = vld [vmem:[#allocation5 + $0x2b48] sm:$0xff]
    %v1551 = vld [vmem:[#allocation5 + $0x2b50] sm:$0xff]
    %v1552 = vld [vmem:[#allocation5 + $0x2b58] sm:$0xff]
    %v1553 = vld [vmem:[#allocation5 + $0x2b60] sm:$0xff]
    %v1554 = vld [vmem:[#allocation5 + $0x2b68] sm:$0xff]
    %v1555 = vld [vmem:[#allocation5 + $0x2b70] sm:$0xff]
    %v1556 = vld [vmem:[#allocation5 + $0x2b78] sm:$0xff]
    %v1557 = vld [vmem:[#allocation5 + $0x2b80] sm:$0xff]
    %v1558 = vld [vmem:[#allocation5 + $0x2b88] sm:$0xff]
    %v1559 = vld [vmem:[#allocation5 + $0x2b90] sm:$0xff]
    %v1560 = vld [vmem:[#allocation5 + $0x2b98] sm:$0xff]
    %v1561 = vld [vmem:[#allocation5 + $0x2ba0] sm:$0xff]
    %v1562 = vld [vmem:[#allocation5 + $0x2ba8] sm:$0xff]
    %v1563 = vld [vmem:[#allocation5 + $0x2bb0] sm:$0xff]
    %v1564 = vld [vmem:[#allocation5 + $0x2bb8] sm:$0xff]
    %v1565 = vld [vmem:[#allocation5 + $0x2bc0] sm:$0xff]
    %v1566 = vld [vmem:[#allocation5 + $0x2bc8] sm:$0xff]
    %v1567 = vld [vmem:[#allocation5 + $0x2bd0] sm:$0xff]
    %v1568 = vld [vmem:[#allocation5 + $0x2bd8] sm:$0xff]
    %v1569 = vld [vmem:[#allocation5 + $0x2be0] sm:$0xff]
    %v1570 = vld [vmem:[#allocation5 + $0x2be8] sm:$0xff]
    %v1571 = vld [vmem:[#allocation5 + $0x2bf0] sm:$0xff]
    %v1572 = vld [vmem:[#allocation5 + $0x2bf8] sm:$0xff]
    %v1573 = vld [vmem:[#allocation5 + $0x2c00] sm:$0xff]
    %v1574 = vld [vmem:[#allocation5 + $0x2c08] sm:$0xff]
    %v1575 = vld [vmem:[#allocation5 + $0x2c10] sm:$0xff]
    %v1576 = vld [vmem:[#allocation5 + $0x2c18] sm:$0xff]
    %v1577 = vld [vmem:[#allocation5 + $0x2c20] sm:$0xff]
    %v1578 = vld [vmem:[#allocation5 + $0x2c28] sm:$0xff]
    %v1579 = vld [vmem:[#allocation5 + $0x2c30] sm:$0xff]
    %v1580 = vld [vmem:[#allocation5 + $0x2c38] sm:$0xff]
    %v1581 = vld [vmem:[#allocation5 + $0x2c40] sm:$0xff]
    %v1582 = vld [vmem:[#allocation5 + $0x2c48] sm:$0xff]
    %v1583 = vld [vmem:[#allocation5 + $0x2c50] sm:$0xff]
    %v1584 = vld [vmem:[#allocation5 + $0x2c58] sm:$0xff]
    %v1585 = vld [vmem:[#allocation5 + $0x2c60] sm:$0xff]
    %v1586 = vld [vmem:[#allocation5 + $0x2c68] sm:$0xff]
    %v1587 = vld [vmem:[#allocation5 + $0x2c70] sm:$0xff]
    %v1588 = vld [vmem:[#allocation5 + $0x2c78] sm:$0xff]
    %v1589 = vld [vmem:[#allocation5 + $0x2c80] sm:$0xff]
    %v1590 = vld [vmem:[#allocation5 + $0x2c88] sm:$0xff]
    %v1591 = vld [vmem:[#allocation5 + $0x2c90] sm:$0xff]
    %v1592 = vld [vmem:[#allocation5 + $0x2c98] sm:$0xff]
    %v1593 = vld [vmem:[#allocation5 + $0x2ca0] sm:$0xff]
    %v1594 = vld [vmem:[#allocation5 + $0x2ca8] sm:$0xff]
    %v1595 = vld [vmem:[#allocation5 + $0x2cb0] sm:$0xff]
    %v1596 = vld [vmem:[#allocation5 + $0x2cb8] sm:$0xff]
    %v1597 = vld [vmem:[#allocation5 + $0x2cc0] sm:$0xff]
    %v1598 = vld [vmem:[#allocation5 + $0x2cc8] sm:$0xff]
    %v1599 = vld [vmem:[#allocation5 + $0x2cd0] sm:$0xff]
    %v1600 = vld [vmem:[#allocation5 + $0x2cd8] sm:$0xff]
    %v1601 = vld [vmem:[#allocation5 + $0x2ce0] sm:$0xff]
    %v1602 = vld [vmem:[#allocation5 + $0x2ce8] sm:$0xff]
    %v1603 = vld [vmem:[#allocation5 + $0x2cf0] sm:$0xff]
    %v1604 = vld [vmem:[#allocation5 + $0x2cf8] sm:$0xff]
    %v1605 = vld [vmem:[#allocation5 + $0x2d00] sm:$0xff]
    %v1606 = vld [vmem:[#allocation5 + $0x2d08] sm:$0xff]
    %v1607 = vld [vmem:[#allocation5 + $0x2d10] sm:$0xff]
    %v1608 = vld [vmem:[#allocation5 + $0x2d18] sm:$0xff]
    %v1609 = vld [vmem:[#allocation5 + $0x2d20] sm:$0xff]
    %v1610 = vld [vmem:[#allocation5 + $0x2d28] sm:$0xff]
    %v1611 = vld [vmem:[#allocation5 + $0x2d30] sm:$0xff]
    %v1612 = vld [vmem:[#allocation5 + $0x2d38] sm:$0xff]
    %v1613 = vld [vmem:[#allocation5 + $0x2d40] sm:$0xff]
    %v1614 = vld [vmem:[#allocation5 + $0x2d48] sm:$0xff]
    %v1615 = vld [vmem:[#allocation5 + $0x2d50] sm:$0xff]
    %v1616 = vld [vmem:[#allocation5 + $0x2d58] sm:$0xff]
    %v1617 = vld [vmem:[#allocation5 + $0x2d60] sm:$0xff]
    %v1618 = vld [vmem:[#allocation5 + $0x2d68] sm:$0xff]
    %v1619 = vld [vmem:[#allocation5 + $0x2d70] sm:$0xff]
    %v1620 = vld [vmem:[#allocation5 + $0x2d78] sm:$0xff]
    %v1621 = vld [vmem:[#allocation5 + $0x2d80] sm:$0xff]
    %v1622 = vld [vmem:[#allocation5 + $0x2d88] sm:$0xff]
    %v1623 = vld [vmem:[#allocation5 + $0x2d90] sm:$0xff]
    %v1624 = vld [vmem:[#allocation5 + $0x2d98] sm:$0xff]
    %v1625 = vld [vmem:[#allocation5 + $0x2da0] sm:$0xff]
    %v1626 = vld [vmem:[#allocation5 + $0x2da8] sm:$0xff]
    %v1627 = vld [vmem:[#allocation5 + $0x2db0] sm:$0xff]
    %v1628 = vld [vmem:[#allocation5 + $0x2db8] sm:$0xff]
    %v1629 = vld [vmem:[#allocation5 + $0x2dc0] sm:$0xff]
    %v1630 = vld [vmem:[#allocation5 + $0x2dc8] sm:$0xff]
    %v1631 = vld [vmem:[#allocation5 + $0x2dd0] sm:$0xff]
    %v1632 = vld [vmem:[#allocation5 + $0x2dd8] sm:$0xff]
    %v1633 = vld [vmem:[#allocation5 + $0x2de0] sm:$0xff]
    %v1634 = vld [vmem:[#allocation5 + $0x2de8] sm:$0xff]
    %v1635 = vld [vmem:[#allocation5 + $0x2df0] sm:$0xff]
    %v1636 = vld [vmem:[#allocation5 + $0x2df8] sm:$0xff]
    %v1637 = vld [vmem:[#allocation5 + $0x2e00] sm:$0xff]
    %v1638 = vld [vmem:[#allocation5 + $0x2e08] sm:$0xff]
    %v1639 = vld [vmem:[#allocation5 + $0x2e10] sm:$0xff]
    %v1640 = vld [vmem:[#allocation5 + $0x2e18] sm:$0xff]
    %v1641 = vld [vmem:[#allocation5 + $0x2e20] sm:$0xff]
    %v1642 = vld [vmem:[#allocation5 + $0x2e28] sm:$0xff]
    %v1643 = vld [vmem:[#allocation5 + $0x2e30] sm:$0xff]
    %v1644 = vld [vmem:[#allocation5 + $0x2e38] sm:$0xff]
    %v1645 = vld [vmem:[#allocation5 + $0x2e40] sm:$0xff]
    %v1646 = vld [vmem:[#allocation5 + $0x2e48] sm:$0xff]
    %v1647 = vld [vmem:[#allocation5 + $0x2e50] sm:$0xff]
    %v1648 = vld [vmem:[#allocation5 + $0x2e58] sm:$0xff]
    %v1649 = vld [vmem:[#allocation5 + $0x2e60] sm:$0xff]
    %v1650 = vld [vmem:[#allocation5 + $0x2e68] sm:$0xff]
    %v1651 = vld [vmem:[#allocation5 + $0x2e70] sm:$0xff]
    %v1652 = vld [vmem:[#allocation5 + $0x2e78] sm:$0xff]
    %v1653 = vld [vmem:[#allocation5 + $0x2e80] sm:$0xff]
    %v1654 = vld [vmem:[#allocation5 + $0x2e88] sm:$0xff]
    %v1655 = vld [vmem:[#allocation5 + $0x2e90] sm:$0xff]
    %v1656 = vld [vmem:[#allocation5 + $0x2e98] sm:$0xff]
    %v1657 = vld [vmem:[#allocation5 + $0x2ea0] sm:$0xff]
    %v1658 = vld [vmem:[#allocation5 + $0x2ea8] sm:$0xff]
    %v1659 = vld [vmem:[#allocation5 + $0x2eb0] sm:$0xff]
    %v1660 = vld [vmem:[#allocation5 + $0x2eb8] sm:$0xff]
    %v1661 = vld [vmem:[#allocation5 + $0x2ec0] sm:$0xff]
    %v1662 = vld [vmem:[#allocation5 + $0x2ec8] sm:$0xff]
    %v1663 = vld [vmem:[#allocation5 + $0x2ed0] sm:$0xff]
    %v1664 = vld [vmem:[#allocation5 + $0x2ed8] sm:$0xff]
    %v1665 = vld [vmem:[#allocation5 + $0x2ee0] sm:$0xff]
    %v1666 = vld [vmem:[#allocation5 + $0x2ee8] sm:$0xff]
    %v1667 = vld [vmem:[#allocation5 + $0x2ef0] sm:$0xff]
    %v1668 = vld [vmem:[#allocation5 + $0x2ef8] sm:$0xff]
    %v1669 = vld [vmem:[#allocation5 + $0x2f00] sm:$0xff]
    %v1670 = vld [vmem:[#allocation5 + $0x2f08] sm:$0xff]
    %v1671 = vld [vmem:[#allocation5 + $0x2f10] sm:$0xff]
    %v1672 = vld [vmem:[#allocation5 + $0x2f18] sm:$0xff]
    %v1673 = vld [vmem:[#allocation5 + $0x2f20] sm:$0xff]
    %v1674 = vld [vmem:[#allocation5 + $0x2f28] sm:$0xff]
    %v1675 = vld [vmem:[#allocation5 + $0x2f30] sm:$0xff]
    %v1676 = vld [vmem:[#allocation5 + $0x2f38] sm:$0xff]
    %v1677 = vld [vmem:[#allocation5 + $0x2f40] sm:$0xff]
    %v1678 = vld [vmem:[#allocation5 + $0x2f48] sm:$0xff]
    %v1679 = vld [vmem:[#allocation5 + $0x2f50] sm:$0xff]
    %v1680 = vld [vmem:[#allocation5 + $0x2f58] sm:$0xff]
    %v1681 = vld [vmem:[#allocation5 + $0x2f60] sm:$0xff]
    %v1682 = vld [vmem:[#allocation5 + $0x2f68] sm:$0xff]
    %v1683 = vld [vmem:[#allocation5 + $0x2f70] sm:$0xff]
    %v1684 = vld [vmem:[#allocation5 + $0x2f78] sm:$0xff]
    %v1685 = vld [vmem:[#allocation5 + $0x2f80] sm:$0xff]
    %v1686 = vld [vmem:[#allocation5 + $0x2f88] sm:$0xff]
    %v1687 = vld [vmem:[#allocation5 + $0x2f90] sm:$0xff]
    %v1688 = vld [vmem:[#allocation5 + $0x2f98] sm:$0xff]
    %v1689 = vld [vmem:[#allocation5 + $0x2fa0] sm:$0xff]
    %v1690 = vld [vmem:[#allocation5 + $0x2fa8] sm:$0xff]
    %v1691 = vld [vmem:[#allocation5 + $0x2fb0] sm:$0xff]
    %v1692 = vld [vmem:[#allocation5 + $0x2fb8] sm:$0xff]
    %v1693 = vld [vmem:[#allocation5 + $0x2fc0] sm:$0xff]
    %v1694 = vld [vmem:[#allocation5 + $0x2fc8] sm:$0xff]
    %v1695 = vld [vmem:[#allocation5 + $0x2fd0] sm:$0xff]
    %v1696 = vld [vmem:[#allocation5 + $0x2fd8] sm:$0xff]
    %v1697 = vld [vmem:[#allocation5 + $0x2fe0] sm:$0xff]
    %v1698 = vld [vmem:[#allocation5 + $0x2fe8] sm:$0xff]
    %v1699 = vld [vmem:[#allocation5 + $0x2ff0] sm:$0xff]
    %v1700 = vld [vmem:[#allocation5 + $0x2ff8] sm:$0xff]
    %v1701 = vld [vmem:[#allocation5 + $0x3000] sm:$0xff]
    %v1702 = vld [vmem:[#allocation5 + $0x3008] sm:$0xff]
    %v1703 = vld [vmem:[#allocation5 + $0x3010] sm:$0xff]
    %v1704 = vld [vmem:[#allocation5 + $0x3018] sm:$0xff]
    %v1705 = vld [vmem:[#allocation5 + $0x3020] sm:$0xff]
    %v1706 = vld [vmem:[#allocation5 + $0x3028] sm:$0xff]
    %v1707 = vld [vmem:[#allocation5 + $0x3030] sm:$0xff]
    %v1708 = vld [vmem:[#allocation5 + $0x3038] sm:$0xff]
    %v1709 = vld [vmem:[#allocation5 + $0x3040] sm:$0xff]
    %v1710 = vld [vmem:[#allocation5 + $0x3048] sm:$0xff]
    %v1711 = vld [vmem:[#allocation5 + $0x3050] sm:$0xff]
    %v1712 = vld [vmem:[#allocation5 + $0x3058] sm:$0xff]
    %v1713 = vld [vmem:[#allocation5 + $0x3060] sm:$0xff]
    %v1714 = vld [vmem:[#allocation5 + $0x3068] sm:$0xff]
    %v1715 = vld [vmem:[#allocation5 + $0x3070] sm:$0xff]
    %v1716 = vld [vmem:[#allocation5 + $0x3078] sm:$0xff]
    %v1717 = vld [vmem:[#allocation5 + $0x3080] sm:$0xff]
    %v1718 = vld [vmem:[#allocation5 + $0x3088] sm:$0xff]
    %v1719 = vld [vmem:[#allocation5 + $0x3090] sm:$0xff]
    %v1720 = vld [vmem:[#allocation5 + $0x3098] sm:$0xff]
    %v1721 = vld [vmem:[#allocation5 + $0x30a0] sm:$0xff]
    %v1722 = vld [vmem:[#allocation5 + $0x30a8] sm:$0xff]
    %v1723 = vld [vmem:[#allocation5 + $0x30b0] sm:$0xff]
    %v1724 = vld [vmem:[#allocation5 + $0x30b8] sm:$0xff]
    %v1725 = vld [vmem:[#allocation5 + $0x30c0] sm:$0xff]
    %v1726 = vld [vmem:[#allocation5 + $0x30c8] sm:$0xff]
    %v1727 = vld [vmem:[#allocation5 + $0x30d0] sm:$0xff]
    %v1728 = vld [vmem:[#allocation5 + $0x30d8] sm:$0xff]
    %v1729 = vld [vmem:[#allocation5 + $0x30e0] sm:$0xff]
    %v1730 = vld [vmem:[#allocation5 + $0x30e8] sm:$0xff]
    %v1731 = vld [vmem:[#allocation5 + $0x30f0] sm:$0xff]
    %v1732 = vld [vmem:[#allocation5 + $0x30f8] sm:$0xff]
    %v1733 = vld [vmem:[#allocation7] sm:$0x1]
    %v1735 = vlaneseq
    %v1736 = vshrl.u32 %v1735, 7
    %v1737 = vsub.s32 0, %v1736
    %v1738 = vrot.slane %v1733, %v1737
    %1740 = vmatprep.subr.mxu0 0.0
    %1741 = vmatpush1.msra.mxu0 %v165
    %1742 = vmatprep.subr.mxu0 0.0
    %1743 = vmatpush1.msra.mxu0 %v166
    %1744 = vmatprep.subr.mxu0 0.0
    %1745 = vmatpush1.msra.mxu0 %v167
    %1746 = vmatprep.subr.mxu0 0.0
    %1747 = vmatpush1.msra.mxu0 %v168
    %1748 = vmatprep.subr.mxu0 0.0
    %1749 = vmatpush1.msra.mxu0 %v169
    %1750 = vmatprep.subr.mxu0 0.0
    %1751 = vmatpush1.msra.mxu0 %v170
    %1752 = vmatprep.subr.mxu0 0.0
    %1753 = vmatpush1.msra.mxu0 %v171
    %1754 = vmatprep.subr.mxu0 0.0
    %1755 = vmatpush1.msra.mxu0 %v172
    %1756 = vmatprep.subr.mxu0 0.0
    %1757 = vmatpush1.msra.mxu0 %v173
    %1758 = vmatprep.subr.mxu0 0.0
    %1759 = vmatpush1.msra.mxu0 %v174
    %1760 = vmatprep.subr.mxu0 0.0
    %1761 = vmatpush1.msra.mxu0 %v175
    %1762 = vmatprep.subr.mxu0 0.0
    %1763 = vmatpush1.msra.mxu0 %v176
    %1764 = vmatprep.subr.mxu0 0.0
    %1765 = vmatpush1.msra.mxu0 %v177
    %1766 = vmatprep.subr.mxu0 0.0
    %1767 = vmatpush1.msra.mxu0 %v178
    %1768 = vmatprep.subr.mxu0 0.0
    %1769 = vmatpush1.msra.mxu0 %v179
    %1770 = vmatprep.subr.mxu0 0.0
    %1771 = vmatpush1.msra.mxu0 %v180
    %1772 = vmatprep.subr.mxu0 0.0
    %1773 = vmatpush1.msra.mxu0 %v181
    %1774 = vmatprep.subr.mxu0 0.0
    %1775 = vmatpush1.msra.mxu0 %v182
    %1776 = vmatprep.subr.mxu0 0.0
    %1777 = vmatpush1.msra.mxu0 %v183
    %1778 = vmatprep.subr.mxu0 0.0
    %1779 = vmatpush1.msra.mxu0 %v184
    %1780 = vmatprep.subr.mxu0 0.0
    %1781 = vmatpush1.msra.mxu0 %v185
    %1782 = vmatprep.subr.mxu0 0.0
    %1783 = vmatpush1.msra.mxu0 %v186
    %1784 = vmatprep.subr.mxu0 0.0
    %1785 = vmatpush1.msra.mxu0 %v187
    %1786 = vmatprep.subr.mxu0 0.0
    %1787 = vmatpush1.msra.mxu0 %v188
    %1788 = vmatprep.subr.mxu0 0.0
    %1789 = vmatpush1.msra.mxu0 %v189
    %1790 = vmatprep.subr.mxu0 0.0
    %1791 = vmatpush1.msra.mxu0 %v190
    %1792 = vmatprep.subr.mxu0 0.0
    %1793 = vmatpush1.msra.mxu0 %v191
    %1794 = vmatprep.subr.mxu0 0.0
    %1795 = vmatpush1.msra.mxu0 %v192
    %1796 = vmatprep.subr.mxu0 0.0
    %1797 = vmatpush1.msra.mxu0 %v193
    %1798 = vmatprep.subr.mxu0 0.0
    %1799 = vmatpush1.msra.mxu0 %v194
    %1800 = vmatprep.subr.mxu0 0.0
    %1801 = vmatpush1.msra.mxu0 %v195
    %1802 = vmatprep.subr.mxu0 0.0
    %1803 = vmatpush1.msra.mxu0 %v196
    %1804 = vmatprep.mubr.f32.mxu0 %v68
    %1805 = vmatmul.mubr.f32.gmra.mrb[0].mxu0 %v67
    %v1806 = vpop.f32.mrb[0].mxu0
    %v1807 = vadd.f32 %v1738, %v1806
    %v1808 = vpop.f32.mrb[0].mxu0
    %1809 = vdwg.mxu0
    %1810 = vmatprep.subr.mxu0 0.0
    %1811 = vmatpush1.msra.mxu0 %v197
    %1812 = vmatprep.subr.mxu0 0.0
    %1813 = vmatpush1.msra.mxu0 %v198
    %1814 = vmatprep.subr.mxu0 0.0
    %1815 = vmatpush1.msra.mxu0 %v199
    %1816 = vmatprep.subr.mxu0 0.0
    %1817 = vmatpush1.msra.mxu0 %v200
    %1818 = vmatprep.subr.mxu0 0.0
    %1819 = vmatpush1.msra.mxu0 %v201
    %1820 = vmatprep.subr.mxu0 0.0
    %1821 = vmatpush1.msra.mxu0 %v202
    %1822 = vmatprep.subr.mxu0 0.0
    %1823 = vmatpush1.msra.mxu0 %v203
    %1824 = vmatprep.subr.mxu0 0.0
    %1825 = vmatpush1.msra.mxu0 %v204
    %1826 = vmatprep.subr.mxu0 0.0
    %1827 = vmatpush1.msra.mxu0 %v205
    %1828 = vmatprep.subr.mxu0 0.0
    %1829 = vmatpush1.msra.mxu0 %v206
    %1830 = vmatprep.subr.mxu0 0.0
    %1831 = vmatpush1.msra.mxu0 %v207
    %1832 = vmatprep.subr.mxu0 0.0
    %1833 = vmatpush1.msra.mxu0 %v208
    %1834 = vmatprep.subr.mxu0 0.0
    %1835 = vmatpush1.msra.mxu0 %v209
    %1836 = vmatprep.subr.mxu0 0.0
    %1837 = vmatpush1.msra.mxu0 %v210
    %1838 = vmatprep.subr.mxu0 0.0
    %1839 = vmatpush1.msra.mxu0 %v211
    %1840 = vmatprep.subr.mxu0 0.0
    %1841 = vmatpush1.msra.mxu0 %v212
    %1842 = vmatprep.subr.mxu0 0.0
    %1843 = vmatpush1.msra.mxu0 %v213
    %1844 = vmatprep.subr.mxu0 0.0
    %1845 = vmatpush1.msra.mxu0 %v214
    %1846 = vmatprep.subr.mxu0 0.0
    %1847 = vmatpush1.msra.mxu0 %v215
    %1848 = vmatprep.subr.mxu0 0.0
    %1849 = vmatpush1.msra.mxu0 %v216
    %1850 = vmatprep.subr.mxu0 0.0
    %1851 = vmatpush1.msra.mxu0 %v217
    %1852 = vmatprep.subr.mxu0 0.0
    %1853 = vmatpush1.msra.mxu0 %v218
    %1854 = vmatprep.subr.mxu0 0.0
    %1855 = vmatpush1.msra.mxu0 %v219
    %1856 = vmatprep.subr.mxu0 0.0
    %1857 = vmatpush1.msra.mxu0 %v220
    %1858 = vmatprep.subr.mxu0 0.0
    %1859 = vmatpush1.msra.mxu0 %v221
    %1860 = vmatprep.subr.mxu0 0.0
    %1861 = vmatpush1.msra.mxu0 %v222
    %1862 = vmatprep.subr.mxu0 0.0
    %1863 = vmatpush1.msra.mxu0 %v223
    %1864 = vmatprep.subr.mxu0 0.0
    %1865 = vmatpush1.msra.mxu0 %v224
    %1866 = vmatprep.subr.mxu0 0.0
    %1867 = vmatpush1.msra.mxu0 %v225
    %1868 = vmatprep.subr.mxu0 0.0
    %1869 = vmatpush1.msra.mxu0 %v226
    %1870 = vmatprep.subr.mxu0 0.0
    %1871 = vmatpush1.msra.mxu0 %v227
    %1872 = vmatprep.subr.mxu0 0.0
    %1873 = vmatpush1.msra.mxu0 %v228
    %1874 = vmatprep.mubr.f32.mxu0 %v70
    %1875 = vmatmul.mubr.f32.gmra.mrb[0].mxu0 %v69
    %v1876 = vpop.f32.mrb[0].mxu0
    %v1877 = vadd.f32 %v1807, %v1876
    %v1878 = vpop.f32.mrb[0].mxu0
    %1879 = vdwg.mxu0
    %1880 = vmatprep.subr.mxu0 0.0
    %1881 = vmatpush1.msra.mxu0 %v229
    %1882 = vmatprep.subr.mxu0 0.0
    %1883 = vmatpush1.msra.mxu0 %v230
    %1884 = vmatprep.subr.mxu0 0.0
    %1885 = vmatpush1.msra.mxu0 %v231
    %1886 = vmatprep.subr.mxu0 0.0
    %1887 = vmatpush1.msra.mxu0 %v232
    %1888 = vmatprep.subr.mxu0 0.0
    %1889 = vmatpush1.msra.mxu0 %v233
    %1890 = vmatprep.subr.mxu0 0.0
    %1891 = vmatpush1.msra.mxu0 %v234
    %1892 = vmatprep.subr.mxu0 0.0
    %1893 = vmatpush1.msra.mxu0 %v235
    %1894 = vmatprep.subr.mxu0 0.0
    %1895 = vmatpush1.msra.mxu0 %v236
    %1896 = vmatprep.subr.mxu0 0.0
    %1897 = vmatpush1.msra.mxu0 %v237
    %1898 = vmatprep.subr.mxu0 0.0
    %1899 = vmatpush1.msra.mxu0 %v238
    %1900 = vmatprep.subr.mxu0 0.0
    %1901 = vmatpush1.msra.mxu0 %v239
    %1902 = vmatprep.subr.mxu0 0.0
    %1903 = vmatpush1.msra.mxu0 %v240
    %1904 = vmatprep.subr.mxu0 0.0
    %1905 = vmatpush1.msra.mxu0 %v241
    %1906 = vmatprep.subr.mxu0 0.0
    %1907 = vmatpush1.msra.mxu0 %v242
    %1908 = vmatprep.subr.mxu0 0.0
    %1909 = vmatpush1.msra.mxu0 %v243
    %1910 = vmatprep.subr.mxu0 0.0
    %1911 = vmatpush1.msra.mxu0 %v244
    %1912 = vmatprep.subr.mxu0 0.0
    %1913 = vmatpush1.msra.mxu0 %v245
    %1914 = vmatprep.subr.mxu0 0.0
    %1915 = vmatpush1.msra.mxu0 %v246
    %1916 = vmatprep.subr.mxu0 0.0
    %1917 = vmatpush1.msra.mxu0 %v247
    %1918 = vmatprep.subr.mxu0 0.0
    %1919 = vmatpush1.msra.mxu0 %v248
    %1920 = vmatprep.subr.mxu0 0.0
    %1921 = vmatpush1.msra.mxu0 %v249
    %1922 = vmatprep.subr.mxu0 0.0
    %1923 = vmatpush1.msra.mxu0 %v250
    %1924 = vmatprep.subr.mxu0 0.0
    %1925 = vmatpush1.msra.mxu0 %v251
    %1926 = vmatprep.subr.mxu0 0.0
    %1927 = vmatpush1.msra.mxu0 %v252
    %1928 = vmatprep.subr.mxu0 0.0
    %1929 = vmatpush1.msra.mxu0 %v253
    %1930 = vmatprep.subr.mxu0 0.0
    %1931 = vmatpush1.msra.mxu0 %v254
    %1932 = vmatprep.subr.mxu0 0.0
    %1933 = vmatpush1.msra.mxu0 %v255
    %1934 = vmatprep.subr.mxu0 0.0
    %1935 = vmatpush1.msra.mxu0 %v256
    %1936 = vmatprep.subr.mxu0 0.0
    %1937 = vmatpush1.msra.mxu0 %v257
    %1938 = vmatprep.subr.mxu0 0.0
    %1939 = vmatpush1.msra.mxu0 %v258
    %1940 = vmatprep.subr.mxu0 0.0
    %1941 = vmatpush1.msra.mxu0 %v259
    %1942 = vmatprep.subr.mxu0 0.0
    %1943 = vmatpush1.msra.mxu0 %v260
    %1944 = vmatprep.mubr.f32.mxu0 %v72
    %1945 = vmatmul.mubr.f32.gmra.mrb[0].mxu0 %v71
    %v1946 = vpop.f32.mrb[0].mxu0
    %v1947 = vadd.f32 %v1877, %v1946
    %v1948 = vpop.f32.mrb[0].mxu0
    %1949 = vdwg.mxu0
    %1950 = vmatprep.subr.mxu0 0.0
    %1951 = vmatpush1.msra.mxu0 %v261
    %1952 = vmatprep.subr.mxu0 0.0
    %1953 = vmatpush1.msra.mxu0 %v262
    %1954 = vmatprep.subr.mxu0 0.0
    %1955 = vmatpush1.msra.mxu0 %v263
    %1956 = vmatprep.subr.mxu0 0.0
    %1957 = vmatpush1.msra.mxu0 %v264
    %1958 = vmatprep.subr.mxu0 0.0
    %1959 = vmatpush1.msra.mxu0 %v265
    %1960 = vmatprep.subr.mxu0 0.0
    %1961 = vmatpush1.msra.mxu0 %v266
    %1962 = vmatprep.subr.mxu0 0.0
    %1963 = vmatpush1.msra.mxu0 %v267
    %1964 = vmatprep.subr.mxu0 0.0
    %1965 = vmatpush1.msra.mxu0 %v268
    %1966 = vmatprep.subr.mxu0 0.0
    %1967 = vmatpush1.msra.mxu0 %v269
    %1968 = vmatprep.subr.mxu0 0.0
    %1969 = vmatpush1.msra.mxu0 %v270
    %1970 = vmatprep.subr.mxu0 0.0
    %1971 = vmatpush1.msra.mxu0 %v271
    %1972 = vmatprep.subr.mxu0 0.0
    %1973 = vmatpush1.msra.mxu0 %v272
    %1974 = vmatprep.subr.mxu0 0.0
    %1975 = vmatpush1.msra.mxu0 %v273
    %1976 = vmatprep.subr.mxu0 0.0
    %1977 = vmatpush1.msra.mxu0 %v274
    %1978 = vmatprep.subr.mxu0 0.0
    %1979 = vmatpush1.msra.mxu0 %v275
    %1980 = vmatprep.subr.mxu0 0.0
    %1981 = vmatpush1.msra.mxu0 %v276
    %1982 = vmatprep.subr.mxu0 0.0
    %1983 = vmatpush1.msra.mxu0 %v277
    %1984 = vmatprep.subr.mxu0 0.0
    %1985 = vmatpush1.msra.mxu0 %v278
    %1986 = vmatprep.subr.mxu0 0.0
    %1987 = vmatpush1.msra.mxu0 %v279
    %1988 = vmatprep.subr.mxu0 0.0
    %1989 = vmatpush1.msra.mxu0 %v280
    %1990 = vmatprep.subr.mxu0 0.0
    %1991 = vmatpush1.msra.mxu0 %v281
    %1992 = vmatprep.subr.mxu0 0.0
    %1993 = vmatpush1.msra.mxu0 %v282
    %1994 = vmatprep.subr.mxu0 0.0
    %1995 = vmatpush1.msra.mxu0 %v283
    %1996 = vmatprep.subr.mxu0 0.0
    %1997 = vmatpush1.msra.mxu0 %v284
    %1998 = vmatprep.subr.mxu0 0.0
    %1999 = vmatpush1.msra.mxu0 %v285
    %2000 = vmatprep.subr.mxu0 0.0
    %2001 = vmatpush1.msra.mxu0 %v286
    %2002 = vmatprep.subr.mxu0 0.0
    %2003 = vmatpush1.msra.mxu0 %v287
    %2004 = vmatprep.subr.mxu0 0.0
    %2005 = vmatpush1.msra.mxu0 %v288
    %2006 = vmatprep.subr.mxu0 0.0
    %2007 = vmatpush1.msra.mxu0 %v289
    %2008 = vmatprep.subr.mxu0 0.0
    %2009 = vmatpush1.msra.mxu0 %v290
    %2010 = vmatprep.subr.mxu0 0.0
    %2011 = vmatpush1.msra.mxu0 %v291
    %2012 = vmatprep.subr.mxu0 0.0
    %2013 = vmatpush1.msra.mxu0 %v292
    %2014 = vmatprep.mubr.f32.mxu0 %v74
    %2015 = vmatmul.mubr.f32.gmra.mrb[0].mxu0 %v73
    %v2016 = vpop.f32.mrb[0].mxu0
    %v2017 = vadd.f32 %v1947, %v2016
    %v2018 = vpop.f32.mrb[0].mxu0
    %2019 = vdwg.mxu0
    %2020 = vmatprep.subr.mxu0 0.0
    %2021 = vmatpush1.msra.mxu0 %v293
    %2022 = vmatprep.subr.mxu0 0.0
    %2023 = vmatpush1.msra.mxu0 %v294
    %2024 = vmatprep.subr.mxu0 0.0
    %2025 = vmatpush1.msra.mxu0 %v295
    %2026 = vmatprep.subr.mxu0 0.0
    %2027 = vmatpush1.msra.mxu0 %v296
    %2028 = vmatprep.subr.mxu0 0.0
    %2029 = vmatpush1.msra.mxu0 %v297
    %2030 = vmatprep.subr.mxu0 0.0
    %2031 = vmatpush1.msra.mxu0 %v298
    %2032 = vmatprep.subr.mxu0 0.0
    %2033 = vmatpush1.msra.mxu0 %v299
    %2034 = vmatprep.subr.mxu0 0.0
    %2035 = vmatpush1.msra.mxu0 %v300
    %2036 = vmatprep.subr.mxu0 0.0
    %2037 = vmatpush1.msra.mxu0 %v301
    %2038 = vmatprep.subr.mxu0 0.0
    %2039 = vmatpush1.msra.mxu0 %v302
    %2040 = vmatprep.subr.mxu0 0.0
    %2041 = vmatpush1.msra.mxu0 %v303
    %2042 = vmatprep.subr.mxu0 0.0
    %2043 = vmatpush1.msra.mxu0 %v304
    %2044 = vmatprep.subr.mxu0 0.0
    %2045 = vmatpush1.msra.mxu0 %v305
    %2046 = vmatprep.subr.mxu0 0.0
    %2047 = vmatpush1.msra.mxu0 %v306
    %2048 = vmatprep.subr.mxu0 0.0
    %2049 = vmatpush1.msra.mxu0 %v307
    %2050 = vmatprep.subr.mxu0 0.0
    %2051 = vmatpush1.msra.mxu0 %v308
    %2052 = vmatprep.subr.mxu0 0.0
    %2053 = vmatpush1.msra.mxu0 %v309
    %2054 = vmatprep.subr.mxu0 0.0
    %2055 = vmatpush1.msra.mxu0 %v310
    %2056 = vmatprep.subr.mxu0 0.0
    %2057 = vmatpush1.msra.mxu0 %v311
    %2058 = vmatprep.subr.mxu0 0.0
    %2059 = vmatpush1.msra.mxu0 %v312
    %2060 = vmatprep.subr.mxu0 0.0
    %2061 = vmatpush1.msra.mxu0 %v313
    %2062 = vmatprep.subr.mxu0 0.0
    %2063 = vmatpush1.msra.mxu0 %v314
    %2064 = vmatprep.subr.mxu0 0.0
    %2065 = vmatpush1.msra.mxu0 %v315
    %2066 = vmatprep.subr.mxu0 0.0
    %2067 = vmatpush1.msra.mxu0 %v316
    %2068 = vmatprep.subr.mxu0 0.0
    %2069 = vmatpush1.msra.mxu0 %v317
    %2070 = vmatprep.subr.mxu0 0.0
    %2071 = vmatpush1.msra.mxu0 %v318
    %2072 = vmatprep.subr.mxu0 0.0
    %2073 = vmatpush1.msra.mxu0 %v319
    %2074 = vmatprep.subr.mxu0 0.0
    %2075 = vmatpush1.msra.mxu0 %v320
    %2076 = vmatprep.subr.mxu0 0.0
    %2077 = vmatpush1.msra.mxu0 %v321
    %2078 = vmatprep.subr.mxu0 0.0
    %2079 = vmatpush1.msra.mxu0 %v322
    %2080 = vmatprep.subr.mxu0 0.0
    %2081 = vmatpush1.msra.mxu0 %v323
    %2082 = vmatprep.subr.mxu0 0.0
    %2083 = vmatpush1.msra.mxu0 %v324
    %2084 = vmatprep.mubr.f32.mxu0 %v76
    %2085 = vmatmul.mubr.f32.gmra.mrb[0].mxu0 %v75
    %v2086 = vpop.f32.mrb[0].mxu0
    %v2087 = vadd.f32 %v2017, %v2086
    %v2088 = vpop.f32.mrb[0].mxu0
    %2089 = vdwg.mxu0
    %2090 = vmatprep.subr.mxu0 0.0
    %2091 = vmatpush1.msra.mxu0 %v325
    %2092 = vmatprep.subr.mxu0 0.0
    %2093 = vmatpush1.msra.mxu0 %v326
    %2094 = vmatprep.subr.mxu0 0.0
    %2095 = vmatpush1.msra.mxu0 %v327
    %2096 = vmatprep.subr.mxu0 0.0
    %2097 = vmatpush1.msra.mxu0 %v328
    %2098 = vmatprep.subr.mxu0 0.0
    %2099 = vmatpush1.msra.mxu0 %v329
    %2100 = vmatprep.subr.mxu0 0.0
    %2101 = vmatpush1.msra.mxu0 %v330
    %2102 = vmatprep.subr.mxu0 0.0
    %2103 = vmatpush1.msra.mxu0 %v331
    %2104 = vmatprep.subr.mxu0 0.0
    %2105 = vmatpush1.msra.mxu0 %v332
    %2106 = vmatprep.subr.mxu0 0.0
    %2107 = vmatpush1.msra.mxu0 %v333
    %2108 = vmatprep.subr.mxu0 0.0
    %2109 = vmatpush1.msra.mxu0 %v334
    %2110 = vmatprep.subr.mxu0 0.0
    %2111 = vmatpush1.msra.mxu0 %v335
    %2112 = vmatprep.subr.mxu0 0.0
    %2113 = vmatpush1.msra.mxu0 %v336
    %2114 = vmatprep.subr.mxu0 0.0
    %2115 = vmatpush1.msra.mxu0 %v337
    %2116 = vmatprep.subr.mxu0 0.0
    %2117 = vmatpush1.msra.mxu0 %v338
    %2118 = vmatprep.subr.mxu0 0.0
    %2119 = vmatpush1.msra.mxu0 %v339
    %2120 = vmatprep.subr.mxu0 0.0
    %2121 = vmatpush1.msra.mxu0 %v340
    %2122 = vmatprep.subr.mxu0 0.0
    %2123 = vmatpush1.msra.mxu0 %v341
    %2124 = vmatprep.subr.mxu0 0.0
    %2125 = vmatpush1.msra.mxu0 %v342
    %2126 = vmatprep.subr.mxu0 0.0
    %2127 = vmatpush1.msra.mxu0 %v343
    %2128 = vmatprep.subr.mxu0 0.0
    %2129 = vmatpush1.msra.mxu0 %v344
    %2130 = vmatprep.subr.mxu0 0.0
    %2131 = vmatpush1.msra.mxu0 %v345
    %2132 = vmatprep.subr.mxu0 0.0
    %2133 = vmatpush1.msra.mxu0 %v346
    %2134 = vmatprep.subr.mxu0 0.0
    %2135 = vmatpush1.msra.mxu0 %v347
    %2136 = vmatprep.subr.mxu0 0.0
    %2137 = vmatpush1.msra.mxu0 %v348
    %2138 = vmatprep.subr.mxu0 0.0
    %2139 = vmatpush1.msra.mxu0 %v349
    %2140 = vmatprep.subr.mxu0 0.0
    %2141 = vmatpush1.msra.mxu0 %v350
    %2142 = vmatprep.subr.mxu0 0.0
    %2143 = vmatpush1.msra.mxu0 %v351
    %2144 = vmatprep.subr.mxu0 0.0
    %2145 = vmatpush1.msra.mxu0 %v352
    %2146 = vmatprep.subr.mxu0 0.0
    %2147 = vmatpush1.msra.mxu0 %v353
    %2148 = vmatprep.subr.mxu0 0.0
    %2149 = vmatpush1.msra.mxu0 %v354
    %2150 = vmatprep.subr.mxu0 0.0
    %2151 = vmatpush1.msra.mxu0 %v355
    %2152 = vmatprep.subr.mxu0 0.0
    %2153 = vmatpush1.msra.mxu0 %v356
    %2154 = vmatprep.mubr.f32.mxu0 %v78
    %2155 = vmatmul.mubr.f32.gmra.mrb[0].mxu0 %v77
    %v2156 = vpop.f32.mrb[0].mxu0
    %v2157 = vadd.f32 %v2087, %v2156
    %v2158 = vpop.f32.mrb[0].mxu0
    %2159 = vdwg.mxu0
    %2160 = vmatprep.subr.mxu0 0.0
    %2161 = vmatpush1.msra.mxu0 %v357
    %2162 = vmatprep.subr.mxu0 0.0
    %2163 = vmatpush1.msra.mxu0 %v358
    %2164 = vmatprep.subr.mxu0 0.0
    %2165 = vmatpush1.msra.mxu0 %v359
    %2166 = vmatprep.subr.mxu0 0.0
    %2167 = vmatpush1.msra.mxu0 %v360
    %2168 = vmatprep.subr.mxu0 0.0
    %2169 = vmatpush1.msra.mxu0 %v361
    %2170 = vmatprep.subr.mxu0 0.0
    %2171 = vmatpush1.msra.mxu0 %v362
    %2172 = vmatprep.subr.mxu0 0.0
    %2173 = vmatpush1.msra.mxu0 %v363
    %2174 = vmatprep.subr.mxu0 0.0
    %2175 = vmatpush1.msra.mxu0 %v364
    %2176 = vmatprep.subr.mxu0 0.0
    %2177 = vmatpush1.msra.mxu0 %v365
    %2178 = vmatprep.subr.mxu0 0.0
    %2179 = vmatpush1.msra.mxu0 %v366
    %2180 = vmatprep.subr.mxu0 0.0
    %2181 = vmatpush1.msra.mxu0 %v367
    %2182 = vmatprep.subr.mxu0 0.0
    %2183 = vmatpush1.msra.mxu0 %v368
    %2184 = vmatprep.subr.mxu0 0.0
    %2185 = vmatpush1.msra.mxu0 %v369
    %2186 = vmatprep.subr.mxu0 0.0
    %2187 = vmatpush1.msra.mxu0 %v370
    %2188 = vmatprep.subr.mxu0 0.0
    %2189 = vmatpush1.msra.mxu0 %v371
    %2190 = vmatprep.subr.mxu0 0.0
    %2191 = vmatpush1.msra.mxu0 %v372
    %2192 = vmatprep.subr.mxu0 0.0
    %2193 = vmatpush1.msra.mxu0 %v373
    %2194 = vmatprep.subr.mxu0 0.0
    %2195 = vmatpush1.msra.mxu0 %v374
    %2196 = vmatprep.subr.mxu0 0.0
    %2197 = vmatpush1.msra.mxu0 %v375
    %2198 = vmatprep.subr.mxu0 0.0
    %2199 = vmatpush1.msra.mxu0 %v376
    %2200 = vmatprep.subr.mxu0 0.0
    %2201 = vmatpush1.msra.mxu0 %v377
    %2202 = vmatprep.subr.mxu0 0.0
    %2203 = vmatpush1.msra.mxu0 %v378
    %2204 = vmatprep.subr.mxu0 0.0
    %2205 = vmatpush1.msra.mxu0 %v379
    %2206 = vmatprep.subr.mxu0 0.0
    %2207 = vmatpush1.msra.mxu0 %v380
    %2208 = vmatprep.subr.mxu0 0.0
    %2209 = vmatpush1.msra.mxu0 %v381
    %2210 = vmatprep.subr.mxu0 0.0
    %2211 = vmatpush1.msra.mxu0 %v382
    %2212 = vmatprep.subr.mxu0 0.0
    %2213 = vmatpush1.msra.mxu0 %v383
    %2214 = vmatprep.subr.mxu0 0.0
    %2215 = vmatpush1.msra.mxu0 %v384
    %2216 = vmatprep.subr.mxu0 0.0
    %2217 = vmatpush1.msra.mxu0 %v385
    %2218 = vmatprep.subr.mxu0 0.0
    %2219 = vmatpush1.msra.mxu0 %v386
    %2220 = vmatprep.subr.mxu0 0.0
    %2221 = vmatpush1.msra.mxu0 %v387
    %2222 = vmatprep.subr.mxu0 0.0
    %2223 = vmatpush1.msra.mxu0 %v388
    %2224 = vmatprep.mubr.f32.mxu0 %v80
    %2225 = vmatmul.mubr.f32.gmra.mrb[0].mxu0 %v79
    %v2226 = vpop.f32.mrb[0].mxu0
    %v2227 = vadd.f32 %v2157, %v2226
    %v2228 = vpop.f32.mrb[0].mxu0
    %2229 = vdwg.mxu0
    %2230 = vmatprep.subr.mxu0 0.0
    %2231 = vmatpush1.msra.mxu0 %v389
    %2232 = vmatprep.subr.mxu0 0.0
    %2233 = vmatpush1.msra.mxu0 %v390
    %2234 = vmatprep.subr.mxu0 0.0
    %2235 = vmatpush1.msra.mxu0 %v391
    %2236 = vmatprep.subr.mxu0 0.0
    %2237 = vmatpush1.msra.mxu0 %v392
    %2238 = vmatprep.subr.mxu0 0.0
    %2239 = vmatpush1.msra.mxu0 %v393
    %2240 = vmatprep.subr.mxu0 0.0
    %2241 = vmatpush1.msra.mxu0 %v394
    %2242 = vmatprep.subr.mxu0 0.0
    %2243 = vmatpush1.msra.mxu0 %v395
    %2244 = vmatprep.subr.mxu0 0.0
    %2245 = vmatpush1.msra.mxu0 %v396
    %2246 = vmatprep.subr.mxu0 0.0
    %2247 = vmatpush1.msra.mxu0 %v397
    %2248 = vmatprep.subr.mxu0 0.0
    %2249 = vmatpush1.msra.mxu0 %v398
    %2250 = vmatprep.subr.mxu0 0.0
    %2251 = vmatpush1.msra.mxu0 %v399
    %2252 = vmatprep.subr.mxu0 0.0
    %2253 = vmatpush1.msra.mxu0 %v400
    %2254 = vmatprep.subr.mxu0 0.0
    %2255 = vmatpush1.msra.mxu0 %v401
    %2256 = vmatprep.subr.mxu0 0.0
    %2257 = vmatpush1.msra.mxu0 %v402
    %2258 = vmatprep.subr.mxu0 0.0
    %2259 = vmatpush1.msra.mxu0 %v403
    %2260 = vmatprep.subr.mxu0 0.0
    %2261 = vmatpush1.msra.mxu0 %v404
    %2262 = vmatprep.subr.mxu0 0.0
    %2263 = vmatpush1.msra.mxu0 %v405
    %2264 = vmatprep.subr.mxu0 0.0
    %2265 = vmatpush1.msra.mxu0 %v406
    %2266 = vmatprep.subr.mxu0 0.0
    %2267 = vmatpush1.msra.mxu0 %v407
    %2268 = vmatprep.subr.mxu0 0.0
    %2269 = vmatpush1.msra.mxu0 %v408
    %2270 = vmatprep.subr.mxu0 0.0
    %2271 = vmatpush1.msra.mxu0 %v409
    %2272 = vmatprep.subr.mxu0 0.0
    %2273 = vmatpush1.msra.mxu0 %v410
    %2274 = vmatprep.subr.mxu0 0.0
    %2275 = vmatpush1.msra.mxu0 %v411
    %2276 = vmatprep.subr.mxu0 0.0
    %2277 = vmatpush1.msra.mxu0 %v412
    %2278 = vmatprep.subr.mxu0 0.0
    %2279 = vmatpush1.msra.mxu0 %v413
    %2280 = vmatprep.subr.mxu0 0.0
    %2281 = vmatpush1.msra.mxu0 %v414
    %2282 = vmatprep.subr.mxu0 0.0
    %2283 = vmatpush1.msra.mxu0 %v415
    %2284 = vmatprep.subr.mxu0 0.0
    %2285 = vmatpush1.msra.mxu0 %v416
    %2286 = vmatprep.subr.mxu0 0.0
    %2287 = vmatpush1.msra.mxu0 %v417
    %2288 = vmatprep.subr.mxu0 0.0
    %2289 = vmatpush1.msra.mxu0 %v418
    %2290 = vmatprep.subr.mxu0 0.0
    %2291 = vmatpush1.msra.mxu0 %v419
    %2292 = vmatprep.subr.mxu0 0.0
    %2293 = vmatpush1.msra.mxu0 %v420
    %2294 = vmatprep.mubr.f32.mxu0 %v82
    %2295 = vmatmul.mubr.f32.gmra.mrb[0].mxu0 %v81
    %v2296 = vpop.f32.mrb[0].mxu0
    %v2297 = vadd.f32 %v2227, %v2296
    %v2298 = vpop.f32.mrb[0].mxu0
    %2299 = vdwg.mxu0
    %2300 = vmatprep.subr.mxu0 0.0
    %2301 = vmatpush1.msra.mxu0 %v421
    %2302 = vmatprep.subr.mxu0 0.0
    %2303 = vmatpush1.msra.mxu0 %v422
    %2304 = vmatprep.subr.mxu0 0.0
    %2305 = vmatpush1.msra.mxu0 %v423
    %2306 = vmatprep.subr.mxu0 0.0
    %2307 = vmatpush1.msra.mxu0 %v424
    %2308 = vmatprep.subr.mxu0 0.0
    %2309 = vmatpush1.msra.mxu0 %v425
    %2310 = vmatprep.subr.mxu0 0.0
    %2311 = vmatpush1.msra.mxu0 %v426
    %2312 = vmatprep.subr.mxu0 0.0
    %2313 = vmatpush1.msra.mxu0 %v427
    %2314 = vmatprep.subr.mxu0 0.0
    %2315 = vmatpush1.msra.mxu0 %v428
    %2316 = vmatprep.subr.mxu0 0.0
    %2317 = vmatpush1.msra.mxu0 %v429
    %2318 = vmatprep.subr.mxu0 0.0
    %2319 = vmatpush1.msra.mxu0 %v430
    %2320 = vmatprep.subr.mxu0 0.0
    %2321 = vmatpush1.msra.mxu0 %v431
    %2322 = vmatprep.subr.mxu0 0.0
    %2323 = vmatpush1.msra.mxu0 %v432
    %2324 = vmatprep.subr.mxu0 0.0
    %2325 = vmatpush1.msra.mxu0 %v433
    %2326 = vmatprep.subr.mxu0 0.0
    %2327 = vmatpush1.msra.mxu0 %v434
    %2328 = vmatprep.subr.mxu0 0.0
    %2329 = vmatpush1.msra.mxu0 %v435
    %2330 = vmatprep.subr.mxu0 0.0
    %2331 = vmatpush1.msra.mxu0 %v436
    %2332 = vmatprep.subr.mxu0 0.0
    %2333 = vmatpush1.msra.mxu0 %v437
    %2334 = vmatprep.subr.mxu0 0.0
    %2335 = vmatpush1.msra.mxu0 %v438
    %2336 = vmatprep.subr.mxu0 0.0
    %2337 = vmatpush1.msra.mxu0 %v439
    %2338 = vmatprep.subr.mxu0 0.0
    %2339 = vmatpush1.msra.mxu0 %v440
    %2340 = vmatprep.subr.mxu0 0.0
    %2341 = vmatpush1.msra.mxu0 %v441
    %2342 = vmatprep.subr.mxu0 0.0
    %2343 = vmatpush1.msra.mxu0 %v442
    %2344 = vmatprep.subr.mxu0 0.0
    %2345 = vmatpush1.msra.mxu0 %v443
    %2346 = vmatprep.subr.mxu0 0.0
    %2347 = vmatpush1.msra.mxu0 %v444
    %2348 = vmatprep.subr.mxu0 0.0
    %2349 = vmatpush1.msra.mxu0 %v445
    %2350 = vmatprep.subr.mxu0 0.0
    %2351 = vmatpush1.msra.mxu0 %v446
    %2352 = vmatprep.subr.mxu0 0.0
    %2353 = vmatpush1.msra.mxu0 %v447
    %2354 = vmatprep.subr.mxu0 0.0
    %2355 = vmatpush1.msra.mxu0 %v448
    %2356 = vmatprep.subr.mxu0 0.0
    %2357 = vmatpush1.msra.mxu0 %v449
    %2358 = vmatprep.subr.mxu0 0.0
    %2359 = vmatpush1.msra.mxu0 %v450
    %2360 = vmatprep.subr.mxu0 0.0
    %2361 = vmatpush1.msra.mxu0 %v451
    %2362 = vmatprep.subr.mxu0 0.0
    %2363 = vmatpush1.msra.mxu0 %v452
    %2364 = vmatprep.mubr.f32.mxu0 %v84
    %2365 = vmatmul.mubr.f32.gmra.mrb[0].mxu0 %v83
    %v2366 = vpop.f32.mrb[0].mxu0
    %v2367 = vadd.f32 %v2297, %v2366
    %v2368 = vpop.f32.mrb[0].mxu0
    %2369 = vdwg.mxu0
    %2370 = vmatprep.subr.mxu0 0.0
    %2371 = vmatpush1.msra.mxu0 %v453
    %2372 = vmatprep.subr.mxu0 0.0
    %2373 = vmatpush1.msra.mxu0 %v454
    %2374 = vmatprep.subr.mxu0 0.0
    %2375 = vmatpush1.msra.mxu0 %v455
    %2376 = vmatprep.subr.mxu0 0.0
    %2377 = vmatpush1.msra.mxu0 %v456
    %2378 = vmatprep.subr.mxu0 0.0
    %2379 = vmatpush1.msra.mxu0 %v457
    %2380 = vmatprep.subr.mxu0 0.0
    %2381 = vmatpush1.msra.mxu0 %v458
    %2382 = vmatprep.subr.mxu0 0.0
    %2383 = vmatpush1.msra.mxu0 %v459
    %2384 = vmatprep.subr.mxu0 0.0
    %2385 = vmatpush1.msra.mxu0 %v460
    %2386 = vmatprep.subr.mxu0 0.0
    %2387 = vmatpush1.msra.mxu0 %v461
    %2388 = vmatprep.subr.mxu0 0.0
    %2389 = vmatpush1.msra.mxu0 %v462
    %2390 = vmatprep.subr.mxu0 0.0
    %2391 = vmatpush1.msra.mxu0 %v463
    %2392 = vmatprep.subr.mxu0 0.0
    %2393 = vmatpush1.msra.mxu0 %v464
    %2394 = vmatprep.subr.mxu0 0.0
    %2395 = vmatpush1.msra.mxu0 %v465
    %2396 = vmatprep.subr.mxu0 0.0
    %2397 = vmatpush1.msra.mxu0 %v466
    %2398 = vmatprep.subr.mxu0 0.0
    %2399 = vmatpush1.msra.mxu0 %v467
    %2400 = vmatprep.subr.mxu0 0.0
    %2401 = vmatpush1.msra.mxu0 %v468
    %2402 = vmatprep.subr.mxu0 0.0
    %2403 = vmatpush1.msra.mxu0 %v469
    %2404 = vmatprep.subr.mxu0 0.0
    %2405 = vmatpush1.msra.mxu0 %v470
    %2406 = vmatprep.subr.mxu0 0.0
    %2407 = vmatpush1.msra.mxu0 %v471
    %2408 = vmatprep.subr.mxu0 0.0
    %2409 = vmatpush1.msra.mxu0 %v472
    %2410 = vmatprep.subr.mxu0 0.0
    %2411 = vmatpush1.msra.mxu0 %v473
    %2412 = vmatprep.subr.mxu0 0.0
    %2413 = vmatpush1.msra.mxu0 %v474
    %2414 = vmatprep.subr.mxu0 0.0
    %2415 = vmatpush1.msra.mxu0 %v475
    %2416 = vmatprep.subr.mxu0 0.0
    %2417 = vmatpush1.msra.mxu0 %v476
    %2418 = vmatprep.subr.mxu0 0.0
    %2419 = vmatpush1.msra.mxu0 %v477
    %2420 = vmatprep.subr.mxu0 0.0
    %2421 = vmatpush1.msra.mxu0 %v478
    %2422 = vmatprep.subr.mxu0 0.0
    %2423 = vmatpush1.msra.mxu0 %v479
    %2424 = vmatprep.subr.mxu0 0.0
    %2425 = vmatpush1.msra.mxu0 %v480
    %2426 = vmatprep.subr.mxu0 0.0
    %2427 = vmatpush1.msra.mxu0 %v481
    %2428 = vmatprep.subr.mxu0 0.0
    %2429 = vmatpush1.msra.mxu0 %v482
    %2430 = vmatprep.subr.mxu0 0.0
    %2431 = vmatpush1.msra.mxu0 %v483
    %2432 = vmatprep.subr.mxu0 0.0
    %2433 = vmatpush1.msra.mxu0 %v484
    %2434 = vmatprep.mubr.f32.mxu0 %v86
    %2435 = vmatmul.mubr.f32.gmra.mrb[0].mxu0 %v85
    %v2436 = vpop.f32.mrb[0].mxu0
    %v2437 = vadd.f32 %v2367, %v2436
    %v2438 = vpop.f32.mrb[0].mxu0
    %2439 = vdwg.mxu0
    %2440 = vmatprep.subr.mxu0 0.0
    %2441 = vmatpush1.msra.mxu0 %v485
    %2442 = vmatprep.subr.mxu0 0.0
    %2443 = vmatpush1.msra.mxu0 %v486
    %2444 = vmatprep.subr.mxu0 0.0
    %2445 = vmatpush1.msra.mxu0 %v487
    %2446 = vmatprep.subr.mxu0 0.0
    %2447 = vmatpush1.msra.mxu0 %v488
    %2448 = vmatprep.subr.mxu0 0.0
    %2449 = vmatpush1.msra.mxu0 %v489
    %2450 = vmatprep.subr.mxu0 0.0
    %2451 = vmatpush1.msra.mxu0 %v490
    %2452 = vmatprep.subr.mxu0 0.0
    %2453 = vmatpush1.msra.mxu0 %v491
    %2454 = vmatprep.subr.mxu0 0.0
    %2455 = vmatpush1.msra.mxu0 %v492
    %2456 = vmatprep.subr.mxu0 0.0
    %2457 = vmatpush1.msra.mxu0 %v493
    %2458 = vmatprep.subr.mxu0 0.0
    %2459 = vmatpush1.msra.mxu0 %v494
    %2460 = vmatprep.subr.mxu0 0.0
    %2461 = vmatpush1.msra.mxu0 %v495
    %2462 = vmatprep.subr.mxu0 0.0
    %2463 = vmatpush1.msra.mxu0 %v496
    %2464 = vmatprep.subr.mxu0 0.0
    %2465 = vmatpush1.msra.mxu0 %v497
    %2466 = vmatprep.subr.mxu0 0.0
    %2467 = vmatpush1.msra.mxu0 %v498
    %2468 = vmatprep.subr.mxu0 0.0
    %2469 = vmatpush1.msra.mxu0 %v499
    %2470 = vmatprep.subr.mxu0 0.0
    %2471 = vmatpush1.msra.mxu0 %v500
    %2472 = vmatprep.subr.mxu0 0.0
    %2473 = vmatpush1.msra.mxu0 %v501
    %2474 = vmatprep.subr.mxu0 0.0
    %2475 = vmatpush1.msra.mxu0 %v502
    %2476 = vmatprep.subr.mxu0 0.0
    %2477 = vmatpush1.msra.mxu0 %v503
    %2478 = vmatprep.subr.mxu0 0.0
    %2479 = vmatpush1.msra.mxu0 %v504
    %2480 = vmatprep.subr.mxu0 0.0
    %2481 = vmatpush1.msra.mxu0 %v505
    %2482 = vmatprep.subr.mxu0 0.0
    %2483 = vmatpush1.msra.mxu0 %v506
    %2484 = vmatprep.subr.mxu0 0.0
    %2485 = vmatpush1.msra.mxu0 %v507
    %2486 = vmatprep.subr.mxu0 0.0
    %2487 = vmatpush1.msra.mxu0 %v508
    %2488 = vmatprep.subr.mxu0 0.0
    %2489 = vmatpush1.msra.mxu0 %v509
    %2490 = vmatprep.subr.mxu0 0.0
    %2491 = vmatpush1.msra.mxu0 %v510
    %2492 = vmatprep.subr.mxu0 0.0
    %2493 = vmatpush1.msra.mxu0 %v511
    %2494 = vmatprep.subr.mxu0 0.0
    %2495 = vmatpush1.msra.mxu0 %v512
    %2496 = vmatprep.subr.mxu0 0.0
    %2497 = vmatpush1.msra.mxu0 %v513
    %2498 = vmatprep.subr.mxu0 0.0
    %2499 = vmatpush1.msra.mxu0 %v514
    %2500 = vmatprep.subr.mxu0 0.0
    %2501 = vmatpush1.msra.mxu0 %v515
    %2502 = vmatprep.subr.mxu0 0.0
    %2503 = vmatpush1.msra.mxu0 %v516
    %2504 = vmatprep.mubr.f32.mxu0 %v88
    %2505 = vmatmul.mubr.f32.gmra.mrb[0].mxu0 %v87
    %v2506 = vpop.f32.mrb[0].mxu0
    %v2507 = vadd.f32 %v2437, %v2506
    %v2508 = vpop.f32.mrb[0].mxu0
    %2509 = vdwg.mxu0
    %2510 = vmatprep.subr.mxu0 0.0
    %2511 = vmatpush1.msra.mxu0 %v517
    %2512 = vmatprep.subr.mxu0 0.0
    %2513 = vmatpush1.msra.mxu0 %v518
    %2514 = vmatprep.subr.mxu0 0.0
    %2515 = vmatpush1.msra.mxu0 %v519
    %2516 = vmatprep.subr.mxu0 0.0
    %2517 = vmatpush1.msra.mxu0 %v520
    %2518 = vmatprep.subr.mxu0 0.0
    %2519 = vmatpush1.msra.mxu0 %v521
    %2520 = vmatprep.subr.mxu0 0.0
    %2521 = vmatpush1.msra.mxu0 %v522
    %2522 = vmatprep.subr.mxu0 0.0
    %2523 = vmatpush1.msra.mxu0 %v523
    %2524 = vmatprep.subr.mxu0 0.0
    %2525 = vmatpush1.msra.mxu0 %v524
    %2526 = vmatprep.subr.mxu0 0.0
    %2527 = vmatpush1.msra.mxu0 %v525
    %2528 = vmatprep.subr.mxu0 0.0
    %2529 = vmatpush1.msra.mxu0 %v526
    %2530 = vmatprep.subr.mxu0 0.0
    %2531 = vmatpush1.msra.mxu0 %v527
    %2532 = vmatprep.subr.mxu0 0.0
    %2533 = vmatpush1.msra.mxu0 %v528
    %2534 = vmatprep.subr.mxu0 0.0
    %2535 = vmatpush1.msra.mxu0 %v529
    %2536 = vmatprep.subr.mxu0 0.0
    %2537 = vmatpush1.msra.mxu0 %v530
    %2538 = vmatprep.subr.mxu0 0.0
    %2539 = vmatpush1.msra.mxu0 %v531
    %2540 = vmatprep.subr.mxu0 0.0
    %2541 = vmatpush1.msra.mxu0 %v532
    %2542 = vmatprep.subr.mxu0 0.0
    %2543 = vmatpush1.msra.mxu0 %v533
    %2544 = vmatprep.subr.mxu0 0.0
    %2545 = vmatpush1.msra.mxu0 %v534
    %2546 = vmatprep.subr.mxu0 0.0
    %2547 = vmatpush1.msra.mxu0 %v535
    %2548 = vmatprep.subr.mxu0 0.0
    %2549 = vmatpush1.msra.mxu0 %v536
    %2550 = vmatprep.subr.mxu0 0.0
    %2551 = vmatpush1.msra.mxu0 %v537
    %2552 = vmatprep.subr.mxu0 0.0
    %2553 = vmatpush1.msra.mxu0 %v538
    %2554 = vmatprep.subr.mxu0 0.0
    %2555 = vmatpush1.msra.mxu0 %v539
    %2556 = vmatprep.subr.mxu0 0.0
    %2557 = vmatpush1.msra.mxu0 %v540
    %2558 = vmatprep.subr.mxu0 0.0
    %2559 = vmatpush1.msra.mxu0 %v541
    %2560 = vmatprep.subr.mxu0 0.0
    %2561 = vmatpush1.msra.mxu0 %v542
    %2562 = vmatprep.subr.mxu0 0.0
    %2563 = vmatpush1.msra.mxu0 %v543
    %2564 = vmatprep.subr.mxu0 0.0
    %2565 = vmatpush1.msra.mxu0 %v544
    %2566 = vmatprep.subr.mxu0 0.0
    %2567 = vmatpush1.msra.mxu0 %v545
    %2568 = vmatprep.subr.mxu0 0.0
    %2569 = vmatpush1.msra.mxu0 %v546
    %2570 = vmatprep.subr.mxu0 0.0
    %2571 = vmatpush1.msra.mxu0 %v547
    %2572 = vmatprep.subr.mxu0 0.0
    %2573 = vmatpush1.msra.mxu0 %v548
    %2574 = vmatprep.mubr.f32.mxu0 %v90
    %2575 = vmatmul.mubr.f32.gmra.mrb[0].mxu0 %v89
    %v2576 = vpop.f32.mrb[0].mxu0
    %v2577 = vadd.f32 %v2507, %v2576
    %v2578 = vpop.f32.mrb[0].mxu0
    %2579 = vdwg.mxu0
    %2580 = vmatprep.subr.mxu0 0.0
    %2581 = vmatpush1.msra.mxu0 %v549
    %2582 = vmatprep.subr.mxu0 0.0
    %2583 = vmatpush1.msra.mxu0 %v550
    %2584 = vmatprep.subr.mxu0 0.0
    %2585 = vmatpush1.msra.mxu0 %v551
    %2586 = vmatprep.subr.mxu0 0.0
    %2587 = vmatpush1.msra.mxu0 %v552
    %2588 = vmatprep.subr.mxu0 0.0
    %2589 = vmatpush1.msra.mxu0 %v553
    %2590 = vmatprep.subr.mxu0 0.0
    %2591 = vmatpush1.msra.mxu0 %v554
    %2592 = vmatprep.subr.mxu0 0.0
    %2593 = vmatpush1.msra.mxu0 %v555
    %2594 = vmatprep.subr.mxu0 0.0
    %2595 = vmatpush1.msra.mxu0 %v556
    %2596 = vmatprep.subr.mxu0 0.0
    %2597 = vmatpush1.msra.mxu0 %v557
    %2598 = vmatprep.subr.mxu0 0.0
    %2599 = vmatpush1.msra.mxu0 %v558
    %2600 = vmatprep.subr.mxu0 0.0
    %2601 = vmatpush1.msra.mxu0 %v559
    %2602 = vmatprep.subr.mxu0 0.0
    %2603 = vmatpush1.msra.mxu0 %v560
    %2604 = vmatprep.subr.mxu0 0.0
    %2605 = vmatpush1.msra.mxu0 %v561
    %2606 = vmatprep.subr.mxu0 0.0
    %2607 = vmatpush1.msra.mxu0 %v562
    %2608 = vmatprep.subr.mxu0 0.0
    %2609 = vmatpush1.msra.mxu0 %v563
    %2610 = vmatprep.subr.mxu0 0.0
    %2611 = vmatpush1.msra.mxu0 %v564
    %2612 = vmatprep.subr.mxu0 0.0
    %2613 = vmatpush1.msra.mxu0 %v565
    %2614 = vmatprep.subr.mxu0 0.0
    %2615 = vmatpush1.msra.mxu0 %v566
    %2616 = vmatprep.subr.mxu0 0.0
    %2617 = vmatpush1.msra.mxu0 %v567
    %2618 = vmatprep.subr.mxu0 0.0
    %2619 = vmatpush1.msra.mxu0 %v568
    %2620 = vmatprep.subr.mxu0 0.0
    %2621 = vmatpush1.msra.mxu0 %v569
    %2622 = vmatprep.subr.mxu0 0.0
    %2623 = vmatpush1.msra.mxu0 %v570
    %2624 = vmatprep.subr.mxu0 0.0
    %2625 = vmatpush1.msra.mxu0 %v571
    %2626 = vmatprep.subr.mxu0 0.0
    %2627 = vmatpush1.msra.mxu0 %v572
    %2628 = vmatprep.subr.mxu0 0.0
    %2629 = vmatpush1.msra.mxu0 %v573
    %2630 = vmatprep.subr.mxu0 0.0
    %2631 = vmatpush1.msra.mxu0 %v574
    %2632 = vmatprep.subr.mxu0 0.0
    %2633 = vmatpush1.msra.mxu0 %v575
    %2634 = vmatprep.subr.mxu0 0.0
    %2635 = vmatpush1.msra.mxu0 %v576
    %2636 = vmatprep.subr.mxu0 0.0
    %2637 = vmatpush1.msra.mxu0 %v577
    %2638 = vmatprep.subr.mxu0 0.0
    %2639 = vmatpush1.msra.mxu0 %v578
    %2640 = vmatprep.subr.mxu0 0.0
    %2641 = vmatpush1.msra.mxu0 %v579
    %2642 = vmatprep.subr.mxu0 0.0
    %2643 = vmatpush1.msra.mxu0 %v580
    %2644 = vmatprep.mubr.f32.mxu0 %v92
    %2645 = vmatmul.mubr.f32.gmra.mrb[0].mxu0 %v91
    %v2646 = vpop.f32.mrb[0].mxu0
    %v2647 = vadd.f32 %v2577, %v2646
    %v2648 = vpop.f32.mrb[0].mxu0
    %2649 = vdwg.mxu0
    %2650 = vmatprep.subr.mxu0 0.0
    %2651 = vmatpush1.msra.mxu0 %v581
    %2652 = vmatprep.subr.mxu0 0.0
    %2653 = vmatpush1.msra.mxu0 %v582
    %2654 = vmatprep.subr.mxu0 0.0
    %2655 = vmatpush1.msra.mxu0 %v583
    %2656 = vmatprep.subr.mxu0 0.0
    %2657 = vmatpush1.msra.mxu0 %v584
    %2658 = vmatprep.subr.mxu0 0.0
    %2659 = vmatpush1.msra.mxu0 %v585
    %2660 = vmatprep.subr.mxu0 0.0
    %2661 = vmatpush1.msra.mxu0 %v586
    %2662 = vmatprep.subr.mxu0 0.0
    %2663 = vmatpush1.msra.mxu0 %v587
    %2664 = vmatprep.subr.mxu0 0.0
    %2665 = vmatpush1.msra.mxu0 %v588
    %2666 = vmatprep.subr.mxu0 0.0
    %2667 = vmatpush1.msra.mxu0 %v589
    %2668 = vmatprep.subr.mxu0 0.0
    %2669 = vmatpush1.msra.mxu0 %v590
    %2670 = vmatprep.subr.mxu0 0.0
    %2671 = vmatpush1.msra.mxu0 %v591
    %2672 = vmatprep.subr.mxu0 0.0
    %2673 = vmatpush1.msra.mxu0 %v592
    %2674 = vmatprep.subr.mxu0 0.0
    %2675 = vmatpush1.msra.mxu0 %v593
    %2676 = vmatprep.subr.mxu0 0.0
    %2677 = vmatpush1.msra.mxu0 %v594
    %2678 = vmatprep.subr.mxu0 0.0
    %2679 = vmatpush1.msra.mxu0 %v595
    %2680 = vmatprep.subr.mxu0 0.0
    %2681 = vmatpush1.msra.mxu0 %v596
    %2682 = vmatprep.subr.mxu0 0.0
    %2683 = vmatpush1.msra.mxu0 %v597
    %2684 = vmatprep.subr.mxu0 0.0
    %2685 = vmatpush1.msra.mxu0 %v598
    %2686 = vmatprep.subr.mxu0 0.0
    %2687 = vmatpush1.msra.mxu0 %v599
    %2688 = vmatprep.subr.mxu0 0.0
    %2689 = vmatpush1.msra.mxu0 %v600
    %2690 = vmatprep.subr.mxu0 0.0
    %2691 = vmatpush1.msra.mxu0 %v601
    %2692 = vmatprep.subr.mxu0 0.0
    %2693 = vmatpush1.msra.mxu0 %v602
    %2694 = vmatprep.subr.mxu0 0.0
    %2695 = vmatpush1.msra.mxu0 %v603
    %2696 = vmatprep.subr.mxu0 0.0
    %2697 = vmatpush1.msra.mxu0 %v604
    %2698 = vmatprep.subr.mxu0 0.0
    %2699 = vmatpush1.msra.mxu0 %v605
    %2700 = vmatprep.subr.mxu0 0.0
    %2701 = vmatpush1.msra.mxu0 %v606
    %2702 = vmatprep.subr.mxu0 0.0
    %2703 = vmatpush1.msra.mxu0 %v607
    %2704 = vmatprep.subr.mxu0 0.0
    %2705 = vmatpush1.msra.mxu0 %v608
    %2706 = vmatprep.subr.mxu0 0.0
    %2707 = vmatpush1.msra.mxu0 %v609
    %2708 = vmatprep.subr.mxu0 0.0
    %2709 = vmatpush1.msra.mxu0 %v610
    %2710 = vmatprep.subr.mxu0 0.0
    %2711 = vmatpush1.msra.mxu0 %v611
    %2712 = vmatprep.subr.mxu0 0.0
    %2713 = vmatpush1.msra.mxu0 %v612
    %2714 = vmatprep.mubr.f32.mxu0 %v94
    %2715 = vmatmul.mubr.f32.gmra.mrb[0].mxu0 %v93
    %v2716 = vpop.f32.mrb[0].mxu0
    %v2717 = vadd.f32 %v2647, %v2716
    %v2718 = vpop.f32.mrb[0].mxu0
    %2719 = vdwg.mxu0
    %2720 = vmatprep.subr.mxu0 0.0
    %2721 = vmatpush1.msra.mxu0 %v613
    %2722 = vmatprep.subr.mxu0 0.0
    %2723 = vmatpush1.msra.mxu0 %v614
    %2724 = vmatprep.subr.mxu0 0.0
    %2725 = vmatpush1.msra.mxu0 %v615
    %2726 = vmatprep.subr.mxu0 0.0
    %2727 = vmatpush1.msra.mxu0 %v616
    %2728 = vmatprep.subr.mxu0 0.0
    %2729 = vmatpush1.msra.mxu0 %v617
    %2730 = vmatprep.subr.mxu0 0.0
    %2731 = vmatpush1.msra.mxu0 %v618
    %2732 = vmatprep.subr.mxu0 0.0
    %2733 = vmatpush1.msra.mxu0 %v619
    %2734 = vmatprep.subr.mxu0 0.0
    %2735 = vmatpush1.msra.mxu0 %v620
    %2736 = vmatprep.subr.mxu0 0.0
    %2737 = vmatpush1.msra.mxu0 %v621
    %2738 = vmatprep.subr.mxu0 0.0
    %2739 = vmatpush1.msra.mxu0 %v622
    %2740 = vmatprep.subr.mxu0 0.0
    %2741 = vmatpush1.msra.mxu0 %v623
    %2742 = vmatprep.subr.mxu0 0.0
    %2743 = vmatpush1.msra.mxu0 %v624
    %2744 = vmatprep.subr.mxu0 0.0
    %2745 = vmatpush1.msra.mxu0 %v625
    %2746 = vmatprep.subr.mxu0 0.0
    %2747 = vmatpush1.msra.mxu0 %v626
    %2748 = vmatprep.subr.mxu0 0.0
    %2749 = vmatpush1.msra.mxu0 %v627
    %2750 = vmatprep.subr.mxu0 0.0
    %2751 = vmatpush1.msra.mxu0 %v628
    %2752 = vmatprep.subr.mxu0 0.0
    %2753 = vmatpush1.msra.mxu0 %v629
    %2754 = vmatprep.subr.mxu0 0.0
    %2755 = vmatpush1.msra.mxu0 %v630
    %2756 = vmatprep.subr.mxu0 0.0
    %2757 = vmatpush1.msra.mxu0 %v631
    %2758 = vmatprep.subr.mxu0 0.0
    %2759 = vmatpush1.msra.mxu0 %v632
    %2760 = vmatprep.subr.mxu0 0.0
    %2761 = vmatpush1.msra.mxu0 %v633
    %2762 = vmatprep.subr.mxu0 0.0
    %2763 = vmatpush1.msra.mxu0 %v634
    %2764 = vmatprep.subr.mxu0 0.0
    %2765 = vmatpush1.msra.mxu0 %v635
    %2766 = vmatprep.subr.mxu0 0.0
    %2767 = vmatpush1.msra.mxu0 %v636
    %2768 = vmatprep.subr.mxu0 0.0
    %2769 = vmatpush1.msra.mxu0 %v637
    %2770 = vmatprep.subr.mxu0 0.0
    %2771 = vmatpush1.msra.mxu0 %v638
    %2772 = vmatprep.subr.mxu0 0.0
    %2773 = vmatpush1.msra.mxu0 %v639
    %2774 = vmatprep.subr.mxu0 0.0
    %2775 = vmatpush1.msra.mxu0 %v640
    %2776 = vmatprep.subr.mxu0 0.0
    %2777 = vmatpush1.msra.mxu0 %v641
    %2778 = vmatprep.subr.mxu0 0.0
    %2779 = vmatpush1.msra.mxu0 %v642
    %2780 = vmatprep.subr.mxu0 0.0
    %2781 = vmatpush1.msra.mxu0 %v643
    %2782 = vmatprep.subr.mxu0 0.0
    %2783 = vmatpush1.msra.mxu0 %v644
    %2784 = vmatprep.mubr.f32.mxu0 %v96
    %2785 = vmatmul.mubr.f32.gmra.mrb[0].mxu0 %v95
    %v2786 = vpop.f32.mrb[0].mxu0
    %v2787 = vadd.f32 %v2717, %v2786
    %v2788 = vpop.f32.mrb[0].mxu0
    %2789 = vdwg.mxu0
    %2790 = vmatprep.subr.mxu0 0.0
    %2791 = vmatpush1.msra.mxu0 %v645
    %2792 = vmatprep.subr.mxu0 0.0
    %2793 = vmatpush1.msra.mxu0 %v646
    %2794 = vmatprep.subr.mxu0 0.0
    %2795 = vmatpush1.msra.mxu0 %v647
    %2796 = vmatprep.subr.mxu0 0.0
    %2797 = vmatpush1.msra.mxu0 %v648
    %2798 = vmatprep.subr.mxu0 0.0
    %2799 = vmatpush1.msra.mxu0 %v649
    %2800 = vmatprep.subr.mxu0 0.0
    %2801 = vmatpush1.msra.mxu0 %v650
    %2802 = vmatprep.subr.mxu0 0.0
    %2803 = vmatpush1.msra.mxu0 %v651
    %2804 = vmatprep.subr.mxu0 0.0
    %2805 = vmatpush1.msra.mxu0 %v652
    %2806 = vmatprep.subr.mxu0 0.0
    %2807 = vmatpush1.msra.mxu0 %v653
    %2808 = vmatprep.subr.mxu0 0.0
    %2809 = vmatpush1.msra.mxu0 %v654
    %2810 = vmatprep.subr.mxu0 0.0
    %2811 = vmatpush1.msra.mxu0 %v655
    %2812 = vmatprep.subr.mxu0 0.0
    %2813 = vmatpush1.msra.mxu0 %v656
    %2814 = vmatprep.subr.mxu0 0.0
    %2815 = vmatpush1.msra.mxu0 %v657
    %2816 = vmatprep.subr.mxu0 0.0
    %2817 = vmatpush1.msra.mxu0 %v658
    %2818 = vmatprep.subr.mxu0 0.0
    %2819 = vmatpush1.msra.mxu0 %v659
    %2820 = vmatprep.subr.mxu0 0.0
    %2821 = vmatpush1.msra.mxu0 %v660
    %2822 = vmatprep.subr.mxu0 0.0
    %2823 = vmatpush1.msra.mxu0 %v661
    %2824 = vmatprep.subr.mxu0 0.0
    %2825 = vmatpush1.msra.mxu0 %v662
    %2826 = vmatprep.subr.mxu0 0.0
    %2827 = vmatpush1.msra.mxu0 %v663
    %2828 = vmatprep.subr.mxu0 0.0
    %2829 = vmatpush1.msra.mxu0 %v664
    %2830 = vmatprep.subr.mxu0 0.0
    %2831 = vmatpush1.msra.mxu0 %v665
    %2832 = vmatprep.subr.mxu0 0.0
    %2833 = vmatpush1.msra.mxu0 %v666
    %2834 = vmatprep.subr.mxu0 0.0
    %2835 = vmatpush1.msra.mxu0 %v667
    %2836 = vmatprep.subr.mxu0 0.0
    %2837 = vmatpush1.msra.mxu0 %v668
    %2838 = vmatprep.subr.mxu0 0.0
    %2839 = vmatpush1.msra.mxu0 %v669
    %2840 = vmatprep.subr.mxu0 0.0
    %2841 = vmatpush1.msra.mxu0 %v670
    %2842 = vmatprep.subr.mxu0 0.0
    %2843 = vmatpush1.msra.mxu0 %v671
    %2844 = vmatprep.subr.mxu0 0.0
    %2845 = vmatpush1.msra.mxu0 %v672
    %2846 = vmatprep.subr.mxu0 0.0
    %2847 = vmatpush1.msra.mxu0 %v673
    %2848 = vmatprep.subr.mxu0 0.0
    %2849 = vmatpush1.msra.mxu0 %v674
    %2850 = vmatprep.subr.mxu0 0.0
    %2851 = vmatpush1.msra.mxu0 %v675
    %2852 = vmatprep.subr.mxu0 0.0
    %2853 = vmatpush1.msra.mxu0 %v676
    %2854 = vmatprep.mubr.f32.mxu0 %v98
    %2855 = vmatmul.mubr.f32.gmra.mrb[0].mxu0 %v97
    %v2856 = vpop.f32.mrb[0].mxu0
    %v2857 = vadd.f32 %v2787, %v2856
    %v2858 = vpop.f32.mrb[0].mxu0
    %2859 = vdwg.mxu0
    %2860 = vmatprep.subr.mxu0 0.0
    %2861 = vmatpush1.msra.mxu0 %v677
    %2862 = vmatprep.subr.mxu0 0.0
    %2863 = vmatpush1.msra.mxu0 %v678
    %2864 = vmatprep.subr.mxu0 0.0
    %2865 = vmatpush1.msra.mxu0 %v679
    %2866 = vmatprep.subr.mxu0 0.0
    %2867 = vmatpush1.msra.mxu0 %v680
    %2868 = vmatprep.subr.mxu0 0.0
    %2869 = vmatpush1.msra.mxu0 %v681
    %2870 = vmatprep.subr.mxu0 0.0
    %2871 = vmatpush1.msra.mxu0 %v682
    %2872 = vmatprep.subr.mxu0 0.0
    %2873 = vmatpush1.msra.mxu0 %v683
    %2874 = vmatprep.subr.mxu0 0.0
    %2875 = vmatpush1.msra.mxu0 %v684
    %2876 = vmatprep.subr.mxu0 0.0
    %2877 = vmatpush1.msra.mxu0 %v685
    %2878 = vmatprep.subr.mxu0 0.0
    %2879 = vmatpush1.msra.mxu0 %v686
    %2880 = vmatprep.subr.mxu0 0.0
    %2881 = vmatpush1.msra.mxu0 %v687
    %2882 = vmatprep.subr.mxu0 0.0
    %2883 = vmatpush1.msra.mxu0 %v688
    %2884 = vmatprep.subr.mxu0 0.0
    %2885 = vmatpush1.msra.mxu0 %v689
    %2886 = vmatprep.subr.mxu0 0.0
    %2887 = vmatpush1.msra.mxu0 %v690
    %2888 = vmatprep.subr.mxu0 0.0
    %2889 = vmatpush1.msra.mxu0 %v691
    %2890 = vmatprep.subr.mxu0 0.0
    %2891 = vmatpush1.msra.mxu0 %v692
    %2892 = vmatprep.subr.mxu0 0.0
    %2893 = vmatpush1.msra.mxu0 %v693
    %2894 = vmatprep.subr.mxu0 0.0
    %2895 = vmatpush1.msra.mxu0 %v694
    %2896 = vmatprep.subr.mxu0 0.0
    %2897 = vmatpush1.msra.mxu0 %v695
    %2898 = vmatprep.subr.mxu0 0.0
    %2899 = vmatpush1.msra.mxu0 %v696
    %2900 = vmatprep.subr.mxu0 0.0
    %2901 = vmatpush1.msra.mxu0 %v697
    %2902 = vmatprep.subr.mxu0 0.0
    %2903 = vmatpush1.msra.mxu0 %v698
    %2904 = vmatprep.subr.mxu0 0.0
    %2905 = vmatpush1.msra.mxu0 %v699
    %2906 = vmatprep.subr.mxu0 0.0
    %2907 = vmatpush1.msra.mxu0 %v700
    %2908 = vmatprep.subr.mxu0 0.0
    %2909 = vmatpush1.msra.mxu0 %v701
    %2910 = vmatprep.subr.mxu0 0.0
    %2911 = vmatpush1.msra.mxu0 %v702
    %2912 = vmatprep.subr.mxu0 0.0
    %2913 = vmatpush1.msra.mxu0 %v703
    %2914 = vmatprep.subr.mxu0 0.0
    %2915 = vmatpush1.msra.mxu0 %v704
    %2916 = vmatprep.subr.mxu0 0.0
    %2917 = vmatpush1.msra.mxu0 %v705
    %2918 = vmatprep.subr.mxu0 0.0
    %2919 = vmatpush1.msra.mxu0 %v706
    %2920 = vmatprep.subr.mxu0 0.0
    %2921 = vmatpush1.msra.mxu0 %v707
    %2922 = vmatprep.subr.mxu0 0.0
    %2923 = vmatpush1.msra.mxu0 %v708
    %2924 = vmatprep.mubr.f32.mxu0 %v100
    %2925 = vmatmul.mubr.f32.gmra.mrb[0].mxu0 %v99
    %v2926 = vpop.f32.mrb[0].mxu0
    %v2927 = vadd.f32 %v2857, %v2926
    %v2928 = vpop.f32.mrb[0].mxu0
    %2929 = vdwg.mxu0
    %2930 = vmatprep.subr.mxu0 0.0
    %2931 = vmatpush1.msra.mxu0 %v709
    %2932 = vmatprep.subr.mxu0 0.0
    %2933 = vmatpush1.msra.mxu0 %v710
    %2934 = vmatprep.subr.mxu0 0.0
    %2935 = vmatpush1.msra.mxu0 %v711
    %2936 = vmatprep.subr.mxu0 0.0
    %2937 = vmatpush1.msra.mxu0 %v712
    %2938 = vmatprep.subr.mxu0 0.0
    %2939 = vmatpush1.msra.mxu0 %v713
    %2940 = vmatprep.subr.mxu0 0.0
    %2941 = vmatpush1.msra.mxu0 %v714
    %2942 = vmatprep.subr.mxu0 0.0
    %2943 = vmatpush1.msra.mxu0 %v715
    %2944 = vmatprep.subr.mxu0 0.0
    %2945 = vmatpush1.msra.mxu0 %v716
    %2946 = vmatprep.subr.mxu0 0.0
    %2947 = vmatpush1.msra.mxu0 %v717
    %2948 = vmatprep.subr.mxu0 0.0
    %2949 = vmatpush1.msra.mxu0 %v718
    %2950 = vmatprep.subr.mxu0 0.0
    %2951 = vmatpush1.msra.mxu0 %v719
    %2952 = vmatprep.subr.mxu0 0.0
    %2953 = vmatpush1.msra.mxu0 %v720
    %2954 = vmatprep.subr.mxu0 0.0
    %2955 = vmatpush1.msra.mxu0 %v721
    %2956 = vmatprep.subr.mxu0 0.0
    %2957 = vmatpush1.msra.mxu0 %v722
    %2958 = vmatprep.subr.mxu0 0.0
    %2959 = vmatpush1.msra.mxu0 %v723
    %2960 = vmatprep.subr.mxu0 0.0
    %2961 = vmatpush1.msra.mxu0 %v724
    %2962 = vmatprep.subr.mxu0 0.0
    %2963 = vmatpush1.msra.mxu0 %v725
    %2964 = vmatprep.subr.mxu0 0.0
    %2965 = vmatpush1.msra.mxu0 %v726
    %2966 = vmatprep.subr.mxu0 0.0
    %2967 = vmatpush1.msra.mxu0 %v727
    %2968 = vmatprep.subr.mxu0 0.0
    %2969 = vmatpush1.msra.mxu0 %v728
    %2970 = vmatprep.subr.mxu0 0.0
    %2971 = vmatpush1.msra.mxu0 %v729
    %2972 = vmatprep.subr.mxu0 0.0
    %2973 = vmatpush1.msra.mxu0 %v730
    %2974 = vmatprep.subr.mxu0 0.0
    %2975 = vmatpush1.msra.mxu0 %v731
    %2976 = vmatprep.subr.mxu0 0.0
    %2977 = vmatpush1.msra.mxu0 %v732
    %2978 = vmatprep.subr.mxu0 0.0
    %2979 = vmatpush1.msra.mxu0 %v733
    %2980 = vmatprep.subr.mxu0 0.0
    %2981 = vmatpush1.msra.mxu0 %v734
    %2982 = vmatprep.subr.mxu0 0.0
    %2983 = vmatpush1.msra.mxu0 %v735
    %2984 = vmatprep.subr.mxu0 0.0
    %2985 = vmatpush1.msra.mxu0 %v736
    %2986 = vmatprep.subr.mxu0 0.0
    %2987 = vmatpush1.msra.mxu0 %v737
    %2988 = vmatprep.subr.mxu0 0.0
    %2989 = vmatpush1.msra.mxu0 %v738
    %2990 = vmatprep.subr.mxu0 0.0
    %2991 = vmatpush1.msra.mxu0 %v739
    %2992 = vmatprep.subr.mxu0 0.0
    %2993 = vmatpush1.msra.mxu0 %v740
    %2994 = vmatprep.mubr.f32.mxu0 %v102
    %2995 = vmatmul.mubr.f32.gmra.mrb[0].mxu0 %v101
    %v2996 = vpop.f32.mrb[0].mxu0
    %v2997 = vadd.f32 %v2927, %v2996
    %v2998 = vpop.f32.mrb[0].mxu0
    %2999 = vdwg.mxu0
    %3000 = vmatprep.subr.mxu0 0.0
    %3001 = vmatpush1.msra.mxu0 %v741
    %3002 = vmatprep.subr.mxu0 0.0
    %3003 = vmatpush1.msra.mxu0 %v742
    %3004 = vmatprep.subr.mxu0 0.0
    %3005 = vmatpush1.msra.mxu0 %v743
    %3006 = vmatprep.subr.mxu0 0.0
    %3007 = vmatpush1.msra.mxu0 %v744
    %3008 = vmatprep.subr.mxu0 0.0
    %3009 = vmatpush1.msra.mxu0 %v745
    %3010 = vmatprep.subr.mxu0 0.0
    %3011 = vmatpush1.msra.mxu0 %v746
    %3012 = vmatprep.subr.mxu0 0.0
    %3013 = vmatpush1.msra.mxu0 %v747
    %3014 = vmatprep.subr.mxu0 0.0
    %3015 = vmatpush1.msra.mxu0 %v748
    %3016 = vmatprep.subr.mxu0 0.0
    %3017 = vmatpush1.msra.mxu0 %v749
    %3018 = vmatprep.subr.mxu0 0.0
    %3019 = vmatpush1.msra.mxu0 %v750
    %3020 = vmatprep.subr.mxu0 0.0
    %3021 = vmatpush1.msra.mxu0 %v751
    %3022 = vmatprep.subr.mxu0 0.0
    %3023 = vmatpush1.msra.mxu0 %v752
    %3024 = vmatprep.subr.mxu0 0.0
    %3025 = vmatpush1.msra.mxu0 %v753
    %3026 = vmatprep.subr.mxu0 0.0
    %3027 = vmatpush1.msra.mxu0 %v754
    %3028 = vmatprep.subr.mxu0 0.0
    %3029 = vmatpush1.msra.mxu0 %v755
    %3030 = vmatprep.subr.mxu0 0.0
    %3031 = vmatpush1.msra.mxu0 %v756
    %3032 = vmatprep.subr.mxu0 0.0
    %3033 = vmatpush1.msra.mxu0 %v757
    %3034 = vmatprep.subr.mxu0 0.0
    %3035 = vmatpush1.msra.mxu0 %v758
    %3036 = vmatprep.subr.mxu0 0.0
    %3037 = vmatpush1.msra.mxu0 %v759
    %3038 = vmatprep.subr.mxu0 0.0
    %3039 = vmatpush1.msra.mxu0 %v760
    %3040 = vmatprep.subr.mxu0 0.0
    %3041 = vmatpush1.msra.mxu0 %v761
    %3042 = vmatprep.subr.mxu0 0.0
    %3043 = vmatpush1.msra.mxu0 %v762
    %3044 = vmatprep.subr.mxu0 0.0
    %3045 = vmatpush1.msra.mxu0 %v763
    %3046 = vmatprep.subr.mxu0 0.0
    %3047 = vmatpush1.msra.mxu0 %v764
    %3048 = vmatprep.subr.mxu0 0.0
    %3049 = vmatpush1.msra.mxu0 %v765
    %3050 = vmatprep.subr.mxu0 0.0
    %3051 = vmatpush1.msra.mxu0 %v766
    %3052 = vmatprep.subr.mxu0 0.0
    %3053 = vmatpush1.msra.mxu0 %v767
    %3054 = vmatprep.subr.mxu0 0.0
    %3055 = vmatpush1.msra.mxu0 %v768
    %3056 = vmatprep.subr.mxu0 0.0
    %3057 = vmatpush1.msra.mxu0 %v769
    %3058 = vmatprep.subr.mxu0 0.0
    %3059 = vmatpush1.msra.mxu0 %v770
    %3060 = vmatprep.subr.mxu0 0.0
    %3061 = vmatpush1.msra.mxu0 %v771
    %3062 = vmatprep.subr.mxu0 0.0
    %3063 = vmatpush1.msra.mxu0 %v772
    %3064 = vmatprep.mubr.f32.mxu0 %v104
    %3065 = vmatmul.mubr.f32.gmra.mrb[0].mxu0 %v103
    %v3066 = vpop.f32.mrb[0].mxu0
    %v3067 = vadd.f32 %v2997, %v3066
    %v3068 = vpop.f32.mrb[0].mxu0
    %3069 = vdwg.mxu0
    %3070 = vmatprep.subr.mxu0 0.0
    %3071 = vmatpush1.msra.mxu0 %v773
    %3072 = vmatprep.subr.mxu0 0.0
    %3073 = vmatpush1.msra.mxu0 %v774
    %3074 = vmatprep.subr.mxu0 0.0
    %3075 = vmatpush1.msra.mxu0 %v775
    %3076 = vmatprep.subr.mxu0 0.0
    %3077 = vmatpush1.msra.mxu0 %v776
    %3078 = vmatprep.subr.mxu0 0.0
    %3079 = vmatpush1.msra.mxu0 %v777
    %3080 = vmatprep.subr.mxu0 0.0
    %3081 = vmatpush1.msra.mxu0 %v778
    %3082 = vmatprep.subr.mxu0 0.0
    %3083 = vmatpush1.msra.mxu0 %v779
    %3084 = vmatprep.subr.mxu0 0.0
    %3085 = vmatpush1.msra.mxu0 %v780
    %3086 = vmatprep.subr.mxu0 0.0
    %3087 = vmatpush1.msra.mxu0 %v781
    %3088 = vmatprep.subr.mxu0 0.0
    %3089 = vmatpush1.msra.mxu0 %v782
    %3090 = vmatprep.subr.mxu0 0.0
    %3091 = vmatpush1.msra.mxu0 %v783
    %3092 = vmatprep.subr.mxu0 0.0
    %3093 = vmatpush1.msra.mxu0 %v784
    %3094 = vmatprep.subr.mxu0 0.0
    %3095 = vmatpush1.msra.mxu0 %v785
    %3096 = vmatprep.subr.mxu0 0.0
    %3097 = vmatpush1.msra.mxu0 %v786
    %3098 = vmatprep.subr.mxu0 0.0
    %3099 = vmatpush1.msra.mxu0 %v787
    %3100 = vmatprep.subr.mxu0 0.0
    %3101 = vmatpush1.msra.mxu0 %v788
    %3102 = vmatprep.subr.mxu0 0.0
    %3103 = vmatpush1.msra.mxu0 %v789
    %3104 = vmatprep.subr.mxu0 0.0
    %3105 = vmatpush1.msra.mxu0 %v790
    %3106 = vmatprep.subr.mxu0 0.0
    %3107 = vmatpush1.msra.mxu0 %v791
    %3108 = vmatprep.subr.mxu0 0.0
    %3109 = vmatpush1.msra.mxu0 %v792
    %3110 = vmatprep.subr.mxu0 0.0
    %3111 = vmatpush1.msra.mxu0 %v793
    %3112 = vmatprep.subr.mxu0 0.0
    %3113 = vmatpush1.msra.mxu0 %v794
    %3114 = vmatprep.subr.mxu0 0.0
    %3115 = vmatpush1.msra.mxu0 %v795
    %3116 = vmatprep.subr.mxu0 0.0
    %3117 = vmatpush1.msra.mxu0 %v796
    %3118 = vmatprep.subr.mxu0 0.0
    %3119 = vmatpush1.msra.mxu0 %v797
    %3120 = vmatprep.subr.mxu0 0.0
    %3121 = vmatpush1.msra.mxu0 %v798
    %3122 = vmatprep.subr.mxu0 0.0
    %3123 = vmatpush1.msra.mxu0 %v799
    %3124 = vmatprep.subr.mxu0 0.0
    %3125 = vmatpush1.msra.mxu0 %v800
    %3126 = vmatprep.subr.mxu0 0.0
    %3127 = vmatpush1.msra.mxu0 %v801
    %3128 = vmatprep.subr.mxu0 0.0
    %3129 = vmatpush1.msra.mxu0 %v802
    %3130 = vmatprep.subr.mxu0 0.0
    %3131 = vmatpush1.msra.mxu0 %v803
    %3132 = vmatprep.subr.mxu0 0.0
    %3133 = vmatpush1.msra.mxu0 %v804
    %3134 = vmatprep.mubr.f32.mxu0 %v106
    %3135 = vmatmul.mubr.f32.gmra.mrb[0].mxu0 %v105
    %v3136 = vpop.f32.mrb[0].mxu0
    %v3137 = vadd.f32 %v3067, %v3136
    %v3138 = vpop.f32.mrb[0].mxu0
    %3139 = vdwg.mxu0
    %3140 = vmatprep.subr.mxu0 0.0
    %3141 = vmatpush1.msra.mxu0 %v805
    %3142 = vmatprep.subr.mxu0 0.0
    %3143 = vmatpush1.msra.mxu0 %v806
    %3144 = vmatprep.subr.mxu0 0.0
    %3145 = vmatpush1.msra.mxu0 %v807
    %3146 = vmatprep.subr.mxu0 0.0
    %3147 = vmatpush1.msra.mxu0 %v808
    %3148 = vmatprep.subr.mxu0 0.0
    %3149 = vmatpush1.msra.mxu0 %v809
    %3150 = vmatprep.subr.mxu0 0.0
    %3151 = vmatpush1.msra.mxu0 %v810
    %3152 = vmatprep.subr.mxu0 0.0
    %3153 = vmatpush1.msra.mxu0 %v811
    %3154 = vmatprep.subr.mxu0 0.0
    %3155 = vmatpush1.msra.mxu0 %v812
    %3156 = vmatprep.subr.mxu0 0.0
    %3157 = vmatpush1.msra.mxu0 %v813
    %3158 = vmatprep.subr.mxu0 0.0
    %3159 = vmatpush1.msra.mxu0 %v814
    %3160 = vmatprep.subr.mxu0 0.0
    %3161 = vmatpush1.msra.mxu0 %v815
    %3162 = vmatprep.subr.mxu0 0.0
    %3163 = vmatpush1.msra.mxu0 %v816
    %3164 = vmatprep.subr.mxu0 0.0
    %3165 = vmatpush1.msra.mxu0 %v817
    %3166 = vmatprep.subr.mxu0 0.0
    %3167 = vmatpush1.msra.mxu0 %v818
    %3168 = vmatprep.subr.mxu0 0.0
    %3169 = vmatpush1.msra.mxu0 %v819
    %3170 = vmatprep.subr.mxu0 0.0
    %3171 = vmatpush1.msra.mxu0 %v820
    %3172 = vmatprep.subr.mxu0 0.0
    %3173 = vmatpush1.msra.mxu0 %v821
    %3174 = vmatprep.subr.mxu0 0.0
    %3175 = vmatpush1.msra.mxu0 %v822
    %3176 = vmatprep.subr.mxu0 0.0
    %3177 = vmatpush1.msra.mxu0 %v823
    %3178 = vmatprep.subr.mxu0 0.0
    %3179 = vmatpush1.msra.mxu0 %v824
    %3180 = vmatprep.subr.mxu0 0.0
    %3181 = vmatpush1.msra.mxu0 %v825
    %3182 = vmatprep.subr.mxu0 0.0
    %3183 = vmatpush1.msra.mxu0 %v826
    %3184 = vmatprep.subr.mxu0 0.0
    %3185 = vmatpush1.msra.mxu0 %v827
    %3186 = vmatprep.subr.mxu0 0.0
    %3187 = vmatpush1.msra.mxu0 %v828
    %3188 = vmatprep.subr.mxu0 0.0
    %3189 = vmatpush1.msra.mxu0 %v829
    %3190 = vmatprep.subr.mxu0 0.0
    %3191 = vmatpush1.msra.mxu0 %v830
    %3192 = vmatprep.subr.mxu0 0.0
    %3193 = vmatpush1.msra.mxu0 %v831
    %3194 = vmatprep.subr.mxu0 0.0
    %3195 = vmatpush1.msra.mxu0 %v832
    %3196 = vmatprep.subr.mxu0 0.0
    %3197 = vmatpush1.msra.mxu0 %v833
    %3198 = vmatprep.subr.mxu0 0.0
    %3199 = vmatpush1.msra.mxu0 %v834
    %3200 = vmatprep.subr.mxu0 0.0
    %3201 = vmatpush1.msra.mxu0 %v835
    %3202 = vmatprep.subr.mxu0 0.0
    %3203 = vmatpush1.msra.mxu0 %v836
    %3204 = vmatprep.mubr.f32.mxu0 %v108
    %3205 = vmatmul.mubr.f32.gmra.mrb[0].mxu0 %v107
    %v3206 = vpop.f32.mrb[0].mxu0
    %v3207 = vadd.f32 %v3137, %v3206
    %v3208 = vpop.f32.mrb[0].mxu0
    %3209 = vdwg.mxu0
    %3210 = vmatprep.subr.mxu0 0.0
    %3211 = vmatpush1.msra.mxu0 %v837
    %3212 = vmatprep.subr.mxu0 0.0
    %3213 = vmatpush1.msra.mxu0 %v838
    %3214 = vmatprep.subr.mxu0 0.0
    %3215 = vmatpush1.msra.mxu0 %v839
    %3216 = vmatprep.subr.mxu0 0.0
    %3217 = vmatpush1.msra.mxu0 %v840
    %3218 = vmatprep.subr.mxu0 0.0
    %3219 = vmatpush1.msra.mxu0 %v841
    %3220 = vmatprep.subr.mxu0 0.0
    %3221 = vmatpush1.msra.mxu0 %v842
    %3222 = vmatprep.subr.mxu0 0.0
    %3223 = vmatpush1.msra.mxu0 %v843
    %3224 = vmatprep.subr.mxu0 0.0
    %3225 = vmatpush1.msra.mxu0 %v844
    %3226 = vmatprep.subr.mxu0 0.0
    %3227 = vmatpush1.msra.mxu0 %v845
    %3228 = vmatprep.subr.mxu0 0.0
    %3229 = vmatpush1.msra.mxu0 %v846
    %3230 = vmatprep.subr.mxu0 0.0
    %3231 = vmatpush1.msra.mxu0 %v847
    %3232 = vmatprep.subr.mxu0 0.0
    %3233 = vmatpush1.msra.mxu0 %v848
    %3234 = vmatprep.subr.mxu0 0.0
    %3235 = vmatpush1.msra.mxu0 %v849
    %3236 = vmatprep.subr.mxu0 0.0
    %3237 = vmatpush1.msra.mxu0 %v850
    %3238 = vmatprep.subr.mxu0 0.0
    %3239 = vmatpush1.msra.mxu0 %v851
    %3240 = vmatprep.subr.mxu0 0.0
    %3241 = vmatpush1.msra.mxu0 %v852
    %3242 = vmatprep.subr.mxu0 0.0
    %3243 = vmatpush1.msra.mxu0 %v853
    %3244 = vmatprep.subr.mxu0 0.0
    %3245 = vmatpush1.msra.mxu0 %v854
    %3246 = vmatprep.subr.mxu0 0.0
    %3247 = vmatpush1.msra.mxu0 %v855
    %3248 = vmatprep.subr.mxu0 0.0
    %3249 = vmatpush1.msra.mxu0 %v856
    %3250 = vmatprep.subr.mxu0 0.0
    %3251 = vmatpush1.msra.mxu0 %v857
    %3252 = vmatprep.subr.mxu0 0.0
    %3253 = vmatpush1.msra.mxu0 %v858
    %3254 = vmatprep.subr.mxu0 0.0
    %3255 = vmatpush1.msra.mxu0 %v859
    %3256 = vmatprep.subr.mxu0 0.0
    %3257 = vmatpush1.msra.mxu0 %v860
    %3258 = vmatprep.subr.mxu0 0.0
    %3259 = vmatpush1.msra.mxu0 %v861
    %3260 = vmatprep.subr.mxu0 0.0
    %3261 = vmatpush1.msra.mxu0 %v862
    %3262 = vmatprep.subr.mxu0 0.0
    %3263 = vmatpush1.msra.mxu0 %v863
    %3264 = vmatprep.subr.mxu0 0.0
    %3265 = vmatpush1.msra.mxu0 %v864
    %3266 = vmatprep.subr.mxu0 0.0
    %3267 = vmatpush1.msra.mxu0 %v865
    %3268 = vmatprep.subr.mxu0 0.0
    %3269 = vmatpush1.msra.mxu0 %v866
    %3270 = vmatprep.subr.mxu0 0.0
    %3271 = vmatpush1.msra.mxu0 %v867
    %3272 = vmatprep.subr.mxu0 0.0
    %3273 = vmatpush1.msra.mxu0 %v868
    %3274 = vmatprep.mubr.f32.mxu0 %v110
    %3275 = vmatmul.mubr.f32.gmra.mrb[0].mxu0 %v109
    %v3276 = vpop.f32.mrb[0].mxu0
    %v3277 = vadd.f32 %v3207, %v3276
    %v3278 = vpop.f32.mrb[0].mxu0
    %3279 = vdwg.mxu0
    %3280 = vmatprep.subr.mxu0 0.0
    %3281 = vmatpush1.msra.mxu0 %v869
    %3282 = vmatprep.subr.mxu0 0.0
    %3283 = vmatpush1.msra.mxu0 %v870
    %3284 = vmatprep.subr.mxu0 0.0
    %3285 = vmatpush1.msra.mxu0 %v871
    %3286 = vmatprep.subr.mxu0 0.0
    %3287 = vmatpush1.msra.mxu0 %v872
    %3288 = vmatprep.subr.mxu0 0.0
    %3289 = vmatpush1.msra.mxu0 %v873
    %3290 = vmatprep.subr.mxu0 0.0
    %3291 = vmatpush1.msra.mxu0 %v874
    %3292 = vmatprep.subr.mxu0 0.0
    %3293 = vmatpush1.msra.mxu0 %v875
    %3294 = vmatprep.subr.mxu0 0.0
    %3295 = vmatpush1.msra.mxu0 %v876
    %3296 = vmatprep.subr.mxu0 0.0
    %3297 = vmatpush1.msra.mxu0 %v877
    %3298 = vmatprep.subr.mxu0 0.0
    %3299 = vmatpush1.msra.mxu0 %v878
    %3300 = vmatprep.subr.mxu0 0.0
    %3301 = vmatpush1.msra.mxu0 %v879
    %3302 = vmatprep.subr.mxu0 0.0
    %3303 = vmatpush1.msra.mxu0 %v880
    %3304 = vmatprep.subr.mxu0 0.0
    %3305 = vmatpush1.msra.mxu0 %v881
    %3306 = vmatprep.subr.mxu0 0.0
    %3307 = vmatpush1.msra.mxu0 %v882
    %3308 = vmatprep.subr.mxu0 0.0
    %3309 = vmatpush1.msra.mxu0 %v883
    %3310 = vmatprep.subr.mxu0 0.0
    %3311 = vmatpush1.msra.mxu0 %v884
    %3312 = vmatprep.subr.mxu0 0.0
    %3313 = vmatpush1.msra.mxu0 %v885
    %3314 = vmatprep.subr.mxu0 0.0
    %3315 = vmatpush1.msra.mxu0 %v886
    %3316 = vmatprep.subr.mxu0 0.0
    %3317 = vmatpush1.msra.mxu0 %v887
    %3318 = vmatprep.subr.mxu0 0.0
    %3319 = vmatpush1.msra.mxu0 %v888
    %3320 = vmatprep.subr.mxu0 0.0
    %3321 = vmatpush1.msra.mxu0 %v889
    %3322 = vmatprep.subr.mxu0 0.0
    %3323 = vmatpush1.msra.mxu0 %v890
    %3324 = vmatprep.subr.mxu0 0.0
    %3325 = vmatpush1.msra.mxu0 %v891
    %3326 = vmatprep.subr.mxu0 0.0
    %3327 = vmatpush1.msra.mxu0 %v892
    %3328 = vmatprep.subr.mxu0 0.0
    %3329 = vmatpush1.msra.mxu0 %v893
    %3330 = vmatprep.subr.mxu0 0.0
    %3331 = vmatpush1.msra.mxu0 %v894
    %3332 = vmatprep.subr.mxu0 0.0
    %3333 = vmatpush1.msra.mxu0 %v895
    %3334 = vmatprep.subr.mxu0 0.0
    %3335 = vmatpush1.msra.mxu0 %v896
    %3336 = vmatprep.subr.mxu0 0.0
    %3337 = vmatpush1.msra.mxu0 %v897
    %3338 = vmatprep.subr.mxu0 0.0
    %3339 = vmatpush1.msra.mxu0 %v898
    %3340 = vmatprep.subr.mxu0 0.0
    %3341 = vmatpush1.msra.mxu0 %v899
    %3342 = vmatprep.subr.mxu0 0.0
    %3343 = vmatpush1.msra.mxu0 %v900
    %3344 = vmatprep.mubr.f32.mxu0 %v112
    %3345 = vmatmul.mubr.f32.gmra.mrb[0].mxu0 %v111
    %v3346 = vpop.f32.mrb[0].mxu0
    %v3347 = vadd.f32 %v3277, %v3346
    %v3348 = vpop.f32.mrb[0].mxu0
    %3349 = vdwg.mxu0
    %3350 = vmatprep.subr.mxu0 0.0
    %3351 = vmatpush1.msra.mxu0 %v901
    %3352 = vmatprep.subr.mxu0 0.0
    %3353 = vmatpush1.msra.mxu0 %v902
    %3354 = vmatprep.subr.mxu0 0.0
    %3355 = vmatpush1.msra.mxu0 %v903
    %3356 = vmatprep.subr.mxu0 0.0
    %3357 = vmatpush1.msra.mxu0 %v904
    %3358 = vmatprep.subr.mxu0 0.0
    %3359 = vmatpush1.msra.mxu0 %v905
    %3360 = vmatprep.subr.mxu0 0.0
    %3361 = vmatpush1.msra.mxu0 %v906
    %3362 = vmatprep.subr.mxu0 0.0
    %3363 = vmatpush1.msra.mxu0 %v907
    %3364 = vmatprep.subr.mxu0 0.0
    %3365 = vmatpush1.msra.mxu0 %v908
    %3366 = vmatprep.subr.mxu0 0.0
    %3367 = vmatpush1.msra.mxu0 %v909
    %3368 = vmatprep.subr.mxu0 0.0
    %3369 = vmatpush1.msra.mxu0 %v910
    %3370 = vmatprep.subr.mxu0 0.0
    %3371 = vmatpush1.msra.mxu0 %v911
    %3372 = vmatprep.subr.mxu0 0.0
    %3373 = vmatpush1.msra.mxu0 %v912
    %3374 = vmatprep.subr.mxu0 0.0
    %3375 = vmatpush1.msra.mxu0 %v913
    %3376 = vmatprep.subr.mxu0 0.0
    %3377 = vmatpush1.msra.mxu0 %v914
    %3378 = vmatprep.subr.mxu0 0.0
    %3379 = vmatpush1.msra.mxu0 %v915
    %3380 = vmatprep.subr.mxu0 0.0
    %3381 = vmatpush1.msra.mxu0 %v916
    %3382 = vmatprep.subr.mxu0 0.0
    %3383 = vmatpush1.msra.mxu0 %v917
    %3384 = vmatprep.subr.mxu0 0.0
    %3385 = vmatpush1.msra.mxu0 %v918
    %3386 = vmatprep.subr.mxu0 0.0
    %3387 = vmatpush1.msra.mxu0 %v919
    %3388 = vmatprep.subr.mxu0 0.0
    %3389 = vmatpush1.msra.mxu0 %v920
    %3390 = vmatprep.subr.mxu0 0.0
    %3391 = vmatpush1.msra.mxu0 %v921
    %3392 = vmatprep.subr.mxu0 0.0
    %3393 = vmatpush1.msra.mxu0 %v922
    %3394 = vmatprep.subr.mxu0 0.0
    %3395 = vmatpush1.msra.mxu0 %v923
    %3396 = vmatprep.subr.mxu0 0.0
    %3397 = vmatpush1.msra.mxu0 %v924
    %3398 = vmatprep.subr.mxu0 0.0
    %3399 = vmatpush1.msra.mxu0 %v925
    %3400 = vmatprep.subr.mxu0 0.0
    %3401 = vmatpush1.msra.mxu0 %v926
    %3402 = vmatprep.subr.mxu0 0.0
    %3403 = vmatpush1.msra.mxu0 %v927
    %3404 = vmatprep.subr.mxu0 0.0
    %3405 = vmatpush1.msra.mxu0 %v928
    %3406 = vmatprep.subr.mxu0 0.0
    %3407 = vmatpush1.msra.mxu0 %v929
    %3408 = vmatprep.subr.mxu0 0.0
    %3409 = vmatpush1.msra.mxu0 %v930
    %3410 = vmatprep.subr.mxu0 0.0
    %3411 = vmatpush1.msra.mxu0 %v931
    %3412 = vmatprep.subr.mxu0 0.0
    %3413 = vmatpush1.msra.mxu0 %v932
    %3414 = vmatprep.mubr.f32.mxu0 %v114
    %3415 = vmatmul.mubr.f32.gmra.mrb[0].mxu0 %v113
    %v3416 = vpop.f32.mrb[0].mxu0
    %v3417 = vadd.f32 %v3347, %v3416
    %v3418 = vpop.f32.mrb[0].mxu0
    %3419 = vdwg.mxu0
    %3420 = vmatprep.subr.mxu0 0.0
    %3421 = vmatpush1.msra.mxu0 %v933
    %3422 = vmatprep.subr.mxu0 0.0
    %3423 = vmatpush1.msra.mxu0 %v934
    %3424 = vmatprep.subr.mxu0 0.0
    %3425 = vmatpush1.msra.mxu0 %v935
    %3426 = vmatprep.subr.mxu0 0.0
    %3427 = vmatpush1.msra.mxu0 %v936
    %3428 = vmatprep.subr.mxu0 0.0
    %3429 = vmatpush1.msra.mxu0 %v937
    %3430 = vmatprep.subr.mxu0 0.0
    %3431 = vmatpush1.msra.mxu0 %v938
    %3432 = vmatprep.subr.mxu0 0.0
    %3433 = vmatpush1.msra.mxu0 %v939
    %3434 = vmatprep.subr.mxu0 0.0
    %3435 = vmatpush1.msra.mxu0 %v940
    %3436 = vmatprep.subr.mxu0 0.0
    %3437 = vmatpush1.msra.mxu0 %v941
    %3438 = vmatprep.subr.mxu0 0.0
    %3439 = vmatpush1.msra.mxu0 %v942
    %3440 = vmatprep.subr.mxu0 0.0
    %3441 = vmatpush1.msra.mxu0 %v943
    %3442 = vmatprep.subr.mxu0 0.0
    %3443 = vmatpush1.msra.mxu0 %v944
    %3444 = vmatprep.subr.mxu0 0.0
    %3445 = vmatpush1.msra.mxu0 %v945
    %3446 = vmatprep.subr.mxu0 0.0
    %3447 = vmatpush1.msra.mxu0 %v946
    %3448 = vmatprep.subr.mxu0 0.0
    %3449 = vmatpush1.msra.mxu0 %v947
    %3450 = vmatprep.subr.mxu0 0.0
    %3451 = vmatpush1.msra.mxu0 %v948
    %3452 = vmatprep.subr.mxu0 0.0
    %3453 = vmatpush1.msra.mxu0 %v949
    %3454 = vmatprep.subr.mxu0 0.0
    %3455 = vmatpush1.msra.mxu0 %v950
    %3456 = vmatprep.subr.mxu0 0.0
    %3457 = vmatpush1.msra.mxu0 %v951
    %3458 = vmatprep.subr.mxu0 0.0
    %3459 = vmatpush1.msra.mxu0 %v952
    %3460 = vmatprep.subr.mxu0 0.0
    %3461 = vmatpush1.msra.mxu0 %v953
    %3462 = vmatprep.subr.mxu0 0.0
    %3463 = vmatpush1.msra.mxu0 %v954
    %3464 = vmatprep.subr.mxu0 0.0
    %3465 = vmatpush1.msra.mxu0 %v955
    %3466 = vmatprep.subr.mxu0 0.0
    %3467 = vmatpush1.msra.mxu0 %v956
    %3468 = vmatprep.subr.mxu0 0.0
    %3469 = vmatpush1.msra.mxu0 %v957
    %3470 = vmatprep.subr.mxu0 0.0
    %3471 = vmatpush1.msra.mxu0 %v958
    %3472 = vmatprep.subr.mxu0 0.0
    %3473 = vmatpush1.msra.mxu0 %v959
    %3474 = vmatprep.subr.mxu0 0.0
    %3475 = vmatpush1.msra.mxu0 %v960
    %3476 = vmatprep.subr.mxu0 0.0
    %3477 = vmatpush1.msra.mxu0 %v961
    %3478 = vmatprep.subr.mxu0 0.0
    %3479 = vmatpush1.msra.mxu0 %v962
    %3480 = vmatprep.subr.mxu0 0.0
    %3481 = vmatpush1.msra.mxu0 %v963
    %3482 = vmatprep.subr.mxu0 0.0
    %3483 = vmatpush1.msra.mxu0 %v964
    %3484 = vmatprep.mubr.f32.mxu0 %v116
    %3485 = vmatmul.mubr.f32.gmra.mrb[0].mxu0 %v115
    %v3486 = vpop.f32.mrb[0].mxu0
    %v3487 = vadd.f32 %v3417, %v3486
    %v3488 = vpop.f32.mrb[0].mxu0
    %3489 = vdwg.mxu0
    %3490 = vmatprep.subr.mxu0 0.0
    %3491 = vmatpush1.msra.mxu0 %v965
    %3492 = vmatprep.subr.mxu0 0.0
    %3493 = vmatpush1.msra.mxu0 %v966
    %3494 = vmatprep.subr.mxu0 0.0
    %3495 = vmatpush1.msra.mxu0 %v967
    %3496 = vmatprep.subr.mxu0 0.0
    %3497 = vmatpush1.msra.mxu0 %v968
    %3498 = vmatprep.subr.mxu0 0.0
    %3499 = vmatpush1.msra.mxu0 %v969
    %3500 = vmatprep.subr.mxu0 0.0
    %3501 = vmatpush1.msra.mxu0 %v970
    %3502 = vmatprep.subr.mxu0 0.0
    %3503 = vmatpush1.msra.mxu0 %v971
    %3504 = vmatprep.subr.mxu0 0.0
    %3505 = vmatpush1.msra.mxu0 %v972
    %3506 = vmatprep.subr.mxu0 0.0
    %3507 = vmatpush1.msra.mxu0 %v973
    %3508 = vmatprep.subr.mxu0 0.0
    %3509 = vmatpush1.msra.mxu0 %v974
    %3510 = vmatprep.subr.mxu0 0.0
    %3511 = vmatpush1.msra.mxu0 %v975
    %3512 = vmatprep.subr.mxu0 0.0
    %3513 = vmatpush1.msra.mxu0 %v976
    %3514 = vmatprep.subr.mxu0 0.0
    %3515 = vmatpush1.msra.mxu0 %v977
    %3516 = vmatprep.subr.mxu0 0.0
    %3517 = vmatpush1.msra.mxu0 %v978
    %3518 = vmatprep.subr.mxu0 0.0
    %3519 = vmatpush1.msra.mxu0 %v979
    %3520 = vmatprep.subr.mxu0 0.0
    %3521 = vmatpush1.msra.mxu0 %v980
    %3522 = vmatprep.subr.mxu0 0.0
    %3523 = vmatpush1.msra.mxu0 %v981
    %3524 = vmatprep.subr.mxu0 0.0
    %3525 = vmatpush1.msra.mxu0 %v982
    %3526 = vmatprep.subr.mxu0 0.0
    %3527 = vmatpush1.msra.mxu0 %v983
    %3528 = vmatprep.subr.mxu0 0.0
    %3529 = vmatpush1.msra.mxu0 %v984
    %3530 = vmatprep.subr.mxu0 0.0
    %3531 = vmatpush1.msra.mxu0 %v985
    %3532 = vmatprep.subr.mxu0 0.0
    %3533 = vmatpush1.msra.mxu0 %v986
    %3534 = vmatprep.subr.mxu0 0.0
    %3535 = vmatpush1.msra.mxu0 %v987
    %3536 = vmatprep.subr.mxu0 0.0
    %3537 = vmatpush1.msra.mxu0 %v988
    %3538 = vmatprep.subr.mxu0 0.0
    %3539 = vmatpush1.msra.mxu0 %v989
    %3540 = vmatprep.subr.mxu0 0.0
    %3541 = vmatpush1.msra.mxu0 %v990
    %3542 = vmatprep.subr.mxu0 0.0
    %3543 = vmatpush1.msra.mxu0 %v991
    %3544 = vmatprep.subr.mxu0 0.0
    %3545 = vmatpush1.msra.mxu0 %v992
    %3546 = vmatprep.subr.mxu0 0.0
    %3547 = vmatpush1.msra.mxu0 %v993
    %3548 = vmatprep.subr.mxu0 0.0
    %3549 = vmatpush1.msra.mxu0 %v994
    %3550 = vmatprep.subr.mxu0 0.0
    %3551 = vmatpush1.msra.mxu0 %v995
    %3552 = vmatprep.subr.mxu0 0.0
    %3553 = vmatpush1.msra.mxu0 %v996
    %3554 = vmatprep.mubr.f32.mxu0 %v118
    %3555 = vmatmul.mubr.f32.gmra.mrb[0].mxu0 %v117
    %v3556 = vpop.f32.mrb[0].mxu0
    %v3557 = vadd.f32 %v3487, %v3556
    %v3558 = vpop.f32.mrb[0].mxu0
    %3559 = vdwg.mxu0
    %3560 = vmatprep.subr.mxu0 0.0
    %3561 = vmatpush1.msra.mxu0 %v997
    %3562 = vmatprep.subr.mxu0 0.0
    %3563 = vmatpush1.msra.mxu0 %v998
    %3564 = vmatprep.subr.mxu0 0.0
    %3565 = vmatpush1.msra.mxu0 %v999
    %3566 = vmatprep.subr.mxu0 0.0
    %3567 = vmatpush1.msra.mxu0 %v1000
    %3568 = vmatprep.subr.mxu0 0.0
    %3569 = vmatpush1.msra.mxu0 %v1001
    %3570 = vmatprep.subr.mxu0 0.0
    %3571 = vmatpush1.msra.mxu0 %v1002
    %3572 = vmatprep.subr.mxu0 0.0
    %3573 = vmatpush1.msra.mxu0 %v1003
    %3574 = vmatprep.subr.mxu0 0.0
    %3575 = vmatpush1.msra.mxu0 %v1004
    %3576 = vmatprep.subr.mxu0 0.0
    %3577 = vmatpush1.msra.mxu0 %v1005
    %3578 = vmatprep.subr.mxu0 0.0
    %3579 = vmatpush1.msra.mxu0 %v1006
    %3580 = vmatprep.subr.mxu0 0.0
    %3581 = vmatpush1.msra.mxu0 %v1007
    %3582 = vmatprep.subr.mxu0 0.0
    %3583 = vmatpush1.msra.mxu0 %v1008
    %3584 = vmatprep.subr.mxu0 0.0
    %3585 = vmatpush1.msra.mxu0 %v1009
    %3586 = vmatprep.subr.mxu0 0.0
    %3587 = vmatpush1.msra.mxu0 %v1010
    %3588 = vmatprep.subr.mxu0 0.0
    %3589 = vmatpush1.msra.mxu0 %v1011
    %3590 = vmatprep.subr.mxu0 0.0
    %3591 = vmatpush1.msra.mxu0 %v1012
    %3592 = vmatprep.subr.mxu0 0.0
    %3593 = vmatpush1.msra.mxu0 %v1013
    %3594 = vmatprep.subr.mxu0 0.0
    %3595 = vmatpush1.msra.mxu0 %v1014
    %3596 = vmatprep.subr.mxu0 0.0
    %3597 = vmatpush1.msra.mxu0 %v1015
    %3598 = vmatprep.subr.mxu0 0.0
    %3599 = vmatpush1.msra.mxu0 %v1016
    %3600 = vmatprep.subr.mxu0 0.0
    %3601 = vmatpush1.msra.mxu0 %v1017
    %3602 = vmatprep.subr.mxu0 0.0
    %3603 = vmatpush1.msra.mxu0 %v1018
    %3604 = vmatprep.subr.mxu0 0.0
    %3605 = vmatpush1.msra.mxu0 %v1019
    %3606 = vmatprep.subr.mxu0 0.0
    %3607 = vmatpush1.msra.mxu0 %v1020
    %3608 = vmatprep.subr.mxu0 0.0
    %3609 = vmatpush1.msra.mxu0 %v1021
    %3610 = vmatprep.subr.mxu0 0.0
    %3611 = vmatpush1.msra.mxu0 %v1022
    %3612 = vmatprep.subr.mxu0 0.0
    %3613 = vmatpush1.msra.mxu0 %v1023
    %3614 = vmatprep.subr.mxu0 0.0
    %3615 = vmatpush1.msra.mxu0 %v1024
    %3616 = vmatprep.subr.mxu0 0.0
    %3617 = vmatpush1.msra.mxu0 %v1025
    %3618 = vmatprep.subr.mxu0 0.0
    %3619 = vmatpush1.msra.mxu0 %v1026
    %3620 = vmatprep.subr.mxu0 0.0
    %3621 = vmatpush1.msra.mxu0 %v1027
    %3622 = vmatprep.subr.mxu0 0.0
    %3623 = vmatpush1.msra.mxu0 %v1028
    %3624 = vmatprep.mubr.f32.mxu0 %v120
    %3625 = vmatmul.mubr.f32.gmra.mrb[0].mxu0 %v119
    %v3626 = vpop.f32.mrb[0].mxu0
    %v3627 = vadd.f32 %v3557, %v3626
    %v3628 = vpop.f32.mrb[0].mxu0
    %3629 = vdwg.mxu0
    %3630 = vmatprep.subr.mxu0 0.0
    %3631 = vmatpush1.msra.mxu0 %v1029
    %3632 = vmatprep.subr.mxu0 0.0
    %3633 = vmatpush1.msra.mxu0 %v1030
    %3634 = vmatprep.subr.mxu0 0.0
    %3635 = vmatpush1.msra.mxu0 %v1031
    %3636 = vmatprep.subr.mxu0 0.0
    %3637 = vmatpush1.msra.mxu0 %v1032
    %3638 = vmatprep.subr.mxu0 0.0
    %3639 = vmatpush1.msra.mxu0 %v1033
    %3640 = vmatprep.subr.mxu0 0.0
    %3641 = vmatpush1.msra.mxu0 %v1034
    %3642 = vmatprep.subr.mxu0 0.0
    %3643 = vmatpush1.msra.mxu0 %v1035
    %3644 = vmatprep.subr.mxu0 0.0
    %3645 = vmatpush1.msra.mxu0 %v1036
    %3646 = vmatprep.subr.mxu0 0.0
    %3647 = vmatpush1.msra.mxu0 %v1037
    %3648 = vmatprep.subr.mxu0 0.0
    %3649 = vmatpush1.msra.mxu0 %v1038
    %3650 = vmatprep.subr.mxu0 0.0
    %3651 = vmatpush1.msra.mxu0 %v1039
    %3652 = vmatprep.subr.mxu0 0.0
    %3653 = vmatpush1.msra.mxu0 %v1040
    %3654 = vmatprep.subr.mxu0 0.0
    %3655 = vmatpush1.msra.mxu0 %v1041
    %3656 = vmatprep.subr.mxu0 0.0
    %3657 = vmatpush1.msra.mxu0 %v1042
    %3658 = vmatprep.subr.mxu0 0.0
    %3659 = vmatpush1.msra.mxu0 %v1043
    %3660 = vmatprep.subr.mxu0 0.0
    %3661 = vmatpush1.msra.mxu0 %v1044
    %3662 = vmatprep.subr.mxu0 0.0
    %3663 = vmatpush1.msra.mxu0 %v1045
    %3664 = vmatprep.subr.mxu0 0.0
    %3665 = vmatpush1.msra.mxu0 %v1046
    %3666 = vmatprep.subr.mxu0 0.0
    %3667 = vmatpush1.msra.mxu0 %v1047
    %3668 = vmatprep.subr.mxu0 0.0
    %3669 = vmatpush1.msra.mxu0 %v1048
    %3670 = vmatprep.subr.mxu0 0.0
    %3671 = vmatpush1.msra.mxu0 %v1049
    %3672 = vmatprep.subr.mxu0 0.0
    %3673 = vmatpush1.msra.mxu0 %v1050
    %3674 = vmatprep.subr.mxu0 0.0
    %3675 = vmatpush1.msra.mxu0 %v1051
    %3676 = vmatprep.subr.mxu0 0.0
    %3677 = vmatpush1.msra.mxu0 %v1052
    %3678 = vmatprep.subr.mxu0 0.0
    %3679 = vmatpush1.msra.mxu0 %v1053
    %3680 = vmatprep.subr.mxu0 0.0
    %3681 = vmatpush1.msra.mxu0 %v1054
    %3682 = vmatprep.subr.mxu0 0.0
    %3683 = vmatpush1.msra.mxu0 %v1055
    %3684 = vmatprep.subr.mxu0 0.0
    %3685 = vmatpush1.msra.mxu0 %v1056
    %3686 = vmatprep.subr.mxu0 0.0
    %3687 = vmatpush1.msra.mxu0 %v1057
    %3688 = vmatprep.subr.mxu0 0.0
    %3689 = vmatpush1.msra.mxu0 %v1058
    %3690 = vmatprep.subr.mxu0 0.0
    %3691 = vmatpush1.msra.mxu0 %v1059
    %3692 = vmatprep.subr.mxu0 0.0
    %3693 = vmatpush1.msra.mxu0 %v1060
    %3694 = vmatprep.mubr.f32.mxu0 %v122
    %3695 = vmatmul.mubr.f32.gmra.mrb[0].mxu0 %v121
    %v3696 = vpop.f32.mrb[0].mxu0
    %v3697 = vadd.f32 %v3627, %v3696
    %v3698 = vpop.f32.mrb[0].mxu0
    %3699 = vdwg.mxu0
    %3700 = vmatprep.subr.mxu0 0.0
    %3701 = vmatpush1.msra.mxu0 %v1061
    %3702 = vmatprep.subr.mxu0 0.0
    %3703 = vmatpush1.msra.mxu0 %v1062
    %3704 = vmatprep.subr.mxu0 0.0
    %3705 = vmatpush1.msra.mxu0 %v1063
    %3706 = vmatprep.subr.mxu0 0.0
    %3707 = vmatpush1.msra.mxu0 %v1064
    %3708 = vmatprep.subr.mxu0 0.0
    %3709 = vmatpush1.msra.mxu0 %v1065
    %3710 = vmatprep.subr.mxu0 0.0
    %3711 = vmatpush1.msra.mxu0 %v1066
    %3712 = vmatprep.subr.mxu0 0.0
    %3713 = vmatpush1.msra.mxu0 %v1067
    %3714 = vmatprep.subr.mxu0 0.0
    %3715 = vmatpush1.msra.mxu0 %v1068
    %3716 = vmatprep.subr.mxu0 0.0
    %3717 = vmatpush1.msra.mxu0 %v1069
    %3718 = vmatprep.subr.mxu0 0.0
    %3719 = vmatpush1.msra.mxu0 %v1070
    %3720 = vmatprep.subr.mxu0 0.0
    %3721 = vmatpush1.msra.mxu0 %v1071
    %3722 = vmatprep.subr.mxu0 0.0
    %3723 = vmatpush1.msra.mxu0 %v1072
    %3724 = vmatprep.subr.mxu0 0.0
    %3725 = vmatpush1.msra.mxu0 %v1073
    %3726 = vmatprep.subr.mxu0 0.0
    %3727 = vmatpush1.msra.mxu0 %v1074
    %3728 = vmatprep.subr.mxu0 0.0
    %3729 = vmatpush1.msra.mxu0 %v1075
    %3730 = vmatprep.subr.mxu0 0.0
    %3731 = vmatpush1.msra.mxu0 %v1076
    %3732 = vmatprep.subr.mxu0 0.0
    %3733 = vmatpush1.msra.mxu0 %v1077
    %3734 = vmatprep.subr.mxu0 0.0
    %3735 = vmatpush1.msra.mxu0 %v1078
    %3736 = vmatprep.subr.mxu0 0.0
    %3737 = vmatpush1.msra.mxu0 %v1079
    %3738 = vmatprep.subr.mxu0 0.0
    %3739 = vmatpush1.msra.mxu0 %v1080
    %3740 = vmatprep.subr.mxu0 0.0
    %3741 = vmatpush1.msra.mxu0 %v1081
    %3742 = vmatprep.subr.mxu0 0.0
    %3743 = vmatpush1.msra.mxu0 %v1082
    %3744 = vmatprep.subr.mxu0 0.0
    %3745 = vmatpush1.msra.mxu0 %v1083
    %3746 = vmatprep.subr.mxu0 0.0
    %3747 = vmatpush1.msra.mxu0 %v1084
    %3748 = vmatprep.subr.mxu0 0.0
    %3749 = vmatpush1.msra.mxu0 %v1085
    %3750 = vmatprep.subr.mxu0 0.0
    %3751 = vmatpush1.msra.mxu0 %v1086
    %3752 = vmatprep.subr.mxu0 0.0
    %3753 = vmatpush1.msra.mxu0 %v1087
    %3754 = vmatprep.subr.mxu0 0.0
    %3755 = vmatpush1.msra.mxu0 %v1088
    %3756 = vmatprep.subr.mxu0 0.0
    %3757 = vmatpush1.msra.mxu0 %v1089
    %3758 = vmatprep.subr.mxu0 0.0
    %3759 = vmatpush1.msra.mxu0 %v1090
    %3760 = vmatprep.subr.mxu0 0.0
    %3761 = vmatpush1.msra.mxu0 %v1091
    %3762 = vmatprep.subr.mxu0 0.0
    %3763 = vmatpush1.msra.mxu0 %v1092
    %3764 = vmatprep.mubr.f32.mxu0 %v124
    %3765 = vmatmul.mubr.f32.gmra.mrb[0].mxu0 %v123
    %v3766 = vpop.f32.mrb[0].mxu0
    %v3767 = vadd.f32 %v3697, %v3766
    %v3768 = vpop.f32.mrb[0].mxu0
    %3769 = vdwg.mxu0
    %3770 = vmatprep.subr.mxu0 0.0
    %3771 = vmatpush1.msra.mxu0 %v1093
    %3772 = vmatprep.subr.mxu0 0.0
    %3773 = vmatpush1.msra.mxu0 %v1094
    %3774 = vmatprep.subr.mxu0 0.0
    %3775 = vmatpush1.msra.mxu0 %v1095
    %3776 = vmatprep.subr.mxu0 0.0
    %3777 = vmatpush1.msra.mxu0 %v1096
    %3778 = vmatprep.subr.mxu0 0.0
    %3779 = vmatpush1.msra.mxu0 %v1097
    %3780 = vmatprep.subr.mxu0 0.0
    %3781 = vmatpush1.msra.mxu0 %v1098
    %3782 = vmatprep.subr.mxu0 0.0
    %3783 = vmatpush1.msra.mxu0 %v1099
    %3784 = vmatprep.subr.mxu0 0.0
    %3785 = vmatpush1.msra.mxu0 %v1100
    %3786 = vmatprep.subr.mxu0 0.0
    %3787 = vmatpush1.msra.mxu0 %v1101
    %3788 = vmatprep.subr.mxu0 0.0
    %3789 = vmatpush1.msra.mxu0 %v1102
    %3790 = vmatprep.subr.mxu0 0.0
    %3791 = vmatpush1.msra.mxu0 %v1103
    %3792 = vmatprep.subr.mxu0 0.0
    %3793 = vmatpush1.msra.mxu0 %v1104
    %3794 = vmatprep.subr.mxu0 0.0
    %3795 = vmatpush1.msra.mxu0 %v1105
    %3796 = vmatprep.subr.mxu0 0.0
    %3797 = vmatpush1.msra.mxu0 %v1106
    %3798 = vmatprep.subr.mxu0 0.0
    %3799 = vmatpush1.msra.mxu0 %v1107
    %3800 = vmatprep.subr.mxu0 0.0
    %3801 = vmatpush1.msra.mxu0 %v1108
    %3802 = vmatprep.subr.mxu0 0.0
    %3803 = vmatpush1.msra.mxu0 %v1109
    %3804 = vmatprep.subr.mxu0 0.0
    %3805 = vmatpush1.msra.mxu0 %v1110
    %3806 = vmatprep.subr.mxu0 0.0
    %3807 = vmatpush1.msra.mxu0 %v1111
    %3808 = vmatprep.subr.mxu0 0.0
    %3809 = vmatpush1.msra.mxu0 %v1112
    %3810 = vmatprep.subr.mxu0 0.0
    %3811 = vmatpush1.msra.mxu0 %v1113
    %3812 = vmatprep.subr.mxu0 0.0
    %3813 = vmatpush1.msra.mxu0 %v1114
    %3814 = vmatprep.subr.mxu0 0.0
    %3815 = vmatpush1.msra.mxu0 %v1115
    %3816 = vmatprep.subr.mxu0 0.0
    %3817 = vmatpush1.msra.mxu0 %v1116
    %3818 = vmatprep.subr.mxu0 0.0
    %3819 = vmatpush1.msra.mxu0 %v1117
    %3820 = vmatprep.subr.mxu0 0.0
    %3821 = vmatpush1.msra.mxu0 %v1118
    %3822 = vmatprep.subr.mxu0 0.0
    %3823 = vmatpush1.msra.mxu0 %v1119
    %3824 = vmatprep.subr.mxu0 0.0
    %3825 = vmatpush1.msra.mxu0 %v1120
    %3826 = vmatprep.subr.mxu0 0.0
    %3827 = vmatpush1.msra.mxu0 %v1121
    %3828 = vmatprep.subr.mxu0 0.0
    %3829 = vmatpush1.msra.mxu0 %v1122
    %3830 = vmatprep.subr.mxu0 0.0
    %3831 = vmatpush1.msra.mxu0 %v1123
    %3832 = vmatprep.subr.mxu0 0.0
    %3833 = vmatpush1.msra.mxu0 %v1124
    %3834 = vmatprep.mubr.f32.mxu0 %v126
    %3835 = vmatmul.mubr.f32.gmra.mrb[0].mxu0 %v125
    %v3836 = vpop.f32.mrb[0].mxu0
    %v3837 = vadd.f32 %v3767, %v3836
    %v3838 = vpop.f32.mrb[0].mxu0
    %3839 = vdwg.mxu0
    %3840 = vmatprep.subr.mxu0 0.0
    %3841 = vmatpush1.msra.mxu0 %v1125
    %3842 = vmatprep.subr.mxu0 0.0
    %3843 = vmatpush1.msra.mxu0 %v1126
    %3844 = vmatprep.subr.mxu0 0.0
    %3845 = vmatpush1.msra.mxu0 %v1127
    %3846 = vmatprep.subr.mxu0 0.0
    %3847 = vmatpush1.msra.mxu0 %v1128
    %3848 = vmatprep.subr.mxu0 0.0
    %3849 = vmatpush1.msra.mxu0 %v1129
    %3850 = vmatprep.subr.mxu0 0.0
    %3851 = vmatpush1.msra.mxu0 %v1130
    %3852 = vmatprep.subr.mxu0 0.0
    %3853 = vmatpush1.msra.mxu0 %v1131
    %3854 = vmatprep.subr.mxu0 0.0
    %3855 = vmatpush1.msra.mxu0 %v1132
    %3856 = vmatprep.subr.mxu0 0.0
    %3857 = vmatpush1.msra.mxu0 %v1133
    %3858 = vmatprep.subr.mxu0 0.0
    %3859 = vmatpush1.msra.mxu0 %v1134
    %3860 = vmatprep.subr.mxu0 0.0
    %3861 = vmatpush1.msra.mxu0 %v1135
    %3862 = vmatprep.subr.mxu0 0.0
    %3863 = vmatpush1.msra.mxu0 %v1136
    %3864 = vmatprep.subr.mxu0 0.0
    %3865 = vmatpush1.msra.mxu0 %v1137
    %3866 = vmatprep.subr.mxu0 0.0
    %3867 = vmatpush1.msra.mxu0 %v1138
    %3868 = vmatprep.subr.mxu0 0.0
    %3869 = vmatpush1.msra.mxu0 %v1139
    %3870 = vmatprep.subr.mxu0 0.0
    %3871 = vmatpush1.msra.mxu0 %v1140
    %3872 = vmatprep.subr.mxu0 0.0
    %3873 = vmatpush1.msra.mxu0 %v1141
    %3874 = vmatprep.subr.mxu0 0.0
    %3875 = vmatpush1.msra.mxu0 %v1142
    %3876 = vmatprep.subr.mxu0 0.0
    %3877 = vmatpush1.msra.mxu0 %v1143
    %3878 = vmatprep.subr.mxu0 0.0
    %3879 = vmatpush1.msra.mxu0 %v1144
    %3880 = vmatprep.subr.mxu0 0.0
    %3881 = vmatpush1.msra.mxu0 %v1145
    %3882 = vmatprep.subr.mxu0 0.0
    %3883 = vmatpush1.msra.mxu0 %v1146
    %3884 = vmatprep.subr.mxu0 0.0
    %3885 = vmatpush1.msra.mxu0 %v1147
    %3886 = vmatprep.subr.mxu0 0.0
    %3887 = vmatpush1.msra.mxu0 %v1148
    %3888 = vmatprep.subr.mxu0 0.0
    %3889 = vmatpush1.msra.mxu0 %v1149
    %3890 = vmatprep.subr.mxu0 0.0
    %3891 = vmatpush1.msra.mxu0 %v1150
    %3892 = vmatprep.subr.mxu0 0.0
    %3893 = vmatpush1.msra.mxu0 %v1151
    %3894 = vmatprep.subr.mxu0 0.0
    %3895 = vmatpush1.msra.mxu0 %v1152
    %3896 = vmatprep.subr.mxu0 0.0
    %3897 = vmatpush1.msra.mxu0 %v1153
    %3898 = vmatprep.subr.mxu0 0.0
    %3899 = vmatpush1.msra.mxu0 %v1154
    %3900 = vmatprep.subr.mxu0 0.0
    %3901 = vmatpush1.msra.mxu0 %v1155
    %3902 = vmatprep.subr.mxu0 0.0
    %3903 = vmatpush1.msra.mxu0 %v1156
    %3904 = vmatprep.mubr.f32.mxu0 %v128
    %3905 = vmatmul.mubr.f32.gmra.mrb[0].mxu0 %v127
    %v3906 = vpop.f32.mrb[0].mxu0
    %v3907 = vadd.f32 %v3837, %v3906
    %v3908 = vpop.f32.mrb[0].mxu0
    %3909 = vdwg.mxu0
    %3910 = vmatprep.subr.mxu0 0.0
    %3911 = vmatpush1.msra.mxu0 %v1157
    %3912 = vmatprep.subr.mxu0 0.0
    %3913 = vmatpush1.msra.mxu0 %v1158
    %3914 = vmatprep.subr.mxu0 0.0
    %3915 = vmatpush1.msra.mxu0 %v1159
    %3916 = vmatprep.subr.mxu0 0.0
    %3917 = vmatpush1.msra.mxu0 %v1160
    %3918 = vmatprep.subr.mxu0 0.0
    %3919 = vmatpush1.msra.mxu0 %v1161
    %3920 = vmatprep.subr.mxu0 0.0
    %3921 = vmatpush1.msra.mxu0 %v1162
    %3922 = vmatprep.subr.mxu0 0.0
    %3923 = vmatpush1.msra.mxu0 %v1163
    %3924 = vmatprep.subr.mxu0 0.0
    %3925 = vmatpush1.msra.mxu0 %v1164
    %3926 = vmatprep.subr.mxu0 0.0
    %3927 = vmatpush1.msra.mxu0 %v1165
    %3928 = vmatprep.subr.mxu0 0.0
    %3929 = vmatpush1.msra.mxu0 %v1166
    %3930 = vmatprep.subr.mxu0 0.0
    %3931 = vmatpush1.msra.mxu0 %v1167
    %3932 = vmatprep.subr.mxu0 0.0
    %3933 = vmatpush1.msra.mxu0 %v1168
    %3934 = vmatprep.subr.mxu0 0.0
    %3935 = vmatpush1.msra.mxu0 %v1169
    %3936 = vmatprep.subr.mxu0 0.0
    %3937 = vmatpush1.msra.mxu0 %v1170
    %3938 = vmatprep.subr.mxu0 0.0
    %3939 = vmatpush1.msra.mxu0 %v1171
    %3940 = vmatprep.subr.mxu0 0.0
    %3941 = vmatpush1.msra.mxu0 %v1172
    %3942 = vmatprep.subr.mxu0 0.0
    %3943 = vmatpush1.msra.mxu0 %v1173
    %3944 = vmatprep.subr.mxu0 0.0
    %3945 = vmatpush1.msra.mxu0 %v1174
    %3946 = vmatprep.subr.mxu0 0.0
    %3947 = vmatpush1.msra.mxu0 %v1175
    %3948 = vmatprep.subr.mxu0 0.0
    %3949 = vmatpush1.msra.mxu0 %v1176
    %3950 = vmatprep.subr.mxu0 0.0
    %3951 = vmatpush1.msra.mxu0 %v1177
    %3952 = vmatprep.subr.mxu0 0.0
    %3953 = vmatpush1.msra.mxu0 %v1178
    %3954 = vmatprep.subr.mxu0 0.0
    %3955 = vmatpush1.msra.mxu0 %v1179
    %3956 = vmatprep.subr.mxu0 0.0
    %3957 = vmatpush1.msra.mxu0 %v1180
    %3958 = vmatprep.subr.mxu0 0.0
    %3959 = vmatpush1.msra.mxu0 %v1181
    %3960 = vmatprep.subr.mxu0 0.0
    %3961 = vmatpush1.msra.mxu0 %v1182
    %3962 = vmatprep.subr.mxu0 0.0
    %3963 = vmatpush1.msra.mxu0 %v1183
    %3964 = vmatprep.subr.mxu0 0.0
    %3965 = vmatpush1.msra.mxu0 %v1184
    %3966 = vmatprep.subr.mxu0 0.0
    %3967 = vmatpush1.msra.mxu0 %v1185
    %3968 = vmatprep.subr.mxu0 0.0
    %3969 = vmatpush1.msra.mxu0 %v1186
    %3970 = vmatprep.subr.mxu0 0.0
    %3971 = vmatpush1.msra.mxu0 %v1187
    %3972 = vmatprep.subr.mxu0 0.0
    %3973 = vmatpush1.msra.mxu0 %v1188
    %3974 = vmatprep.mubr.f32.mxu0 %v130
    %3975 = vmatmul.mubr.f32.gmra.mrb[0].mxu0 %v129
    %v3976 = vpop.f32.mrb[0].mxu0
    %v3977 = vadd.f32 %v3907, %v3976
    %v3978 = vpop.f32.mrb[0].mxu0
    %3979 = vdwg.mxu0
    %3980 = vmatprep.subr.mxu0 0.0
    %3981 = vmatpush1.msra.mxu0 %v1189
    %3982 = vmatprep.subr.mxu0 0.0
    %3983 = vmatpush1.msra.mxu0 %v1190
    %3984 = vmatprep.subr.mxu0 0.0
    %3985 = vmatpush1.msra.mxu0 %v1191
    %3986 = vmatprep.subr.mxu0 0.0
    %3987 = vmatpush1.msra.mxu0 %v1192
    %3988 = vmatprep.subr.mxu0 0.0
    %3989 = vmatpush1.msra.mxu0 %v1193
    %3990 = vmatprep.subr.mxu0 0.0
    %3991 = vmatpush1.msra.mxu0 %v1194
    %3992 = vmatprep.subr.mxu0 0.0
    %3993 = vmatpush1.msra.mxu0 %v1195
    %3994 = vmatprep.subr.mxu0 0.0
    %3995 = vmatpush1.msra.mxu0 %v1196
    %3996 = vmatprep.subr.mxu0 0.0
    %3997 = vmatpush1.msra.mxu0 %v1197
    %3998 = vmatprep.subr.mxu0 0.0
    %3999 = vmatpush1.msra.mxu0 %v1198
    %4000 = vmatprep.subr.mxu0 0.0
    %4001 = vmatpush1.msra.mxu0 %v1199
    %4002 = vmatprep.subr.mxu0 0.0
    %4003 = vmatpush1.msra.mxu0 %v1200
    %4004 = vmatprep.subr.mxu0 0.0
    %4005 = vmatpush1.msra.mxu0 %v1201
    %4006 = vmatprep.subr.mxu0 0.0
    %4007 = vmatpush1.msra.mxu0 %v1202
    %4008 = vmatprep.subr.mxu0 0.0
    %4009 = vmatpush1.msra.mxu0 %v1203
    %4010 = vmatprep.subr.mxu0 0.0
    %4011 = vmatpush1.msra.mxu0 %v1204
    %4012 = vmatprep.subr.mxu0 0.0
    %4013 = vmatpush1.msra.mxu0 %v1205
    %4014 = vmatprep.subr.mxu0 0.0
    %4015 = vmatpush1.msra.mxu0 %v1206
    %4016 = vmatprep.subr.mxu0 0.0
    %4017 = vmatpush1.msra.mxu0 %v1207
    %4018 = vmatprep.subr.mxu0 0.0
    %4019 = vmatpush1.msra.mxu0 %v1208
    %4020 = vmatprep.subr.mxu0 0.0
    %4021 = vmatpush1.msra.mxu0 %v1209
    %4022 = vmatprep.subr.mxu0 0.0
    %4023 = vmatpush1.msra.mxu0 %v1210
    %4024 = vmatprep.subr.mxu0 0.0
    %4025 = vmatpush1.msra.mxu0 %v1211
    %4026 = vmatprep.subr.mxu0 0.0
    %4027 = vmatpush1.msra.mxu0 %v1212
    %4028 = vmatprep.subr.mxu0 0.0
    %4029 = vmatpush1.msra.mxu0 %v1213
    %4030 = vmatprep.subr.mxu0 0.0
    %4031 = vmatpush1.msra.mxu0 %v1214
    %4032 = vmatprep.subr.mxu0 0.0
    %4033 = vmatpush1.msra.mxu0 %v1215
    %4034 = vmatprep.subr.mxu0 0.0
    %4035 = vmatpush1.msra.mxu0 %v1216
    %4036 = vmatprep.subr.mxu0 0.0
    %4037 = vmatpush1.msra.mxu0 %v1217
    %4038 = vmatprep.subr.mxu0 0.0
    %4039 = vmatpush1.msra.mxu0 %v1218
    %4040 = vmatprep.subr.mxu0 0.0
    %4041 = vmatpush1.msra.mxu0 %v1219
    %4042 = vmatprep.subr.mxu0 0.0
    %4043 = vmatpush1.msra.mxu0 %v1220
    %4044 = vmatprep.mubr.f32.mxu0 %v132
    %4045 = vmatmul.mubr.f32.gmra.mrb[0].mxu0 %v131
    %v4046 = vpop.f32.mrb[0].mxu0
    %v4047 = vadd.f32 %v3977, %v4046
    %v4048 = vpop.f32.mrb[0].mxu0
    %4049 = vdwg.mxu0
    %4050 = vmatprep.subr.mxu0 0.0
    %4051 = vmatpush1.msra.mxu0 %v1221
    %4052 = vmatprep.subr.mxu0 0.0
    %4053 = vmatpush1.msra.mxu0 %v1222
    %4054 = vmatprep.subr.mxu0 0.0
    %4055 = vmatpush1.msra.mxu0 %v1223
    %4056 = vmatprep.subr.mxu0 0.0
    %4057 = vmatpush1.msra.mxu0 %v1224
    %4058 = vmatprep.subr.mxu0 0.0
    %4059 = vmatpush1.msra.mxu0 %v1225
    %4060 = vmatprep.subr.mxu0 0.0
    %4061 = vmatpush1.msra.mxu0 %v1226
    %4062 = vmatprep.subr.mxu0 0.0
    %4063 = vmatpush1.msra.mxu0 %v1227
    %4064 = vmatprep.subr.mxu0 0.0
    %4065 = vmatpush1.msra.mxu0 %v1228
    %4066 = vmatprep.subr.mxu0 0.0
    %4067 = vmatpush1.msra.mxu0 %v1229
    %4068 = vmatprep.subr.mxu0 0.0
    %4069 = vmatpush1.msra.mxu0 %v1230
    %4070 = vmatprep.subr.mxu0 0.0
    %4071 = vmatpush1.msra.mxu0 %v1231
    %4072 = vmatprep.subr.mxu0 0.0
    %4073 = vmatpush1.msra.mxu0 %v1232
    %4074 = vmatprep.subr.mxu0 0.0
    %4075 = vmatpush1.msra.mxu0 %v1233
    %4076 = vmatprep.subr.mxu0 0.0
    %4077 = vmatpush1.msra.mxu0 %v1234
    %4078 = vmatprep.subr.mxu0 0.0
    %4079 = vmatpush1.msra.mxu0 %v1235
    %4080 = vmatprep.subr.mxu0 0.0
    %4081 = vmatpush1.msra.mxu0 %v1236
    %4082 = vmatprep.subr.mxu0 0.0
    %4083 = vmatpush1.msra.mxu0 %v1237
    %4084 = vmatprep.subr.mxu0 0.0
    %4085 = vmatpush1.msra.mxu0 %v1238
    %4086 = vmatprep.subr.mxu0 0.0
    %4087 = vmatpush1.msra.mxu0 %v1239
    %4088 = vmatprep.subr.mxu0 0.0
    %4089 = vmatpush1.msra.mxu0 %v1240
    %4090 = vmatprep.subr.mxu0 0.0
    %4091 = vmatpush1.msra.mxu0 %v1241
    %4092 = vmatprep.subr.mxu0 0.0
    %4093 = vmatpush1.msra.mxu0 %v1242
    %4094 = vmatprep.subr.mxu0 0.0
    %4095 = vmatpush1.msra.mxu0 %v1243
    %4096 = vmatprep.subr.mxu0 0.0
    %4097 = vmatpush1.msra.mxu0 %v1244
    %4098 = vmatprep.subr.mxu0 0.0
    %4099 = vmatpush1.msra.mxu0 %v1245
    %4100 = vmatprep.subr.mxu0 0.0
    %4101 = vmatpush1.msra.mxu0 %v1246
    %4102 = vmatprep.subr.mxu0 0.0
    %4103 = vmatpush1.msra.mxu0 %v1247
    %4104 = vmatprep.subr.mxu0 0.0
    %4105 = vmatpush1.msra.mxu0 %v1248
    %4106 = vmatprep.subr.mxu0 0.0
    %4107 = vmatpush1.msra.mxu0 %v1249
    %4108 = vmatprep.subr.mxu0 0.0
    %4109 = vmatpush1.msra.mxu0 %v1250
    %4110 = vmatprep.subr.mxu0 0.0
    %4111 = vmatpush1.msra.mxu0 %v1251
    %4112 = vmatprep.subr.mxu0 0.0
    %4113 = vmatpush1.msra.mxu0 %v1252
    %4114 = vmatprep.mubr.f32.mxu0 %v134
    %4115 = vmatmul.mubr.f32.gmra.mrb[0].mxu0 %v133
    %v4116 = vpop.f32.mrb[0].mxu0
    %v4117 = vadd.f32 %v4047, %v4116
    %v4118 = vpop.f32.mrb[0].mxu0
    %4119 = vdwg.mxu0
    %4120 = vmatprep.subr.mxu0 0.0
    %4121 = vmatpush1.msra.mxu0 %v1253
    %4122 = vmatprep.subr.mxu0 0.0
    %4123 = vmatpush1.msra.mxu0 %v1254
    %4124 = vmatprep.subr.mxu0 0.0
    %4125 = vmatpush1.msra.mxu0 %v1255
    %4126 = vmatprep.subr.mxu0 0.0
    %4127 = vmatpush1.msra.mxu0 %v1256
    %4128 = vmatprep.subr.mxu0 0.0
    %4129 = vmatpush1.msra.mxu0 %v1257
    %4130 = vmatprep.subr.mxu0 0.0
    %4131 = vmatpush1.msra.mxu0 %v1258
    %4132 = vmatprep.subr.mxu0 0.0
    %4133 = vmatpush1.msra.mxu0 %v1259
    %4134 = vmatprep.subr.mxu0 0.0
    %4135 = vmatpush1.msra.mxu0 %v1260
    %4136 = vmatprep.subr.mxu0 0.0
    %4137 = vmatpush1.msra.mxu0 %v1261
    %4138 = vmatprep.subr.mxu0 0.0
    %4139 = vmatpush1.msra.mxu0 %v1262
    %4140 = vmatprep.subr.mxu0 0.0
    %4141 = vmatpush1.msra.mxu0 %v1263
    %4142 = vmatprep.subr.mxu0 0.0
    %4143 = vmatpush1.msra.mxu0 %v1264
    %4144 = vmatprep.subr.mxu0 0.0
    %4145 = vmatpush1.msra.mxu0 %v1265
    %4146 = vmatprep.subr.mxu0 0.0
    %4147 = vmatpush1.msra.mxu0 %v1266
    %4148 = vmatprep.subr.mxu0 0.0
    %4149 = vmatpush1.msra.mxu0 %v1267
    %4150 = vmatprep.subr.mxu0 0.0
    %4151 = vmatpush1.msra.mxu0 %v1268
    %4152 = vmatprep.subr.mxu0 0.0
    %4153 = vmatpush1.msra.mxu0 %v1269
    %4154 = vmatprep.subr.mxu0 0.0
    %4155 = vmatpush1.msra.mxu0 %v1270
    %4156 = vmatprep.subr.mxu0 0.0
    %4157 = vmatpush1.msra.mxu0 %v1271
    %4158 = vmatprep.subr.mxu0 0.0
    %4159 = vmatpush1.msra.mxu0 %v1272
    %4160 = vmatprep.subr.mxu0 0.0
    %4161 = vmatpush1.msra.mxu0 %v1273
    %4162 = vmatprep.subr.mxu0 0.0
    %4163 = vmatpush1.msra.mxu0 %v1274
    %4164 = vmatprep.subr.mxu0 0.0
    %4165 = vmatpush1.msra.mxu0 %v1275
    %4166 = vmatprep.subr.mxu0 0.0
    %4167 = vmatpush1.msra.mxu0 %v1276
    %4168 = vmatprep.subr.mxu0 0.0
    %4169 = vmatpush1.msra.mxu0 %v1277
    %4170 = vmatprep.subr.mxu0 0.0
    %4171 = vmatpush1.msra.mxu0 %v1278
    %4172 = vmatprep.subr.mxu0 0.0
    %4173 = vmatpush1.msra.mxu0 %v1279
    %4174 = vmatprep.subr.mxu0 0.0
    %4175 = vmatpush1.msra.mxu0 %v1280
    %4176 = vmatprep.subr.mxu0 0.0
    %4177 = vmatpush1.msra.mxu0 %v1281
    %4178 = vmatprep.subr.mxu0 0.0
    %4179 = vmatpush1.msra.mxu0 %v1282
    %4180 = vmatprep.subr.mxu0 0.0
    %4181 = vmatpush1.msra.mxu0 %v1283
    %4182 = vmatprep.subr.mxu0 0.0
    %4183 = vmatpush1.msra.mxu0 %v1284
    %4184 = vmatprep.mubr.f32.mxu0 %v136
    %4185 = vmatmul.mubr.f32.gmra.mrb[0].mxu0 %v135
    %v4186 = vpop.f32.mrb[0].mxu0
    %v4187 = vadd.f32 %v4117, %v4186
    %v4188 = vpop.f32.mrb[0].mxu0
    %4189 = vdwg.mxu0
    %4190 = vmatprep.subr.mxu0 0.0
    %4191 = vmatpush1.msra.mxu0 %v1285
    %4192 = vmatprep.subr.mxu0 0.0
    %4193 = vmatpush1.msra.mxu0 %v1286
    %4194 = vmatprep.subr.mxu0 0.0
    %4195 = vmatpush1.msra.mxu0 %v1287
    %4196 = vmatprep.subr.mxu0 0.0
    %4197 = vmatpush1.msra.mxu0 %v1288
    %4198 = vmatprep.subr.mxu0 0.0
    %4199 = vmatpush1.msra.mxu0 %v1289
    %4200 = vmatprep.subr.mxu0 0.0
    %4201 = vmatpush1.msra.mxu0 %v1290
    %4202 = vmatprep.subr.mxu0 0.0
    %4203 = vmatpush1.msra.mxu0 %v1291
    %4204 = vmatprep.subr.mxu0 0.0
    %4205 = vmatpush1.msra.mxu0 %v1292
    %4206 = vmatprep.subr.mxu0 0.0
    %4207 = vmatpush1.msra.mxu0 %v1293
    %4208 = vmatprep.subr.mxu0 0.0
    %4209 = vmatpush1.msra.mxu0 %v1294
    %4210 = vmatprep.subr.mxu0 0.0
    %4211 = vmatpush1.msra.mxu0 %v1295
    %4212 = vmatprep.subr.mxu0 0.0
    %4213 = vmatpush1.msra.mxu0 %v1296
    %4214 = vmatprep.subr.mxu0 0.0
    %4215 = vmatpush1.msra.mxu0 %v1297
    %4216 = vmatprep.subr.mxu0 0.0
    %4217 = vmatpush1.msra.mxu0 %v1298
    %4218 = vmatprep.subr.mxu0 0.0
    %4219 = vmatpush1.msra.mxu0 %v1299
    %4220 = vmatprep.subr.mxu0 0.0
    %4221 = vmatpush1.msra.mxu0 %v1300
    %4222 = vmatprep.subr.mxu0 0.0
    %4223 = vmatpush1.msra.mxu0 %v1301
    %4224 = vmatprep.subr.mxu0 0.0
    %4225 = vmatpush1.msra.mxu0 %v1302
    %4226 = vmatprep.subr.mxu0 0.0
    %4227 = vmatpush1.msra.mxu0 %v1303
    %4228 = vmatprep.subr.mxu0 0.0
    %4229 = vmatpush1.msra.mxu0 %v1304
    %4230 = vmatprep.subr.mxu0 0.0
    %4231 = vmatpush1.msra.mxu0 %v1305
    %4232 = vmatprep.subr.mxu0 0.0
    %4233 = vmatpush1.msra.mxu0 %v1306
    %4234 = vmatprep.subr.mxu0 0.0
    %4235 = vmatpush1.msra.mxu0 %v1307
    %4236 = vmatprep.subr.mxu0 0.0
    %4237 = vmatpush1.msra.mxu0 %v1308
    %4238 = vmatprep.subr.mxu0 0.0
    %4239 = vmatpush1.msra.mxu0 %v1309
    %4240 = vmatprep.subr.mxu0 0.0
    %4241 = vmatpush1.msra.mxu0 %v1310
    %4242 = vmatprep.subr.mxu0 0.0
    %4243 = vmatpush1.msra.mxu0 %v1311
    %4244 = vmatprep.subr.mxu0 0.0
    %4245 = vmatpush1.msra.mxu0 %v1312
    %4246 = vmatprep.subr.mxu0 0.0
    %4247 = vmatpush1.msra.mxu0 %v1313
    %4248 = vmatprep.subr.mxu0 0.0
    %4249 = vmatpush1.msra.mxu0 %v1314
    %4250 = vmatprep.subr.mxu0 0.0
    %4251 = vmatpush1.msra.mxu0 %v1315
    %4252 = vmatprep.subr.mxu0 0.0
    %4253 = vmatpush1.msra.mxu0 %v1316
    %4254 = vmatprep.mubr.f32.mxu0 %v138
    %4255 = vmatmul.mubr.f32.gmra.mrb[0].mxu0 %v137
    %v4256 = vpop.f32.mrb[0].mxu0
    %v4257 = vadd.f32 %v4187, %v4256
    %v4258 = vpop.f32.mrb[0].mxu0
    %4259 = vdwg.mxu0
    %4260 = vmatprep.subr.mxu0 0.0
    %4261 = vmatpush1.msra.mxu0 %v1317
    %4262 = vmatprep.subr.mxu0 0.0
    %4263 = vmatpush1.msra.mxu0 %v1318
    %4264 = vmatprep.subr.mxu0 0.0
    %4265 = vmatpush1.msra.mxu0 %v1319
    %4266 = vmatprep.subr.mxu0 0.0
    %4267 = vmatpush1.msra.mxu0 %v1320
    %4268 = vmatprep.subr.mxu0 0.0
    %4269 = vmatpush1.msra.mxu0 %v1321
    %4270 = vmatprep.subr.mxu0 0.0
    %4271 = vmatpush1.msra.mxu0 %v1322
    %4272 = vmatprep.subr.mxu0 0.0
    %4273 = vmatpush1.msra.mxu0 %v1323
    %4274 = vmatprep.subr.mxu0 0.0
    %4275 = vmatpush1.msra.mxu0 %v1324
    %4276 = vmatprep.subr.mxu0 0.0
    %4277 = vmatpush1.msra.mxu0 %v1325
    %4278 = vmatprep.subr.mxu0 0.0
    %4279 = vmatpush1.msra.mxu0 %v1326
    %4280 = vmatprep.subr.mxu0 0.0
    %4281 = vmatpush1.msra.mxu0 %v1327
    %4282 = vmatprep.subr.mxu0 0.0
    %4283 = vmatpush1.msra.mxu0 %v1328
    %4284 = vmatprep.subr.mxu0 0.0
    %4285 = vmatpush1.msra.mxu0 %v1329
    %4286 = vmatprep.subr.mxu0 0.0
    %4287 = vmatpush1.msra.mxu0 %v1330
    %4288 = vmatprep.subr.mxu0 0.0
    %4289 = vmatpush1.msra.mxu0 %v1331
    %4290 = vmatprep.subr.mxu0 0.0
    %4291 = vmatpush1.msra.mxu0 %v1332
    %4292 = vmatprep.subr.mxu0 0.0
    %4293 = vmatpush1.msra.mxu0 %v1333
    %4294 = vmatprep.subr.mxu0 0.0
    %4295 = vmatpush1.msra.mxu0 %v1334
    %4296 = vmatprep.subr.mxu0 0.0
    %4297 = vmatpush1.msra.mxu0 %v1335
    %4298 = vmatprep.subr.mxu0 0.0
    %4299 = vmatpush1.msra.mxu0 %v1336
    %4300 = vmatprep.subr.mxu0 0.0
    %4301 = vmatpush1.msra.mxu0 %v1337
    %4302 = vmatprep.subr.mxu0 0.0
    %4303 = vmatpush1.msra.mxu0 %v1338
    %4304 = vmatprep.subr.mxu0 0.0
    %4305 = vmatpush1.msra.mxu0 %v1339
    %4306 = vmatprep.subr.mxu0 0.0
    %4307 = vmatpush1.msra.mxu0 %v1340
    %4308 = vmatprep.subr.mxu0 0.0
    %4309 = vmatpush1.msra.mxu0 %v1341
    %4310 = vmatprep.subr.mxu0 0.0
    %4311 = vmatpush1.msra.mxu0 %v1342
    %4312 = vmatprep.subr.mxu0 0.0
    %4313 = vmatpush1.msra.mxu0 %v1343
    %4314 = vmatprep.subr.mxu0 0.0
    %4315 = vmatpush1.msra.mxu0 %v1344
    %4316 = vmatprep.subr.mxu0 0.0
    %4317 = vmatpush1.msra.mxu0 %v1345
    %4318 = vmatprep.subr.mxu0 0.0
    %4319 = vmatpush1.msra.mxu0 %v1346
    %4320 = vmatprep.subr.mxu0 0.0
    %4321 = vmatpush1.msra.mxu0 %v1347
    %4322 = vmatprep.subr.mxu0 0.0
    %4323 = vmatpush1.msra.mxu0 %v1348
    %4324 = vmatprep.mubr.f32.mxu0 %v140
    %4325 = vmatmul.mubr.f32.gmra.mrb[0].mxu0 %v139
    %v4326 = vpop.f32.mrb[0].mxu0
    %v4327 = vadd.f32 %v4257, %v4326
    %v4328 = vpop.f32.mrb[0].mxu0
    %4329 = vdwg.mxu0
    %4330 = vmatprep.subr.mxu0 0.0
    %4331 = vmatpush1.msra.mxu0 %v1349
    %4332 = vmatprep.subr.mxu0 0.0
    %4333 = vmatpush1.msra.mxu0 %v1350
    %4334 = vmatprep.subr.mxu0 0.0
    %4335 = vmatpush1.msra.mxu0 %v1351
    %4336 = vmatprep.subr.mxu0 0.0
    %4337 = vmatpush1.msra.mxu0 %v1352
    %4338 = vmatprep.subr.mxu0 0.0
    %4339 = vmatpush1.msra.mxu0 %v1353
    %4340 = vmatprep.subr.mxu0 0.0
    %4341 = vmatpush1.msra.mxu0 %v1354
    %4342 = vmatprep.subr.mxu0 0.0
    %4343 = vmatpush1.msra.mxu0 %v1355
    %4344 = vmatprep.subr.mxu0 0.0
    %4345 = vmatpush1.msra.mxu0 %v1356
    %4346 = vmatprep.subr.mxu0 0.0
    %4347 = vmatpush1.msra.mxu0 %v1357
    %4348 = vmatprep.subr.mxu0 0.0
    %4349 = vmatpush1.msra.mxu0 %v1358
    %4350 = vmatprep.subr.mxu0 0.0
    %4351 = vmatpush1.msra.mxu0 %v1359
    %4352 = vmatprep.subr.mxu0 0.0
    %4353 = vmatpush1.msra.mxu0 %v1360
    %4354 = vmatprep.subr.mxu0 0.0
    %4355 = vmatpush1.msra.mxu0 %v1361
    %4356 = vmatprep.subr.mxu0 0.0
    %4357 = vmatpush1.msra.mxu0 %v1362
    %4358 = vmatprep.subr.mxu0 0.0
    %4359 = vmatpush1.msra.mxu0 %v1363
    %4360 = vmatprep.subr.mxu0 0.0
    %4361 = vmatpush1.msra.mxu0 %v1364
    %4362 = vmatprep.subr.mxu0 0.0
    %4363 = vmatpush1.msra.mxu0 %v1365
    %4364 = vmatprep.subr.mxu0 0.0
    %4365 = vmatpush1.msra.mxu0 %v1366
    %4366 = vmatprep.subr.mxu0 0.0
    %4367 = vmatpush1.msra.mxu0 %v1367
    %4368 = vmatprep.subr.mxu0 0.0
    %4369 = vmatpush1.msra.mxu0 %v1368
    %4370 = vmatprep.subr.mxu0 0.0
    %4371 = vmatpush1.msra.mxu0 %v1369
    %4372 = vmatprep.subr.mxu0 0.0
    %4373 = vmatpush1.msra.mxu0 %v1370
    %4374 = vmatprep.subr.mxu0 0.0
    %4375 = vmatpush1.msra.mxu0 %v1371
    %4376 = vmatprep.subr.mxu0 0.0
    %4377 = vmatpush1.msra.mxu0 %v1372
    %4378 = vmatprep.subr.mxu0 0.0
    %4379 = vmatpush1.msra.mxu0 %v1373
    %4380 = vmatprep.subr.mxu0 0.0
    %4381 = vmatpush1.msra.mxu0 %v1374
    %4382 = vmatprep.subr.mxu0 0.0
    %4383 = vmatpush1.msra.mxu0 %v1375
    %4384 = vmatprep.subr.mxu0 0.0
    %4385 = vmatpush1.msra.mxu0 %v1376
    %4386 = vmatprep.subr.mxu0 0.0
    %4387 = vmatpush1.msra.mxu0 %v1377
    %4388 = vmatprep.subr.mxu0 0.0
    %4389 = vmatpush1.msra.mxu0 %v1378
    %4390 = vmatprep.subr.mxu0 0.0
    %4391 = vmatpush1.msra.mxu0 %v1379
    %4392 = vmatprep.subr.mxu0 0.0
    %4393 = vmatpush1.msra.mxu0 %v1380
    %4394 = vmatprep.mubr.f32.mxu0 %v142
    %4395 = vmatmul.mubr.f32.gmra.mrb[0].mxu0 %v141
    %v4396 = vpop.f32.mrb[0].mxu0
    %v4397 = vadd.f32 %v4327, %v4396
    %v4398 = vpop.f32.mrb[0].mxu0
    %4399 = vdwg.mxu0
    %4400 = vmatprep.subr.mxu0 0.0
    %4401 = vmatpush1.msra.mxu0 %v1381
    %4402 = vmatprep.subr.mxu0 0.0
    %4403 = vmatpush1.msra.mxu0 %v1382
    %4404 = vmatprep.subr.mxu0 0.0
    %4405 = vmatpush1.msra.mxu0 %v1383
    %4406 = vmatprep.subr.mxu0 0.0
    %4407 = vmatpush1.msra.mxu0 %v1384
    %4408 = vmatprep.subr.mxu0 0.0
    %4409 = vmatpush1.msra.mxu0 %v1385
    %4410 = vmatprep.subr.mxu0 0.0
    %4411 = vmatpush1.msra.mxu0 %v1386
    %4412 = vmatprep.subr.mxu0 0.0
    %4413 = vmatpush1.msra.mxu0 %v1387
    %4414 = vmatprep.subr.mxu0 0.0
    %4415 = vmatpush1.msra.mxu0 %v1388
    %4416 = vmatprep.subr.mxu0 0.0
    %4417 = vmatpush1.msra.mxu0 %v1389
    %4418 = vmatprep.subr.mxu0 0.0
    %4419 = vmatpush1.msra.mxu0 %v1390
    %4420 = vmatprep.subr.mxu0 0.0
    %4421 = vmatpush1.msra.mxu0 %v1391
    %4422 = vmatprep.subr.mxu0 0.0
    %4423 = vmatpush1.msra.mxu0 %v1392
    %4424 = vmatprep.subr.mxu0 0.0
    %4425 = vmatpush1.msra.mxu0 %v1393
    %4426 = vmatprep.subr.mxu0 0.0
    %4427 = vmatpush1.msra.mxu0 %v1394
    %4428 = vmatprep.subr.mxu0 0.0
    %4429 = vmatpush1.msra.mxu0 %v1395
    %4430 = vmatprep.subr.mxu0 0.0
    %4431 = vmatpush1.msra.mxu0 %v1396
    %4432 = vmatprep.subr.mxu0 0.0
    %4433 = vmatpush1.msra.mxu0 %v1397
    %4434 = vmatprep.subr.mxu0 0.0
    %4435 = vmatpush1.msra.mxu0 %v1398
    %4436 = vmatprep.subr.mxu0 0.0
    %4437 = vmatpush1.msra.mxu0 %v1399
    %4438 = vmatprep.subr.mxu0 0.0
    %4439 = vmatpush1.msra.mxu0 %v1400
    %4440 = vmatprep.subr.mxu0 0.0
    %4441 = vmatpush1.msra.mxu0 %v1401
    %4442 = vmatprep.subr.mxu0 0.0
    %4443 = vmatpush1.msra.mxu0 %v1402
    %4444 = vmatprep.subr.mxu0 0.0
    %4445 = vmatpush1.msra.mxu0 %v1403
    %4446 = vmatprep.subr.mxu0 0.0
    %4447 = vmatpush1.msra.mxu0 %v1404
    %4448 = vmatprep.subr.mxu0 0.0
    %4449 = vmatpush1.msra.mxu0 %v1405
    %4450 = vmatprep.subr.mxu0 0.0
    %4451 = vmatpush1.msra.mxu0 %v1406
    %4452 = vmatprep.subr.mxu0 0.0
    %4453 = vmatpush1.msra.mxu0 %v1407
    %4454 = vmatprep.subr.mxu0 0.0
    %4455 = vmatpush1.msra.mxu0 %v1408
    %4456 = vmatprep.subr.mxu0 0.0
    %4457 = vmatpush1.msra.mxu0 %v1409
    %4458 = vmatprep.subr.mxu0 0.0
    %4459 = vmatpush1.msra.mxu0 %v1410
    %4460 = vmatprep.subr.mxu0 0.0
    %4461 = vmatpush1.msra.mxu0 %v1411
    %4462 = vmatprep.subr.mxu0 0.0
    %4463 = vmatpush1.msra.mxu0 %v1412
    %4464 = vmatprep.mubr.f32.mxu0 %v144
    %4465 = vmatmul.mubr.f32.gmra.mrb[0].mxu0 %v143
    %v4466 = vpop.f32.mrb[0].mxu0
    %v4467 = vadd.f32 %v4397, %v4466
    %v4468 = vpop.f32.mrb[0].mxu0
    %4469 = vdwg.mxu0
    %4470 = vmatprep.subr.mxu0 0.0
    %4471 = vmatpush1.msra.mxu0 %v1413
    %4472 = vmatprep.subr.mxu0 0.0
    %4473 = vmatpush1.msra.mxu0 %v1414
    %4474 = vmatprep.subr.mxu0 0.0
    %4475 = vmatpush1.msra.mxu0 %v1415
    %4476 = vmatprep.subr.mxu0 0.0
    %4477 = vmatpush1.msra.mxu0 %v1416
    %4478 = vmatprep.subr.mxu0 0.0
    %4479 = vmatpush1.msra.mxu0 %v1417
    %4480 = vmatprep.subr.mxu0 0.0
    %4481 = vmatpush1.msra.mxu0 %v1418
    %4482 = vmatprep.subr.mxu0 0.0
    %4483 = vmatpush1.msra.mxu0 %v1419
    %4484 = vmatprep.subr.mxu0 0.0
    %4485 = vmatpush1.msra.mxu0 %v1420
    %4486 = vmatprep.subr.mxu0 0.0
    %4487 = vmatpush1.msra.mxu0 %v1421
    %4488 = vmatprep.subr.mxu0 0.0
    %4489 = vmatpush1.msra.mxu0 %v1422
    %4490 = vmatprep.subr.mxu0 0.0
    %4491 = vmatpush1.msra.mxu0 %v1423
    %4492 = vmatprep.subr.mxu0 0.0
    %4493 = vmatpush1.msra.mxu0 %v1424
    %4494 = vmatprep.subr.mxu0 0.0
    %4495 = vmatpush1.msra.mxu0 %v1425
    %4496 = vmatprep.subr.mxu0 0.0
    %4497 = vmatpush1.msra.mxu0 %v1426
    %4498 = vmatprep.subr.mxu0 0.0
    %4499 = vmatpush1.msra.mxu0 %v1427
    %4500 = vmatprep.subr.mxu0 0.0
    %4501 = vmatpush1.msra.mxu0 %v1428
    %4502 = vmatprep.subr.mxu0 0.0
    %4503 = vmatpush1.msra.mxu0 %v1429
    %4504 = vmatprep.subr.mxu0 0.0
    %4505 = vmatpush1.msra.mxu0 %v1430
    %4506 = vmatprep.subr.mxu0 0.0
    %4507 = vmatpush1.msra.mxu0 %v1431
    %4508 = vmatprep.subr.mxu0 0.0
    %4509 = vmatpush1.msra.mxu0 %v1432
    %4510 = vmatprep.subr.mxu0 0.0
    %4511 = vmatpush1.msra.mxu0 %v1433
    %4512 = vmatprep.subr.mxu0 0.0
    %4513 = vmatpush1.msra.mxu0 %v1434
    %4514 = vmatprep.subr.mxu0 0.0
    %4515 = vmatpush1.msra.mxu0 %v1435
    %4516 = vmatprep.subr.mxu0 0.0
    %4517 = vmatpush1.msra.mxu0 %v1436
    %4518 = vmatprep.subr.mxu0 0.0
    %4519 = vmatpush1.msra.mxu0 %v1437
    %4520 = vmatprep.subr.mxu0 0.0
    %4521 = vmatpush1.msra.mxu0 %v1438
    %4522 = vmatprep.subr.mxu0 0.0
    %4523 = vmatpush1.msra.mxu0 %v1439
    %4524 = vmatprep.subr.mxu0 0.0
    %4525 = vmatpush1.msra.mxu0 %v1440
    %4526 = vmatprep.subr.mxu0 0.0
    %4527 = vmatpush1.msra.mxu0 %v1441
    %4528 = vmatprep.subr.mxu0 0.0
    %4529 = vmatpush1.msra.mxu0 %v1442
    %4530 = vmatprep.subr.mxu0 0.0
    %4531 = vmatpush1.msra.mxu0 %v1443
    %4532 = vmatprep.subr.mxu0 0.0
    %4533 = vmatpush1.msra.mxu0 %v1444
    %4534 = vmatprep.mubr.f32.mxu0 %v146
    %4535 = vmatmul.mubr.f32.gmra.mrb[0].mxu0 %v145
    %v4536 = vpop.f32.mrb[0].mxu0
    %v4537 = vadd.f32 %v4467, %v4536
    %v4538 = vpop.f32.mrb[0].mxu0
    %4539 = vdwg.mxu0
    %4540 = vmatprep.subr.mxu0 0.0
    %4541 = vmatpush1.msra.mxu0 %v1445
    %4542 = vmatprep.subr.mxu0 0.0
    %4543 = vmatpush1.msra.mxu0 %v1446
    %4544 = vmatprep.subr.mxu0 0.0
    %4545 = vmatpush1.msra.mxu0 %v1447
    %4546 = vmatprep.subr.mxu0 0.0
    %4547 = vmatpush1.msra.mxu0 %v1448
    %4548 = vmatprep.subr.mxu0 0.0
    %4549 = vmatpush1.msra.mxu0 %v1449
    %4550 = vmatprep.subr.mxu0 0.0
    %4551 = vmatpush1.msra.mxu0 %v1450
    %4552 = vmatprep.subr.mxu0 0.0
    %4553 = vmatpush1.msra.mxu0 %v1451
    %4554 = vmatprep.subr.mxu0 0.0
    %4555 = vmatpush1.msra.mxu0 %v1452
    %4556 = vmatprep.subr.mxu0 0.0
    %4557 = vmatpush1.msra.mxu0 %v1453
    %4558 = vmatprep.subr.mxu0 0.0
    %4559 = vmatpush1.msra.mxu0 %v1454
    %4560 = vmatprep.subr.mxu0 0.0
    %4561 = vmatpush1.msra.mxu0 %v1455
    %4562 = vmatprep.subr.mxu0 0.0
    %4563 = vmatpush1.msra.mxu0 %v1456
    %4564 = vmatprep.subr.mxu0 0.0
    %4565 = vmatpush1.msra.mxu0 %v1457
    %4566 = vmatprep.subr.mxu0 0.0
    %4567 = vmatpush1.msra.mxu0 %v1458
    %4568 = vmatprep.subr.mxu0 0.0
    %4569 = vmatpush1.msra.mxu0 %v1459
    %4570 = vmatprep.subr.mxu0 0.0
    %4571 = vmatpush1.msra.mxu0 %v1460
    %4572 = vmatprep.subr.mxu0 0.0
    %4573 = vmatpush1.msra.mxu0 %v1461
    %4574 = vmatprep.subr.mxu0 0.0
    %4575 = vmatpush1.msra.mxu0 %v1462
    %4576 = vmatprep.subr.mxu0 0.0
    %4577 = vmatpush1.msra.mxu0 %v1463
    %4578 = vmatprep.subr.mxu0 0.0
    %4579 = vmatpush1.msra.mxu0 %v1464
    %4580 = vmatprep.subr.mxu0 0.0
    %4581 = vmatpush1.msra.mxu0 %v1465
    %4582 = vmatprep.subr.mxu0 0.0
    %4583 = vmatpush1.msra.mxu0 %v1466
    %4584 = vmatprep.subr.mxu0 0.0
    %4585 = vmatpush1.msra.mxu0 %v1467
    %4586 = vmatprep.subr.mxu0 0.0
    %4587 = vmatpush1.msra.mxu0 %v1468
    %4588 = vmatprep.subr.mxu0 0.0
    %4589 = vmatpush1.msra.mxu0 %v1469
    %4590 = vmatprep.subr.mxu0 0.0
    %4591 = vmatpush1.msra.mxu0 %v1470
    %4592 = vmatprep.subr.mxu0 0.0
    %4593 = vmatpush1.msra.mxu0 %v1471
    %4594 = vmatprep.subr.mxu0 0.0
    %4595 = vmatpush1.msra.mxu0 %v1472
    %4596 = vmatprep.subr.mxu0 0.0
    %4597 = vmatpush1.msra.mxu0 %v1473
    %4598 = vmatprep.subr.mxu0 0.0
    %4599 = vmatpush1.msra.mxu0 %v1474
    %4600 = vmatprep.subr.mxu0 0.0
    %4601 = vmatpush1.msra.mxu0 %v1475
    %4602 = vmatprep.subr.mxu0 0.0
    %4603 = vmatpush1.msra.mxu0 %v1476
    %4604 = vmatprep.mubr.f32.mxu0 %v148
    %4605 = vmatmul.mubr.f32.gmra.mrb[0].mxu0 %v147
    %v4606 = vpop.f32.mrb[0].mxu0
    %v4607 = vadd.f32 %v4537, %v4606
    %v4608 = vpop.f32.mrb[0].mxu0
    %4609 = vdwg.mxu0
    %4610 = vmatprep.subr.mxu0 0.0
    %4611 = vmatpush1.msra.mxu0 %v1477
    %4612 = vmatprep.subr.mxu0 0.0
    %4613 = vmatpush1.msra.mxu0 %v1478
    %4614 = vmatprep.subr.mxu0 0.0
    %4615 = vmatpush1.msra.mxu0 %v1479
    %4616 = vmatprep.subr.mxu0 0.0
    %4617 = vmatpush1.msra.mxu0 %v1480
    %4618 = vmatprep.subr.mxu0 0.0
    %4619 = vmatpush1.msra.mxu0 %v1481
    %4620 = vmatprep.subr.mxu0 0.0
    %4621 = vmatpush1.msra.mxu0 %v1482
    %4622 = vmatprep.subr.mxu0 0.0
    %4623 = vmatpush1.msra.mxu0 %v1483
    %4624 = vmatprep.subr.mxu0 0.0
    %4625 = vmatpush1.msra.mxu0 %v1484
    %4626 = vmatprep.subr.mxu0 0.0
    %4627 = vmatpush1.msra.mxu0 %v1485
    %4628 = vmatprep.subr.mxu0 0.0
    %4629 = vmatpush1.msra.mxu0 %v1486
    %4630 = vmatprep.subr.mxu0 0.0
    %4631 = vmatpush1.msra.mxu0 %v1487
    %4632 = vmatprep.subr.mxu0 0.0
    %4633 = vmatpush1.msra.mxu0 %v1488
    %4634 = vmatprep.subr.mxu0 0.0
    %4635 = vmatpush1.msra.mxu0 %v1489
    %4636 = vmatprep.subr.mxu0 0.0
    %4637 = vmatpush1.msra.mxu0 %v1490
    %4638 = vmatprep.subr.mxu0 0.0
    %4639 = vmatpush1.msra.mxu0 %v1491
    %4640 = vmatprep.subr.mxu0 0.0
    %4641 = vmatpush1.msra.mxu0 %v1492
    %4642 = vmatprep.subr.mxu0 0.0
    %4643 = vmatpush1.msra.mxu0 %v1493
    %4644 = vmatprep.subr.mxu0 0.0
    %4645 = vmatpush1.msra.mxu0 %v1494
    %4646 = vmatprep.subr.mxu0 0.0
    %4647 = vmatpush1.msra.mxu0 %v1495
    %4648 = vmatprep.subr.mxu0 0.0
    %4649 = vmatpush1.msra.mxu0 %v1496
    %4650 = vmatprep.subr.mxu0 0.0
    %4651 = vmatpush1.msra.mxu0 %v1497
    %4652 = vmatprep.subr.mxu0 0.0
    %4653 = vmatpush1.msra.mxu0 %v1498
    %4654 = vmatprep.subr.mxu0 0.0
    %4655 = vmatpush1.msra.mxu0 %v1499
    %4656 = vmatprep.subr.mxu0 0.0
    %4657 = vmatpush1.msra.mxu0 %v1500
    %4658 = vmatprep.subr.mxu0 0.0
    %4659 = vmatpush1.msra.mxu0 %v1501
    %4660 = vmatprep.subr.mxu0 0.0
    %4661 = vmatpush1.msra.mxu0 %v1502
    %4662 = vmatprep.subr.mxu0 0.0
    %4663 = vmatpush1.msra.mxu0 %v1503
    %4664 = vmatprep.subr.mxu0 0.0
    %4665 = vmatpush1.msra.mxu0 %v1504
    %4666 = vmatprep.subr.mxu0 0.0
    %4667 = vmatpush1.msra.mxu0 %v1505
    %4668 = vmatprep.subr.mxu0 0.0
    %4669 = vmatpush1.msra.mxu0 %v1506
    %4670 = vmatprep.subr.mxu0 0.0
    %4671 = vmatpush1.msra.mxu0 %v1507
    %4672 = vmatprep.subr.mxu0 0.0
    %4673 = vmatpush1.msra.mxu0 %v1508
    %4674 = vmatprep.mubr.f32.mxu0 %v150
    %4675 = vmatmul.mubr.f32.gmra.mrb[0].mxu0 %v149
    %v4676 = vpop.f32.mrb[0].mxu0
    %v4677 = vadd.f32 %v4607, %v4676
    %v4678 = vpop.f32.mrb[0].mxu0
    %4679 = vdwg.mxu0
    %4680 = vmatprep.subr.mxu0 0.0
    %4681 = vmatpush1.msra.mxu0 %v1509
    %4682 = vmatprep.subr.mxu0 0.0
    %4683 = vmatpush1.msra.mxu0 %v1510
    %4684 = vmatprep.subr.mxu0 0.0
    %4685 = vmatpush1.msra.mxu0 %v1511
    %4686 = vmatprep.subr.mxu0 0.0
    %4687 = vmatpush1.msra.mxu0 %v1512
    %4688 = vmatprep.subr.mxu0 0.0
    %4689 = vmatpush1.msra.mxu0 %v1513
    %4690 = vmatprep.subr.mxu0 0.0
    %4691 = vmatpush1.msra.mxu0 %v1514
    %4692 = vmatprep.subr.mxu0 0.0
    %4693 = vmatpush1.msra.mxu0 %v1515
    %4694 = vmatprep.subr.mxu0 0.0
    %4695 = vmatpush1.msra.mxu0 %v1516
    %4696 = vmatprep.subr.mxu0 0.0
    %4697 = vmatpush1.msra.mxu0 %v1517
    %4698 = vmatprep.subr.mxu0 0.0
    %4699 = vmatpush1.msra.mxu0 %v1518
    %4700 = vmatprep.subr.mxu0 0.0
    %4701 = vmatpush1.msra.mxu0 %v1519
    %4702 = vmatprep.subr.mxu0 0.0
    %4703 = vmatpush1.msra.mxu0 %v1520
    %4704 = vmatprep.subr.mxu0 0.0
    %4705 = vmatpush1.msra.mxu0 %v1521
    %4706 = vmatprep.subr.mxu0 0.0
    %4707 = vmatpush1.msra.mxu0 %v1522
    %4708 = vmatprep.subr.mxu0 0.0
    %4709 = vmatpush1.msra.mxu0 %v1523
    %4710 = vmatprep.subr.mxu0 0.0
    %4711 = vmatpush1.msra.mxu0 %v1524
    %4712 = vmatprep.subr.mxu0 0.0
    %4713 = vmatpush1.msra.mxu0 %v1525
    %4714 = vmatprep.subr.mxu0 0.0
    %4715 = vmatpush1.msra.mxu0 %v1526
    %4716 = vmatprep.subr.mxu0 0.0
    %4717 = vmatpush1.msra.mxu0 %v1527
    %4718 = vmatprep.subr.mxu0 0.0
    %4719 = vmatpush1.msra.mxu0 %v1528
    %4720 = vmatprep.subr.mxu0 0.0
    %4721 = vmatpush1.msra.mxu0 %v1529
    %4722 = vmatprep.subr.mxu0 0.0
    %4723 = vmatpush1.msra.mxu0 %v1530
    %4724 = vmatprep.subr.mxu0 0.0
    %4725 = vmatpush1.msra.mxu0 %v1531
    %4726 = vmatprep.subr.mxu0 0.0
    %4727 = vmatpush1.msra.mxu0 %v1532
    %4728 = vmatprep.subr.mxu0 0.0
    %4729 = vmatpush1.msra.mxu0 %v1533
    %4730 = vmatprep.subr.mxu0 0.0
    %4731 = vmatpush1.msra.mxu0 %v1534
    %4732 = vmatprep.subr.mxu0 0.0
    %4733 = vmatpush1.msra.mxu0 %v1535
    %4734 = vmatprep.subr.mxu0 0.0
    %4735 = vmatpush1.msra.mxu0 %v1536
    %4736 = vmatprep.subr.mxu0 0.0
    %4737 = vmatpush1.msra.mxu0 %v1537
    %4738 = vmatprep.subr.mxu0 0.0
    %4739 = vmatpush1.msra.mxu0 %v1538
    %4740 = vmatprep.subr.mxu0 0.0
    %4741 = vmatpush1.msra.mxu0 %v1539
    %4742 = vmatprep.subr.mxu0 0.0
    %4743 = vmatpush1.msra.mxu0 %v1540
    %4744 = vmatprep.mubr.f32.mxu0 %v152
    %4745 = vmatmul.mubr.f32.gmra.mrb[0].mxu0 %v151
    %v4746 = vpop.f32.mrb[0].mxu0
    %v4747 = vadd.f32 %v4677, %v4746
    %v4748 = vpop.f32.mrb[0].mxu0
    %4749 = vdwg.mxu0
    %4750 = vmatprep.subr.mxu0 0.0
    %4751 = vmatpush1.msra.mxu0 %v1541
    %4752 = vmatprep.subr.mxu0 0.0
    %4753 = vmatpush1.msra.mxu0 %v1542
    %4754 = vmatprep.subr.mxu0 0.0
    %4755 = vmatpush1.msra.mxu0 %v1543
    %4756 = vmatprep.subr.mxu0 0.0
    %4757 = vmatpush1.msra.mxu0 %v1544
    %4758 = vmatprep.subr.mxu0 0.0
    %4759 = vmatpush1.msra.mxu0 %v1545
    %4760 = vmatprep.subr.mxu0 0.0
    %4761 = vmatpush1.msra.mxu0 %v1546
    %4762 = vmatprep.subr.mxu0 0.0
    %4763 = vmatpush1.msra.mxu0 %v1547
    %4764 = vmatprep.subr.mxu0 0.0
    %4765 = vmatpush1.msra.mxu0 %v1548
    %4766 = vmatprep.subr.mxu0 0.0
    %4767 = vmatpush1.msra.mxu0 %v1549
    %4768 = vmatprep.subr.mxu0 0.0
    %4769 = vmatpush1.msra.mxu0 %v1550
    %4770 = vmatprep.subr.mxu0 0.0
    %4771 = vmatpush1.msra.mxu0 %v1551
    %4772 = vmatprep.subr.mxu0 0.0
    %4773 = vmatpush1.msra.mxu0 %v1552
    %4774 = vmatprep.subr.mxu0 0.0
    %4775 = vmatpush1.msra.mxu0 %v1553
    %4776 = vmatprep.subr.mxu0 0.0
    %4777 = vmatpush1.msra.mxu0 %v1554
    %4778 = vmatprep.subr.mxu0 0.0
    %4779 = vmatpush1.msra.mxu0 %v1555
    %4780 = vmatprep.subr.mxu0 0.0
    %4781 = vmatpush1.msra.mxu0 %v1556
    %4782 = vmatprep.subr.mxu0 0.0
    %4783 = vmatpush1.msra.mxu0 %v1557
    %4784 = vmatprep.subr.mxu0 0.0
    %4785 = vmatpush1.msra.mxu0 %v1558
    %4786 = vmatprep.subr.mxu0 0.0
    %4787 = vmatpush1.msra.mxu0 %v1559
    %4788 = vmatprep.subr.mxu0 0.0
    %4789 = vmatpush1.msra.mxu0 %v1560
    %4790 = vmatprep.subr.mxu0 0.0
    %4791 = vmatpush1.msra.mxu0 %v1561
    %4792 = vmatprep.subr.mxu0 0.0
    %4793 = vmatpush1.msra.mxu0 %v1562
    %4794 = vmatprep.subr.mxu0 0.0
    %4795 = vmatpush1.msra.mxu0 %v1563
    %4796 = vmatprep.subr.mxu0 0.0
    %4797 = vmatpush1.msra.mxu0 %v1564
    %4798 = vmatprep.subr.mxu0 0.0
    %4799 = vmatpush1.msra.mxu0 %v1565
    %4800 = vmatprep.subr.mxu0 0.0
    %4801 = vmatpush1.msra.mxu0 %v1566
    %4802 = vmatprep.subr.mxu0 0.0
    %4803 = vmatpush1.msra.mxu0 %v1567
    %4804 = vmatprep.subr.mxu0 0.0
    %4805 = vmatpush1.msra.mxu0 %v1568
    %4806 = vmatprep.subr.mxu0 0.0
    %4807 = vmatpush1.msra.mxu0 %v1569
    %4808 = vmatprep.subr.mxu0 0.0
    %4809 = vmatpush1.msra.mxu0 %v1570
    %4810 = vmatprep.subr.mxu0 0.0
    %4811 = vmatpush1.msra.mxu0 %v1571
    %4812 = vmatprep.subr.mxu0 0.0
    %4813 = vmatpush1.msra.mxu0 %v1572
    %4814 = vmatprep.mubr.f32.mxu0 %v154
    %4815 = vmatmul.mubr.f32.gmra.mrb[0].mxu0 %v153
    %v4816 = vpop.f32.mrb[0].mxu0
    %v4817 = vadd.f32 %v4747, %v4816
    %v4818 = vpop.f32.mrb[0].mxu0
    %4819 = vdwg.mxu0
    %4820 = vmatprep.subr.mxu0 0.0
    %4821 = vmatpush1.msra.mxu0 %v1573
    %4822 = vmatprep.subr.mxu0 0.0
    %4823 = vmatpush1.msra.mxu0 %v1574
    %4824 = vmatprep.subr.mxu0 0.0
    %4825 = vmatpush1.msra.mxu0 %v1575
    %4826 = vmatprep.subr.mxu0 0.0
    %4827 = vmatpush1.msra.mxu0 %v1576
    %4828 = vmatprep.subr.mxu0 0.0
    %4829 = vmatpush1.msra.mxu0 %v1577
    %4830 = vmatprep.subr.mxu0 0.0
    %4831 = vmatpush1.msra.mxu0 %v1578
    %4832 = vmatprep.subr.mxu0 0.0
    %4833 = vmatpush1.msra.mxu0 %v1579
    %4834 = vmatprep.subr.mxu0 0.0
    %4835 = vmatpush1.msra.mxu0 %v1580
    %4836 = vmatprep.subr.mxu0 0.0
    %4837 = vmatpush1.msra.mxu0 %v1581
    %4838 = vmatprep.subr.mxu0 0.0
    %4839 = vmatpush1.msra.mxu0 %v1582
    %4840 = vmatprep.subr.mxu0 0.0
    %4841 = vmatpush1.msra.mxu0 %v1583
    %4842 = vmatprep.subr.mxu0 0.0
    %4843 = vmatpush1.msra.mxu0 %v1584
    %4844 = vmatprep.subr.mxu0 0.0
    %4845 = vmatpush1.msra.mxu0 %v1585
    %4846 = vmatprep.subr.mxu0 0.0
    %4847 = vmatpush1.msra.mxu0 %v1586
    %4848 = vmatprep.subr.mxu0 0.0
    %4849 = vmatpush1.msra.mxu0 %v1587
    %4850 = vmatprep.subr.mxu0 0.0
    %4851 = vmatpush1.msra.mxu0 %v1588
    %4852 = vmatprep.subr.mxu0 0.0
    %4853 = vmatpush1.msra.mxu0 %v1589
    %4854 = vmatprep.subr.mxu0 0.0
    %4855 = vmatpush1.msra.mxu0 %v1590
    %4856 = vmatprep.subr.mxu0 0.0
    %4857 = vmatpush1.msra.mxu0 %v1591
    %4858 = vmatprep.subr.mxu0 0.0
    %4859 = vmatpush1.msra.mxu0 %v1592
    %4860 = vmatprep.subr.mxu0 0.0
    %4861 = vmatpush1.msra.mxu0 %v1593
    %4862 = vmatprep.subr.mxu0 0.0
    %4863 = vmatpush1.msra.mxu0 %v1594
    %4864 = vmatprep.subr.mxu0 0.0
    %4865 = vmatpush1.msra.mxu0 %v1595
    %4866 = vmatprep.subr.mxu0 0.0
    %4867 = vmatpush1.msra.mxu0 %v1596
    %4868 = vmatprep.subr.mxu0 0.0
    %4869 = vmatpush1.msra.mxu0 %v1597
    %4870 = vmatprep.subr.mxu0 0.0
    %4871 = vmatpush1.msra.mxu0 %v1598
    %4872 = vmatprep.subr.mxu0 0.0
    %4873 = vmatpush1.msra.mxu0 %v1599
    %4874 = vmatprep.subr.mxu0 0.0
    %4875 = vmatpush1.msra.mxu0 %v1600
    %4876 = vmatprep.subr.mxu0 0.0
    %4877 = vmatpush1.msra.mxu0 %v1601
    %4878 = vmatprep.subr.mxu0 0.0
    %4879 = vmatpush1.msra.mxu0 %v1602
    %4880 = vmatprep.subr.mxu0 0.0
    %4881 = vmatpush1.msra.mxu0 %v1603
    %4882 = vmatprep.subr.mxu0 0.0
    %4883 = vmatpush1.msra.mxu0 %v1604
    %4884 = vmatprep.mubr.f32.mxu0 %v156
    %4885 = vmatmul.mubr.f32.gmra.mrb[0].mxu0 %v155
    %v4886 = vpop.f32.mrb[0].mxu0
    %v4887 = vadd.f32 %v4817, %v4886
    %v4888 = vpop.f32.mrb[0].mxu0
    %4889 = vdwg.mxu0
    %4890 = vmatprep.subr.mxu0 0.0
    %4891 = vmatpush1.msra.mxu0 %v1605
    %4892 = vmatprep.subr.mxu0 0.0
    %4893 = vmatpush1.msra.mxu0 %v1606
    %4894 = vmatprep.subr.mxu0 0.0
    %4895 = vmatpush1.msra.mxu0 %v1607
    %4896 = vmatprep.subr.mxu0 0.0
    %4897 = vmatpush1.msra.mxu0 %v1608
    %4898 = vmatprep.subr.mxu0 0.0
    %4899 = vmatpush1.msra.mxu0 %v1609
    %4900 = vmatprep.subr.mxu0 0.0
    %4901 = vmatpush1.msra.mxu0 %v1610
    %4902 = vmatprep.subr.mxu0 0.0
    %4903 = vmatpush1.msra.mxu0 %v1611
    %4904 = vmatprep.subr.mxu0 0.0
    %4905 = vmatpush1.msra.mxu0 %v1612
    %4906 = vmatprep.subr.mxu0 0.0
    %4907 = vmatpush1.msra.mxu0 %v1613
    %4908 = vmatprep.subr.mxu0 0.0
    %4909 = vmatpush1.msra.mxu0 %v1614
    %4910 = vmatprep.subr.mxu0 0.0
    %4911 = vmatpush1.msra.mxu0 %v1615
    %4912 = vmatprep.subr.mxu0 0.0
    %4913 = vmatpush1.msra.mxu0 %v1616
    %4914 = vmatprep.subr.mxu0 0.0
    %4915 = vmatpush1.msra.mxu0 %v1617
    %4916 = vmatprep.subr.mxu0 0.0
    %4917 = vmatpush1.msra.mxu0 %v1618
    %4918 = vmatprep.subr.mxu0 0.0
    %4919 = vmatpush1.msra.mxu0 %v1619
    %4920 = vmatprep.subr.mxu0 0.0
    %4921 = vmatpush1.msra.mxu0 %v1620
    %4922 = vmatprep.subr.mxu0 0.0
    %4923 = vmatpush1.msra.mxu0 %v1621
    %4924 = vmatprep.subr.mxu0 0.0
    %4925 = vmatpush1.msra.mxu0 %v1622
    %4926 = vmatprep.subr.mxu0 0.0
    %4927 = vmatpush1.msra.mxu0 %v1623
    %4928 = vmatprep.subr.mxu0 0.0
    %4929 = vmatpush1.msra.mxu0 %v1624
    %4930 = vmatprep.subr.mxu0 0.0
    %4931 = vmatpush1.msra.mxu0 %v1625
    %4932 = vmatprep.subr.mxu0 0.0
    %4933 = vmatpush1.msra.mxu0 %v1626
    %4934 = vmatprep.subr.mxu0 0.0
    %4935 = vmatpush1.msra.mxu0 %v1627
    %4936 = vmatprep.subr.mxu0 0.0
    %4937 = vmatpush1.msra.mxu0 %v1628
    %4938 = vmatprep.subr.mxu0 0.0
    %4939 = vmatpush1.msra.mxu0 %v1629
    %4940 = vmatprep.subr.mxu0 0.0
    %4941 = vmatpush1.msra.mxu0 %v1630
    %4942 = vmatprep.subr.mxu0 0.0
    %4943 = vmatpush1.msra.mxu0 %v1631
    %4944 = vmatprep.subr.mxu0 0.0
    %4945 = vmatpush1.msra.mxu0 %v1632
    %4946 = vmatprep.subr.mxu0 0.0
    %4947 = vmatpush1.msra.mxu0 %v1633
    %4948 = vmatprep.subr.mxu0 0.0
    %4949 = vmatpush1.msra.mxu0 %v1634
    %4950 = vmatprep.subr.mxu0 0.0
    %4951 = vmatpush1.msra.mxu0 %v1635
    %4952 = vmatprep.subr.mxu0 0.0
    %4953 = vmatpush1.msra.mxu0 %v1636
    %4954 = vmatprep.mubr.f32.mxu0 %v158
    %4955 = vmatmul.mubr.f32.gmra.mrb[0].mxu0 %v157
    %v4956 = vpop.f32.mrb[0].mxu0
    %v4957 = vadd.f32 %v4887, %v4956
    %v4958 = vpop.f32.mrb[0].mxu0
    %4959 = vdwg.mxu0
    %4960 = vmatprep.subr.mxu0 0.0
    %4961 = vmatpush1.msra.mxu0 %v1637
    %4962 = vmatprep.subr.mxu0 0.0
    %4963 = vmatpush1.msra.mxu0 %v1638
    %4964 = vmatprep.subr.mxu0 0.0
    %4965 = vmatpush1.msra.mxu0 %v1639
    %4966 = vmatprep.subr.mxu0 0.0
    %4967 = vmatpush1.msra.mxu0 %v1640
    %4968 = vmatprep.subr.mxu0 0.0
    %4969 = vmatpush1.msra.mxu0 %v1641
    %4970 = vmatprep.subr.mxu0 0.0
    %4971 = vmatpush1.msra.mxu0 %v1642
    %4972 = vmatprep.subr.mxu0 0.0
    %4973 = vmatpush1.msra.mxu0 %v1643
    %4974 = vmatprep.subr.mxu0 0.0
    %4975 = vmatpush1.msra.mxu0 %v1644
    %4976 = vmatprep.subr.mxu0 0.0
    %4977 = vmatpush1.msra.mxu0 %v1645
    %4978 = vmatprep.subr.mxu0 0.0
    %4979 = vmatpush1.msra.mxu0 %v1646
    %4980 = vmatprep.subr.mxu0 0.0
    %4981 = vmatpush1.msra.mxu0 %v1647
    %4982 = vmatprep.subr.mxu0 0.0
    %4983 = vmatpush1.msra.mxu0 %v1648
    %4984 = vmatprep.subr.mxu0 0.0
    %4985 = vmatpush1.msra.mxu0 %v1649
    %4986 = vmatprep.subr.mxu0 0.0
    %4987 = vmatpush1.msra.mxu0 %v1650
    %4988 = vmatprep.subr.mxu0 0.0
    %4989 = vmatpush1.msra.mxu0 %v1651
    %4990 = vmatprep.subr.mxu0 0.0
    %4991 = vmatpush1.msra.mxu0 %v1652
    %4992 = vmatprep.subr.mxu0 0.0
    %4993 = vmatpush1.msra.mxu0 %v1653
    %4994 = vmatprep.subr.mxu0 0.0
    %4995 = vmatpush1.msra.mxu0 %v1654
    %4996 = vmatprep.subr.mxu0 0.0
    %4997 = vmatpush1.msra.mxu0 %v1655
    %4998 = vmatprep.subr.mxu0 0.0
    %4999 = vmatpush1.msra.mxu0 %v1656
    %5000 = vmatprep.subr.mxu0 0.0
    %5001 = vmatpush1.msra.mxu0 %v1657
    %5002 = vmatprep.subr.mxu0 0.0
    %5003 = vmatpush1.msra.mxu0 %v1658
    %5004 = vmatprep.subr.mxu0 0.0
    %5005 = vmatpush1.msra.mxu0 %v1659
    %5006 = vmatprep.subr.mxu0 0.0
    %5007 = vmatpush1.msra.mxu0 %v1660
    %5008 = vmatprep.subr.mxu0 0.0
    %5009 = vmatpush1.msra.mxu0 %v1661
    %5010 = vmatprep.subr.mxu0 0.0
    %5011 = vmatpush1.msra.mxu0 %v1662
    %5012 = vmatprep.subr.mxu0 0.0
    %5013 = vmatpush1.msra.mxu0 %v1663
    %5014 = vmatprep.subr.mxu0 0.0
    %5015 = vmatpush1.msra.mxu0 %v1664
    %5016 = vmatprep.subr.mxu0 0.0
    %5017 = vmatpush1.msra.mxu0 %v1665
    %5018 = vmatprep.subr.mxu0 0.0
    %5019 = vmatpush1.msra.mxu0 %v1666
    %5020 = vmatprep.subr.mxu0 0.0
    %5021 = vmatpush1.msra.mxu0 %v1667
    %5022 = vmatprep.subr.mxu0 0.0
    %5023 = vmatpush1.msra.mxu0 %v1668
    %5024 = vmatprep.mubr.f32.mxu0 %v160
    %5025 = vmatmul.mubr.f32.gmra.mrb[0].mxu0 %v159
    %v5026 = vpop.f32.mrb[0].mxu0
    %v5027 = vadd.f32 %v4957, %v5026
    %v5028 = vpop.f32.mrb[0].mxu0
    %5029 = vdwg.mxu0
    %5030 = vmatprep.subr.mxu0 0.0
    %5031 = vmatpush1.msra.mxu0 %v1669
    %5032 = vmatprep.subr.mxu0 0.0
    %5033 = vmatpush1.msra.mxu0 %v1670
    %5034 = vmatprep.subr.mxu0 0.0
    %5035 = vmatpush1.msra.mxu0 %v1671
    %5036 = vmatprep.subr.mxu0 0.0
    %5037 = vmatpush1.msra.mxu0 %v1672
    %5038 = vmatprep.subr.mxu0 0.0
    %5039 = vmatpush1.msra.mxu0 %v1673
    %5040 = vmatprep.subr.mxu0 0.0
    %5041 = vmatpush1.msra.mxu0 %v1674
    %5042 = vmatprep.subr.mxu0 0.0
    %5043 = vmatpush1.msra.mxu0 %v1675
    %5044 = vmatprep.subr.mxu0 0.0
    %5045 = vmatpush1.msra.mxu0 %v1676
    %5046 = vmatprep.subr.mxu0 0.0
    %5047 = vmatpush1.msra.mxu0 %v1677
    %5048 = vmatprep.subr.mxu0 0.0
    %5049 = vmatpush1.msra.mxu0 %v1678
    %5050 = vmatprep.subr.mxu0 0.0
    %5051 = vmatpush1.msra.mxu0 %v1679
    %5052 = vmatprep.subr.mxu0 0.0
    %5053 = vmatpush1.msra.mxu0 %v1680
    %5054 = vmatprep.subr.mxu0 0.0
    %5055 = vmatpush1.msra.mxu0 %v1681
    %5056 = vmatprep.subr.mxu0 0.0
    %5057 = vmatpush1.msra.mxu0 %v1682
    %5058 = vmatprep.subr.mxu0 0.0
    %5059 = vmatpush1.msra.mxu0 %v1683
    %5060 = vmatprep.subr.mxu0 0.0
    %5061 = vmatpush1.msra.mxu0 %v1684
    %5062 = vmatprep.subr.mxu0 0.0
    %5063 = vmatpush1.msra.mxu0 %v1685
    %5064 = vmatprep.subr.mxu0 0.0
    %5065 = vmatpush1.msra.mxu0 %v1686
    %5066 = vmatprep.subr.mxu0 0.0
    %5067 = vmatpush1.msra.mxu0 %v1687
    %5068 = vmatprep.subr.mxu0 0.0
    %5069 = vmatpush1.msra.mxu0 %v1688
    %5070 = vmatprep.subr.mxu0 0.0
    %5071 = vmatpush1.msra.mxu0 %v1689
    %5072 = vmatprep.subr.mxu0 0.0
    %5073 = vmatpush1.msra.mxu0 %v1690
    %5074 = vmatprep.subr.mxu0 0.0
    %5075 = vmatpush1.msra.mxu0 %v1691
    %5076 = vmatprep.subr.mxu0 0.0
    %5077 = vmatpush1.msra.mxu0 %v1692
    %5078 = vmatprep.subr.mxu0 0.0
    %5079 = vmatpush1.msra.mxu0 %v1693
    %5080 = vmatprep.subr.mxu0 0.0
    %5081 = vmatpush1.msra.mxu0 %v1694
    %5082 = vmatprep.subr.mxu0 0.0
    %5083 = vmatpush1.msra.mxu0 %v1695
    %5084 = vmatprep.subr.mxu0 0.0
    %5085 = vmatpush1.msra.mxu0 %v1696
    %5086 = vmatprep.subr.mxu0 0.0
    %5087 = vmatpush1.msra.mxu0 %v1697
    %5088 = vmatprep.subr.mxu0 0.0
    %5089 = vmatpush1.msra.mxu0 %v1698
    %5090 = vmatprep.subr.mxu0 0.0
    %5091 = vmatpush1.msra.mxu0 %v1699
    %5092 = vmatprep.subr.mxu0 0.0
    %5093 = vmatpush1.msra.mxu0 %v1700
    %5094 = vmatprep.mubr.f32.mxu0 %v162
    %5095 = vmatmul.mubr.f32.gmra.mrb[0].mxu0 %v161
    %v5096 = vpop.f32.mrb[0].mxu0
    %v5097 = vadd.f32 %v5027, %v5096
    %v5098 = vpop.f32.mrb[0].mxu0
    %5099 = vdwg.mxu0
    %5100 = vmatprep.subr.mxu0 0.0
    %5101 = vmatpush1.msra.mxu0 %v1701
    %5102 = vmatprep.subr.mxu0 0.0
    %5103 = vmatpush1.msra.mxu0 %v1702
    %5104 = vmatprep.subr.mxu0 0.0
    %5105 = vmatpush1.msra.mxu0 %v1703
    %5106 = vmatprep.subr.mxu0 0.0
    %5107 = vmatpush1.msra.mxu0 %v1704
    %5108 = vmatprep.subr.mxu0 0.0
    %5109 = vmatpush1.msra.mxu0 %v1705
    %5110 = vmatprep.subr.mxu0 0.0
    %5111 = vmatpush1.msra.mxu0 %v1706
    %5112 = vmatprep.subr.mxu0 0.0
    %5113 = vmatpush1.msra.mxu0 %v1707
    %5114 = vmatprep.subr.mxu0 0.0
    %5115 = vmatpush1.msra.mxu0 %v1708
    %5116 = vmatprep.subr.mxu0 0.0
    %5117 = vmatpush1.msra.mxu0 %v1709
    %5118 = vmatprep.subr.mxu0 0.0
    %5119 = vmatpush1.msra.mxu0 %v1710
    %5120 = vmatprep.subr.mxu0 0.0
    %5121 = vmatpush1.msra.mxu0 %v1711
    %5122 = vmatprep.subr.mxu0 0.0
    %5123 = vmatpush1.msra.mxu0 %v1712
    %5124 = vmatprep.subr.mxu0 0.0
    %5125 = vmatpush1.msra.mxu0 %v1713
    %5126 = vmatprep.subr.mxu0 0.0
    %5127 = vmatpush1.msra.mxu0 %v1714
    %5128 = vmatprep.subr.mxu0 0.0
    %5129 = vmatpush1.msra.mxu0 %v1715
    %5130 = vmatprep.subr.mxu0 0.0
    %5131 = vmatpush1.msra.mxu0 %v1716
    %5132 = vmatprep.subr.mxu0 0.0
    %5133 = vmatpush1.msra.mxu0 %v1717
    %5134 = vmatprep.subr.mxu0 0.0
    %5135 = vmatpush1.msra.mxu0 %v1718
    %5136 = vmatprep.subr.mxu0 0.0
    %5137 = vmatpush1.msra.mxu0 %v1719
    %5138 = vmatprep.subr.mxu0 0.0
    %5139 = vmatpush1.msra.mxu0 %v1720
    %5140 = vmatprep.subr.mxu0 0.0
    %5141 = vmatpush1.msra.mxu0 %v1721
    %5142 = vmatprep.subr.mxu0 0.0
    %5143 = vmatpush1.msra.mxu0 %v1722
    %5144 = vmatprep.subr.mxu0 0.0
    %5145 = vmatpush1.msra.mxu0 %v1723
    %5146 = vmatprep.subr.mxu0 0.0
    %5147 = vmatpush1.msra.mxu0 %v1724
    %5148 = vmatprep.subr.mxu0 0.0
    %5149 = vmatpush1.msra.mxu0 %v1725
    %5150 = vmatprep.subr.mxu0 0.0
    %5151 = vmatpush1.msra.mxu0 %v1726
    %5152 = vmatprep.subr.mxu0 0.0
    %5153 = vmatpush1.msra.mxu0 %v1727
    %5154 = vmatprep.subr.mxu0 0.0
    %5155 = vmatpush1.msra.mxu0 %v1728
    %5156 = vmatprep.subr.mxu0 0.0
    %5157 = vmatpush1.msra.mxu0 %v1729
    %5158 = vmatprep.subr.mxu0 0.0
    %5159 = vmatpush1.msra.mxu0 %v1730
    %5160 = vmatprep.subr.mxu0 0.0
    %5161 = vmatpush1.msra.mxu0 %v1731
    %5162 = vmatprep.subr.mxu0 0.0
    %5163 = vmatpush1.msra.mxu0 %v1732
    %5164 = vmatprep.mubr.f32.mxu0 %v164
    %5165 = vmatmul.mubr.f32.gmra.mrb[0].mxu0 %v163
    %v5166 = vpop.f32.mrb[0].mxu0
    %v5167 = vadd.f32 %v5097, %v5166
    %v5168 = vpop.f32.mrb[0].mxu0
    %5169 = vdwg.mxu0
    %v5170 = vmax.f32 %v5167, 0.0
    %5171 = vst [vmem:[#allocation10] sm:$0xff] %v5170
    %v5172 = vld [vmem:[#allocation8] sm:$0xff]
    %vm5173 = vcmask 130048
    %5174 = vst.msk [vmem:[#allocation10 + $0x8] sm:$0xff] %vm5173, %v5172
    // Predicated region
    $region34: #{tpu_custom_call.1} parent=1 // pred_check
      _
    $region35: #{tpu_custom_call.1} parent=1 // pred_check_branch
      %5176 = sbr.rel (0) target = $region37
    $region36: #{tpu_custom_call.1} parent=1 // pred_region
      %s5178 = ssub.s32 256, 256
      %5179 = vsyncadd [#allocation4], %s5178
      %s5181 = sshll.u32 [#allocation10], 4
      %s5182 = int_to_ptr.vmem [resolvable:$true] %s5181
      %5184 = dma.vmem_to_hbm [thread:$0]  %s5182, 256, %s4, [#allocation4]
    $region37: #{tpu_custom_call.1} parent=1 // pred_fallthru
      _
    // Predicated region
    $region38: #{tpu_custom_call.1} parent=1 // pred_check
      _
    $region39: #{tpu_custom_call.1} parent=1 // pred_check_branch
      %5186 = sbr.rel (0) target = $region41
    $region40: #{tpu_custom_call.1} parent=1 // pred_region
      %5187 = dma.done [#allocation4], 256
    $region41: #{tpu_custom_call.1} parent=1 // pred_fallthru
      _
    %5188 = vsyncpa [#allocation3], 1
    %5189 = vsyncpa [#allocation6], 1
    %5190 = vsyncpa [#allocation9], 1
    %5191 = vsyncpa [#allocation4], 1

</llo_original>
